<compile_context>
chip_gen: v7x
topology: tpu7x:2x2x1
jax: 0.10.0
libtpu: 0.0.40
codegen_flags: <defaults>
</compile_context>

<pallas_src>
import math
from functools import partial

import numpy as np
import jax
import jax.numpy as jnp
from jax.experimental import pallas as pl
from jax.experimental.pallas import tpu as pltpu


# ----------------------------------------------------------------------------
# Fused Pallas kernel: whole forward pass in one pallas_call.
# ----------------------------------------------------------------------------
def _fused_u2gnn_kernel(slab0_ref, gmat_ref, pool_ref,
                        wq_ref, bq_ref, wk_ref, bk_ref, wv_ref, bv_ref,
                        wo_ref, bo_ref, w1_ref, b1_ref, w2_ref, b2_ref,
                        g1_ref, be1_ref, g2_ref, be2_ref,
                        wp_ref, bp_ref,
                        o_ref, slab_ref, acc_ref,
                        *, n_nodes, n_samples, d_model, n_self, n_u2):
    u = pl.program_id(0)      # U2GNN layer (outer PyTorch loop)
    l = pl.program_id(1)      # encoder layer inside the TransformerEncoder stack
    d = d_model
    sn = n_samples * n_nodes
    scale = 1.0 / math.sqrt(d)

    # --- first grid step: load the initial embedding slab, zero the scores ---
    @pl.when(jnp.logical_and(u == 0, l == 0))
    def _init():
        slab_ref[...] = slab0_ref[...]
        acc_ref[...] = jnp.zeros_like(acc_ref)

    x = slab_ref[...]                          # [S*N, D] f32, resident in VMEM
    xb = x.astype(jnp.bfloat16)                # bf16 operands for the MXU

    # --- q/k/v projections batched over the flattened S*N axis (M = S*N) ---
    q = jnp.dot(xb, wq_ref[...], preferred_element_type=jnp.float32) + bq_ref[...]
    k = jnp.dot(xb, wk_ref[...], preferred_element_type=jnp.float32) + bk_ref[...]
    v = jnp.dot(xb, wv_ref[...], preferred_element_type=jnp.float32) + bv_ref[...]

    # --- 1-head self-attention over the node axis, batched over the S axis ---
    q3 = q.reshape(n_samples, n_nodes, d).astype(jnp.bfloat16)
    k3 = k.reshape(n_samples, n_nodes, d).astype(jnp.bfloat16)
    v3 = v.reshape(n_samples, n_nodes, d).astype(jnp.bfloat16)
    s = jnp.einsum('snd,smd->snm', q3, k3,
                   preferred_element_type=jnp.float32) * scale      # [S, N, N]
    m = jnp.max(s, axis=-1, keepdims=True)
    e = jnp.exp(s - m)
    p = e * pl.reciprocal(jnp.sum(e, axis=-1, keepdims=True), approx=True)
    attn3 = jnp.einsum('snm,smd->snd', p.astype(jnp.bfloat16), v3,
                       preferred_element_type=jnp.float32)           # [S, N, D]
    attn = attn3.reshape(sn, d)
    attn = jnp.dot(attn.astype(jnp.bfloat16), wo_ref[...],
                   preferred_element_type=jnp.float32) + bo_ref[...]

    # --- residual + LayerNorm 1 (eps = 1e-5, PyTorch default; f32 math) ---
    x = x + attn
    mu = jnp.mean(x, axis=-1, keepdims=True)
    var = jnp.mean((x - mu) ** 2, axis=-1, keepdims=True)
    x = (x - mu) * jax.lax.rsqrt(var + 1e-5) * g1_ref[...] + be1_ref[...]

    # --- feed-forward (ReLU), batched over S*N ---
    h = jnp.dot(x.astype(jnp.bfloat16), w1_ref[...],
                preferred_element_type=jnp.float32) + b1_ref[...]
    h = jnp.maximum(h, 0.0)
    h = jnp.dot(h.astype(jnp.bfloat16), w2_ref[...],
                preferred_element_type=jnp.float32) + b2_ref[...]

    # --- residual + LayerNorm 2 ---
    x = x + h
    mu = jnp.mean(x, axis=-1, keepdims=True)
    var = jnp.mean((x - mu) ** 2, axis=-1, keepdims=True)
    x = (x - mu) * jax.lax.rsqrt(var + 1e-5) * g2_ref[...] + be2_ref[...]

    last_enc = l == n_self - 1

    @pl.when(jnp.logical_not(last_enc))
    def _carry():                              # next encoder layer of same stack
        slab_ref[...] = x

    @pl.when(last_enc)
    def _score():                              # end of one U2GNN layer
        # torch.split(output_Tr, 1, dim=1)[0].squeeze(1) == the s == 0 slice.
        out_tr = x[:n_nodes, :]                                       # [N, D]
        # graph_embeddings = graph_pool @ output_Tr; scores += emb @ W^T + b.
        # TODO(synk): nn.Dropout on graph_embeddings is an eval-mode identity.
        g = jnp.dot(pool_ref[...], out_tr, preferred_element_type=jnp.float32)
        acc_ref[...] += jnp.dot(g, wp_ref[...],
                                preferred_element_type=jnp.float32) + bp_ref[...]
        o_ref[...] = acc_ref[...]              # final flush carries the full sum

    @pl.when(jnp.logical_and(last_enc, u < n_u2 - 1))
    def _reembed():
        # input_Tr = F.embedding(input_x, output_Tr): exact one-hot gather
        # matmul keeps the slab in VMEM for the next U2GNN layer.
        out_tr = x[:n_nodes, :]
        slab_ref[...] = jnp.dot(gmat_ref[...], out_tr,
                                preferred_element_type=jnp.float32)


def sup_u2gnn_forward_pallas(packed, X_concat, input_x, graph_pool):
    """Full SupU2GNN forward as one fused Pallas kernel."""
    NU2, NSELF, D, _ = packed['wq_t'].shape
    FF = packed['w1_t'].shape[-1]
    C = packed['wp_t'].shape[-1]
    N, S = input_x.shape
    G = graph_pool.shape[0]
    SN = S * N

    # Initial F.embedding(input_x, X_concat): [N,S,D] -> [S,N,D] -> [S*N, D]
    # slab (row r = s*N + n).
    slab0 = jnp.transpose(X_concat[input_x], (1, 0, 2)).reshape(SN, D)
    slab0 = slab0.astype(jnp.float32)
    # One-hot gather matrix for the in-kernel re-embedding (rows of exact 0/1).
    idx = jnp.transpose(input_x).reshape(SN)
    gather_mat = (idx[:, None] == jnp.arange(N, dtype=idx.dtype)[None, :])
    gather_mat = gather_mat.astype(jnp.float32)

    def const_spec(shape):                    # block index never changes -> fetched once
        return pl.BlockSpec(shape, lambda u, l: (0,) * len(shape))

    def enc_spec(a, b):                       # per-encoder-layer weight block
        return pl.BlockSpec((None, None, a, b), lambda u, l: (u, l, 0, 0))

    def pred_spec(a, b):                      # per-U2GNN-layer prediction block
        return pl.BlockSpec((None, a, b), lambda u, l: (u, 0, 0))

    kernel = partial(_fused_u2gnn_kernel, n_nodes=N, n_samples=S,
                     d_model=D, n_self=NSELF, n_u2=NU2)

    return pl.pallas_call(
        kernel,
        out_shape=jax.ShapeDtypeStruct((G, C), jnp.float32),
        grid=(NU2, NSELF),
        in_specs=[
            const_spec((SN, D)),                      # slab0
            const_spec((SN, N)),                      # gather_mat
            const_spec((G, N)),                       # graph_pool
            enc_spec(D, D), enc_spec(1, D),           # wq_t, bq
            enc_spec(D, D), enc_spec(1, D),           # wk_t, bk
            enc_spec(D, D), enc_spec(1, D),           # wv_t, bv
            enc_spec(D, D), enc_spec(1, D),           # wo_t, bo
            enc_spec(D, FF), enc_spec(1, FF),         # w1_t, b1
            enc_spec(FF, D), enc_spec(1, D),          # w2_t, b2
            enc_spec(1, D), enc_spec(1, D),           # norm1 gamma, beta
            enc_spec(1, D), enc_spec(1, D),           # norm2 gamma, beta
            pred_spec(D, C), pred_spec(1, C),         # prediction W^T, b
        ],
        out_specs=pl.BlockSpec((G, C), lambda u, l: (0, 0)),   # single resident block
        scratch_shapes=[pltpu.VMEM((SN, D), jnp.float32),      # activation slab
                        pltpu.VMEM((G, C), jnp.float32)],      # score accumulator
        compiler_params=pltpu.CompilerParams(
            # Both grid axes carry the activation dependency -> sequential.
            # TODO(synk): at larger sizes the S axis could be sharded across
            # v7x's two TensorCores with a cross-core handoff of the s==0 slice.
            dimension_semantics=("arbitrary", "arbitrary"),
            vmem_limit_bytes=32 * 1024 * 1024,
        ),
    )(slab0, gather_mat, graph_pool.astype(jnp.float32),
      packed['wq_t'], packed['bq'], packed['wk_t'], packed['bk'],
      packed['wv_t'], packed['bv'], packed['wo_t'], packed['bo'],
      packed['w1_t'], packed['b1'], packed['w2_t'], packed['b2'],
      packed['g1'], packed['be1'], packed['g2'], packed['be2'],
      packed['wp_t'], packed['bp'])


# ----------------------------------------------------------------------------
# Parameters: PyTorch-layout f32 init + host-side packing for the kernel.
# ----------------------------------------------------------------------------
def init_params(key, D, FF, C, num_self_att_layers, num_u2gnn_layers):
    def nrm(k, shape, scale=0.1):
        return scale * jax.random.normal(k, shape, jnp.float32)

    params = {'u2gnn': [], 'pred': []}
    for _ in range(num_u2gnn_layers):
        stack = []
        for _ in range(num_self_att_layers):
            key, *ks = jax.random.split(key, 9)
            stack.append({
                'wqkv': nrm(ks[0], (3 * D, D)),          # in_proj_weight
                'bqkv': nrm(ks[1], (1, 3 * D), 0.01),
                'wo':   nrm(ks[2], (D, D)),
                'bo':   nrm(ks[3], (1, D), 0.01),
                'w1':   nrm(ks[4], (FF, D)),
                'b1':   nrm(ks[5], (1, FF), 0.01),
                'w2':   nrm(ks[6], (D, FF)),
                'b2':   nrm(ks[7], (1, D), 0.01),
                'g1':   jnp.ones((1, D), jnp.float32),
                'be1':  jnp.zeros((1, D), jnp.float32),
                'g2':   jnp.ones((1, D), jnp.float32),
                'be2':  jnp.zeros((1, D), jnp.float32),
            })
        params['u2gnn'].append(stack)
        key, k1, k2 = jax.random.split(key, 3)
        params['pred'].append({'w': nrm(k1, (C, D)), 'b': nrm(k2, (C,), 0.01)})
    return params


def pack_params(params):
    """Stack per-layer weights to [NU2, NSELF, ...], pre-transpose to the
    x @ W layout, and cast matmul weights to bf16 (biases/LayerNorm stay f32)."""
    D = params['u2gnn'][0][0]['wqkv'].shape[1]

    def enc(fn, dtype=jnp.float32):
        return jnp.stack([jnp.stack([fn(p) for p in stack])
                          for stack in params['u2gnn']]).astype(dtype)

    bf16 = jnp.bfloat16
    return {
        'wq_t': enc(lambda p: p['wqkv'][:D].T, bf16),
        'wk_t': enc(lambda p: p['wqkv'][D:2 * D].T, bf16),
        'wv_t': enc(lambda p: p['wqkv'][2 * D:].T, bf16),
        'bq':   enc(lambda p: p['bqkv'][:, :D]),
        'bk':   enc(lambda p: p['bqkv'][:, D:2 * D]),
        'bv':   enc(lambda p: p['bqkv'][:, 2 * D:]),
        'wo_t': enc(lambda p: p['wo'].T, bf16),
        'bo':   enc(lambda p: p['bo']),
        'w1_t': enc(lambda p: p['w1'].T, bf16),
        'b1':   enc(lambda p: p['b1']),
        'w2_t': enc(lambda p: p['w2'].T, bf16),
        'b2':   enc(lambda p: p['b2']),
        'g1':   enc(lambda p: p['g1']),
        'be1':  enc(lambda p: p['be1']),
        'g2':   enc(lambda p: p['g2']),
        'be2':  enc(lambda p: p['be2']),
        'wp_t': jnp.stack([p['w'].T for p in params['pred']]).astype(jnp.float32),
        'bp':   jnp.stack([p['b'].reshape(1, -1) for p in params['pred']]),
    }


# ----------------------------------------------------------------------------
# Pure-JAX f32 reference (PyTorch eval semantics) for the correctness check.
# ----------------------------------------------------------------------------
def _layernorm_ref(x, g, b, eps=1e-5):
    mu = x.mean(-1, keepdims=True)
    var = ((x - mu) ** 2).mean(-1, keepdims=True)
    return (x - mu) * jax.lax.rsqrt(var + eps) * g + b


def _encoder_layer_ref(x, p):
    D = x.shape[-1]
    wqkv, bqkv = p['wqkv'], p['bqkv'][0]
    wq, wk, wv = wqkv[:D], wqkv[D:2 * D], wqkv[2 * D:]
    bq, bk, bv = bqkv[:D], bqkv[D:2 * D], bqkv[2 * D:]
    q = x @ wq.T + bq
    k = x @ wk.T + bk
    v = x @ wv.T + bv
    scores = jnp.einsum('snd,smd->snm', q, k) / math.sqrt(D)
    attn_w = jax.nn.softmax(scores, axis=-1)
    attn = jnp.einsum('snm,smd->snd', attn_w, v)
    attn = attn @ p['wo'].T + p['bo'][0]
    x = _layernorm_ref(x + attn, p['g1'][0], p['be1'][0])
    h = jax.nn.relu(x @ p['w1'].T + p['b1'][0])
    h = h @ p['w2'].T + p['b2'][0]
    return _layernorm_ref(x + h, p['g2'][0], p['be2'][0])


def sup_u2gnn_forward_ref(params, X_concat, input_x, graph_pool):
    input_tr = jnp.transpose(X_concat[input_x], (1, 0, 2)).astype(jnp.float32)
    C = params['pred'][0]['w'].shape[0]
    scores = jnp.zeros((graph_pool.shape[0], C), jnp.float32)
    for li, stack in enumerate(params['u2gnn']):
        h = input_tr
        for p in stack:
            h = _encoder_layer_ref(h, p)
        output_tr = h[0]
        input_tr = jnp.transpose(output_tr[input_x], (1, 0, 2))
        pp = params['pred'][li]
        scores = scores + (graph_pool @ output_tr) @ pp['w'].T + pp['b']
    return scores


# ----------------------------------------------------------------------------
if __name__ == "__main__":
    D, FF, C = 32, 64, 4          # feature_dim_size, ff_hidden_size, num_classes
    N_SELF, N_U2 = 2, 2           # num_self_att_layers, num_U2GNN_layers
    N_NODES, S, G = 16, 8, 2      # total nodes, 1 + sampled neighbors, num graphs

    key = jax.random.PRNGKey(0)
    key, kx, ki, kp = jax.random.split(key, 4)

    params = init_params(kp, D, FF, C, N_SELF, N_U2)
    packed = pack_params(params)

    X_concat = jax.random.normal(kx, (N_NODES, D), jnp.float32)
    neigh = jax.random.randint(ki, (N_NODES, S - 1), 0, N_NODES)
    input_x = jnp.concatenate(
        [jnp.arange(N_NODES, dtype=jnp.int32)[:, None], neigh.astype(jnp.int32)],
        axis=1)                                              # [N_NODES, S]

    # dense stand-in for the sparse graph_pool: mean-pool each graph's nodes
    graph_pool = jnp.zeros((G, N_NODES), jnp.float32)
    graph_pool = graph_pool.at[0, :N_NODES // 2].set(2.0 / N_NODES)
    graph_pool = graph_pool.at[1, N_NODES // 2:].set(2.0 / N_NODES)

    out = sup_u2gnn_forward_pallas(packed, X_concat, input_x, graph_pool)
    out = jax.block_until_ready(out)
    assert out.shape == (G, C)

    # kernel uses bf16 MXU inputs + approx reciprocal in softmax; compare
    # against the exact f32 PyTorch-semantics reference with a small tolerance.
    ref = sup_u2gnn_forward_ref(params, X_concat, input_x, graph_pool)
    np.testing.assert_allclose(np.asarray(out), np.asarray(ref), rtol=3e-2, atol=3e-2)

    print("KERNEL_OK")
</pallas_src>

<mosaic_0001>
module attributes {stable_mosaic.version = 11 : i64} {
  func.func @_fused_u2gnn_kernel(%arg0: i32, %arg1: i32, %arg2: memref<128x32xf32, #tpu.memory_space<vmem>>, %arg3: memref<128x16xf32, #tpu.memory_space<vmem>>, %arg4: memref<2x16xf32, #tpu.memory_space<vmem>>, %arg5: memref<1x1x32x32xbf16, #tpu.memory_space<vmem>>, %arg6: memref<1x1x1x32xf32, #tpu.memory_space<vmem>>, %arg7: memref<1x1x32x32xbf16, #tpu.memory_space<vmem>>, %arg8: memref<1x1x1x32xf32, #tpu.memory_space<vmem>>, %arg9: memref<1x1x32x32xbf16, #tpu.memory_space<vmem>>, %arg10: memref<1x1x1x32xf32, #tpu.memory_space<vmem>>, %arg11: memref<1x1x32x32xbf16, #tpu.memory_space<vmem>>, %arg12: memref<1x1x1x32xf32, #tpu.memory_space<vmem>>, %arg13: memref<1x1x32x64xbf16, #tpu.memory_space<vmem>>, %arg14: memref<1x1x1x64xf32, #tpu.memory_space<vmem>>, %arg15: memref<1x1x64x32xbf16, #tpu.memory_space<vmem>>, %arg16: memref<1x1x1x32xf32, #tpu.memory_space<vmem>>, %arg17: memref<1x1x1x32xf32, #tpu.memory_space<vmem>>, %arg18: memref<1x1x1x32xf32, #tpu.memory_space<vmem>>, %arg19: memref<1x1x1x32xf32, #tpu.memory_space<vmem>>, %arg20: memref<1x1x1x32xf32, #tpu.memory_space<vmem>>, %arg21: memref<1x32x4xf32, #tpu.memory_space<vmem>>, %arg22: memref<1x1x4xf32, #tpu.memory_space<vmem>>, %arg23: memref<2x4xf32, #tpu.memory_space<vmem>>, %arg24: memref<128x32xf32, #tpu.memory_space<vmem>>, %arg25: memref<2x4xf32, #tpu.memory_space<vmem>>) attributes {dimension_semantics = [#tpu.dimension_semantics<arbitrary>, #tpu.dimension_semantics<arbitrary>], iteration_bounds = array<i64: 2, 2>, scalar_prefetch = 0 : i64, scratch_operands = 2 : i64, tpu.core_type = #tpu.core_type<tc>, window_params = [{pipeline_mode = #tpu.pipeline_mode<synchronous>, transform_indices = @transform_0, window_bounds = array<i64: 128, 32>}, {pipeline_mode = #tpu.pipeline_mode<synchronous>, transform_indices = @transform_1, window_bounds = array<i64: 128, 16>}, {pipeline_mode = #tpu.pipeline_mode<synchronous>, transform_indices = @transform_2, window_bounds = array<i64: 2, 16>}, {transform_indices = @transform_3, window_bounds = array<i64: 1, 1, 32, 32>}, {transform_indices = @transform_4, window_bounds = array<i64: 1, 1, 1, 32>}, {transform_indices = @transform_5, window_bounds = array<i64: 1, 1, 32, 32>}, {transform_indices = @transform_6, window_bounds = array<i64: 1, 1, 1, 32>}, {transform_indices = @transform_7, window_bounds = array<i64: 1, 1, 32, 32>}, {transform_indices = @transform_8, window_bounds = array<i64: 1, 1, 1, 32>}, {transform_indices = @transform_9, window_bounds = array<i64: 1, 1, 32, 32>}, {transform_indices = @transform_10, window_bounds = array<i64: 1, 1, 1, 32>}, {transform_indices = @transform_11, window_bounds = array<i64: 1, 1, 32, 64>}, {transform_indices = @transform_12, window_bounds = array<i64: 1, 1, 1, 64>}, {transform_indices = @transform_13, window_bounds = array<i64: 1, 1, 64, 32>}, {transform_indices = @transform_14, window_bounds = array<i64: 1, 1, 1, 32>}, {transform_indices = @transform_15, window_bounds = array<i64: 1, 1, 1, 32>}, {transform_indices = @transform_16, window_bounds = array<i64: 1, 1, 1, 32>}, {transform_indices = @transform_17, window_bounds = array<i64: 1, 1, 1, 32>}, {transform_indices = @transform_18, window_bounds = array<i64: 1, 1, 1, 32>}, {transform_indices = @transform_19, window_bounds = array<i64: 1, 32, 4>}, {transform_indices = @transform_20, window_bounds = array<i64: 1, 1, 4>}, {pipeline_mode = #tpu.pipeline_mode<synchronous>, transform_indices = @transform_21, window_bounds = array<i64: 2, 4>}]} {
    %c0_i32 = arith.constant 0 : i32
    %0 = arith.cmpi eq, %arg0, %c0_i32 : i32
    %c0_i32_0 = arith.constant 0 : i32
    %1 = arith.cmpi eq, %arg1, %c0_i32_0 : i32
    %2 = arith.andi %0, %1 : i1
    %3 = arith.extui %2 : i1 to i32
    %c0_i32_1 = arith.constant 0 : i32
    %4 = arith.cmpi ne, %3, %c0_i32_1 : i32
    scf.if %4 {
      %c0_92 = arith.constant 0 : index
      %c0_93 = arith.constant 0 : index
      %140 = vector.load %arg2[%c0_92, %c0_93] : memref<128x32xf32, #tpu.memory_space<vmem>>, vector<128x32xf32>
      %c0_94 = arith.constant 0 : index
      %c0_95 = arith.constant 0 : index
      %141 = vector.load %arg24[%c0_94, %c0_95] : memref<128x32xf32, #tpu.memory_space<vmem>>, vector<128x32xf32>
      tpu.vector_store %arg24[%c0_94, %c0_95], %140 {strides = array<i32>} : memref<128x32xf32, #tpu.memory_space<vmem>>, vector<128x32xf32>,
      %cst_96 = arith.constant 0.000000e+00 : f32
      %142 = vector.broadcast %cst_96 : f32 to vector<2x4xf32>
      %c0_97 = arith.constant 0 : index
      %c0_98 = arith.constant 0 : index
      %143 = vector.load %arg25[%c0_97, %c0_98] : memref<2x4xf32, #tpu.memory_space<vmem>>, vector<2x4xf32>
      tpu.vector_store %arg25[%c0_97, %c0_98], %142 {strides = array<i32>} : memref<2x4xf32, #tpu.memory_space<vmem>>, vector<2x4xf32>,
    } else {
    }
    %c0 = arith.constant 0 : index
    %c0_2 = arith.constant 0 : index
    %5 = vector.load %arg24[%c0, %c0_2] : memref<128x32xf32, #tpu.memory_space<vmem>>, vector<128x32xf32>
    %6 = arith.truncf %5 : vector<128x32xf32> to vector<128x32xbf16>
    %c0_3 = arith.constant 0 : index
    %c0_4 = arith.constant 0 : index
    %c0_5 = arith.constant 0 : index
    %c0_6 = arith.constant 0 : index
    %7 = vector.load %arg5[%c0_3, %c0_4, %c0_5, %c0_6] : memref<1x1x32x32xbf16, #tpu.memory_space<vmem>>, vector<1x1x32x32xbf16>
    %8 = vector.shape_cast %7 : vector<1x1x32x32xbf16> to vector<32x32xbf16>
    %cst = arith.constant dense<0.000000e+00> : vector<128x32xf32>
    %9 = tpu.matmul %6, %8, %cst {dimension_numbers = #tpu.dot_dimension_numbers<[1], [0], [0], [1], [0, 0, 1, 1], [], []>} : vector<128x32xbf16>, vector<32x32xbf16>, vector<128x32xf32> -> vector<128x32xf32>
    %c0_7 = arith.constant 0 : index
    %c0_8 = arith.constant 0 : index
    %c0_9 = arith.constant 0 : index
    %c0_10 = arith.constant 0 : index
    %10 = vector.load %arg6[%c0_7, %c0_8, %c0_9, %c0_10] : memref<1x1x1x32xf32, #tpu.memory_space<vmem>>, vector<1x1x1x32xf32>
    %11 = vector.shape_cast %10 : vector<1x1x1x32xf32> to vector<1x32xf32>
    %12 = vector.broadcast %11 : vector<1x32xf32> to vector<128x32xf32>
    %13 = arith.addf %9, %12 : vector<128x32xf32>
    %c0_11 = arith.constant 0 : index
    %c0_12 = arith.constant 0 : index
    %c0_13 = arith.constant 0 : index
    %c0_14 = arith.constant 0 : index
    %14 = vector.load %arg7[%c0_11, %c0_12, %c0_13, %c0_14] : memref<1x1x32x32xbf16, #tpu.memory_space<vmem>>, vector<1x1x32x32xbf16>
    %15 = vector.shape_cast %14 : vector<1x1x32x32xbf16> to vector<32x32xbf16>
    %cst_15 = arith.constant dense<0.000000e+00> : vector<128x32xf32>
    %16 = tpu.matmul %6, %15, %cst_15 {dimension_numbers = #tpu.dot_dimension_numbers<[1], [0], [0], [1], [0, 0, 1, 1], [], []>} : vector<128x32xbf16>, vector<32x32xbf16>, vector<128x32xf32> -> vector<128x32xf32>
    %c0_16 = arith.constant 0 : index
    %c0_17 = arith.constant 0 : index
    %c0_18 = arith.constant 0 : index
    %c0_19 = arith.constant 0 : index
    %17 = vector.load %arg8[%c0_16, %c0_17, %c0_18, %c0_19] : memref<1x1x1x32xf32, #tpu.memory_space<vmem>>, vector<1x1x1x32xf32>
    %18 = vector.shape_cast %17 : vector<1x1x1x32xf32> to vector<1x32xf32>
    %19 = vector.broadcast %18 : vector<1x32xf32> to vector<128x32xf32>
    %20 = arith.addf %16, %19 : vector<128x32xf32>
    %c0_20 = arith.constant 0 : index
    %c0_21 = arith.constant 0 : index
    %c0_22 = arith.constant 0 : index
    %c0_23 = arith.constant 0 : index
    %21 = vector.load %arg9[%c0_20, %c0_21, %c0_22, %c0_23] : memref<1x1x32x32xbf16, #tpu.memory_space<vmem>>, vector<1x1x32x32xbf16>
    %22 = vector.shape_cast %21 : vector<1x1x32x32xbf16> to vector<32x32xbf16>
    %cst_24 = arith.constant dense<0.000000e+00> : vector<128x32xf32>
    %23 = tpu.matmul %6, %22, %cst_24 {dimension_numbers = #tpu.dot_dimension_numbers<[1], [0], [0], [1], [0, 0, 1, 1], [], []>} : vector<128x32xbf16>, vector<32x32xbf16>, vector<128x32xf32> -> vector<128x32xf32>
    %c0_25 = arith.constant 0 : index
    %c0_26 = arith.constant 0 : index
    %c0_27 = arith.constant 0 : index
    %c0_28 = arith.constant 0 : index
    %24 = vector.load %arg10[%c0_25, %c0_26, %c0_27, %c0_28] : memref<1x1x1x32xf32, #tpu.memory_space<vmem>>, vector<1x1x1x32xf32>
    %25 = vector.shape_cast %24 : vector<1x1x1x32xf32> to vector<1x32xf32>
    %26 = vector.broadcast %25 : vector<1x32xf32> to vector<128x32xf32>
    %27 = arith.addf %23, %26 : vector<128x32xf32>
    %28 = vector.shape_cast %13 : vector<128x32xf32> to vector<8x16x32xf32>
    %29 = arith.truncf %28 : vector<8x16x32xf32> to vector<8x16x32xbf16>
    %30 = vector.shape_cast %20 : vector<128x32xf32> to vector<8x16x32xf32>
    %31 = arith.truncf %30 : vector<8x16x32xf32> to vector<8x16x32xbf16>
    %32 = vector.shape_cast %27 : vector<128x32xf32> to vector<8x16x32xf32>
    %33 = arith.truncf %32 : vector<8x16x32xf32> to vector<8x16x32xbf16>
    "tpu.trace_start"() <{level = 10 : i32, message = "snd,smd->snm"}> : () -> ()
    %cst_29 = arith.constant dense<0.000000e+00> : vector<8x16x16xf32>
    %34 = tpu.matmul %29, %31, %cst_29 {dimension_numbers = #tpu.dot_dimension_numbers<[2], [2], [1], [1], [0, 0, 0, 1, 1, 1], [0], [0]>} : vector<8x16x32xbf16>, vector<8x16x32xbf16>, vector<8x16x16xf32> -> vector<8x16x16xf32>
    "tpu.trace_stop"() : () -> ()
    %cst_30 = arith.constant 0.176776692 : f32
    %35 = vector.broadcast %cst_30 : f32 to vector<8x16x16xf32>
    %36 = arith.mulf %34, %35 : vector<8x16x16xf32>
    %cst_31 = arith.constant dense<0xFF800000> : vector<8x16xf32>
    %37 = vector.multi_reduction <maximumf>, %36, %cst_31 [2] : vector<8x16x16xf32> to vector<8x16xf32>
    %38 = vector.shape_cast %37 : vector<8x16xf32> to vector<8x16x1xf32>
    %39 = vector.broadcast %38 : vector<8x16x1xf32> to vector<8x16x16xf32>
    %40 = arith.subf %36, %39 : vector<8x16x16xf32>
    %41 = math.exp %40 : vector<8x16x16xf32>
    %cst_32 = arith.constant dense<0.000000e+00> : vector<8x16xf32>
    %42 = vector.multi_reduction <add>, %41, %cst_32 [2] : vector<8x16x16xf32> to vector<8x16xf32>
    %43 = vector.shape_cast %42 : vector<8x16xf32> to vector<8x16x1xf32>
    %44 = tpu.reciprocal %43 {approx = true} : vector<8x16x1xf32> -> vector<8x16x1xf32>
    %45 = vector.broadcast %44 : vector<8x16x1xf32> to vector<8x16x16xf32>
    %46 = arith.mulf %41, %45 : vector<8x16x16xf32>
    %47 = arith.truncf %46 : vector<8x16x16xf32> to vector<8x16x16xbf16>
    "tpu.trace_start"() <{level = 10 : i32, message = "snm,smd->snd"}> : () -> ()
    %cst_33 = arith.constant dense<0.000000e+00> : vector<8x16x32xf32>
    %48 = tpu.matmul %47, %33, %cst_33 {dimension_numbers = #tpu.dot_dimension_numbers<[2], [1], [1], [2], [0, 0, 0, 1, 1, 2], [0], [0]>} : vector<8x16x16xbf16>, vector<8x16x32xbf16>, vector<8x16x32xf32> -> vector<8x16x32xf32>
    "tpu.trace_stop"() : () -> ()
    %49 = vector.shape_cast %48 : vector<8x16x32xf32> to vector<128x32xf32>
    %50 = arith.truncf %49 : vector<128x32xf32> to vector<128x32xbf16>
    %c0_34 = arith.constant 0 : index
    %c0_35 = arith.constant 0 : index
    %c0_36 = arith.constant 0 : index
    %c0_37 = arith.constant 0 : index
    %51 = vector.load %arg11[%c0_34, %c0_35, %c0_36, %c0_37] : memref<1x1x32x32xbf16, #tpu.memory_space<vmem>>, vector<1x1x32x32xbf16>
    %52 = vector.shape_cast %51 : vector<1x1x32x32xbf16> to vector<32x32xbf16>
    %cst_38 = arith.constant dense<0.000000e+00> : vector<128x32xf32>
    %53 = tpu.matmul %50, %52, %cst_38 {dimension_numbers = #tpu.dot_dimension_numbers<[1], [0], [0], [1], [0, 0, 1, 1], [], []>} : vector<128x32xbf16>, vector<32x32xbf16>, vector<128x32xf32> -> vector<128x32xf32>
    %c0_39 = arith.constant 0 : index
    %c0_40 = arith.constant 0 : index
    %c0_41 = arith.constant 0 : index
    %c0_42 = arith.constant 0 : index
    %54 = vector.load %arg12[%c0_39, %c0_40, %c0_41, %c0_42] : memref<1x1x1x32xf32, #tpu.memory_space<vmem>>, vector<1x1x1x32xf32>
    %55 = vector.shape_cast %54 : vector<1x1x1x32xf32> to vector<1x32xf32>
    %56 = vector.broadcast %55 : vector<1x32xf32> to vector<128x32xf32>
    %57 = arith.addf %53, %56 : vector<128x32xf32>
    %58 = arith.addf %5, %57 : vector<128x32xf32>
    %cst_43 = arith.constant dense<0.000000e+00> : vector<128xf32>
    %59 = vector.multi_reduction <add>, %58, %cst_43 [1] : vector<128x32xf32> to vector<128xf32>
    %60 = vector.shape_cast %59 : vector<128xf32> to vector<128x1xf32>
    %cst_44 = arith.constant 3.200000e+01 : f32
    %61 = vector.broadcast %cst_44 : f32 to vector<128x1xf32>
    %62 = arith.divf %60, %61 : vector<128x1xf32>
    %63 = vector.broadcast %62 : vector<128x1xf32> to vector<128x32xf32>
    %64 = arith.subf %58, %63 : vector<128x32xf32>
    %65 = arith.mulf %64, %64 : vector<128x32xf32>
    %cst_45 = arith.constant dense<0.000000e+00> : vector<128xf32>
    %66 = vector.multi_reduction <add>, %65, %cst_45 [1] : vector<128x32xf32> to vector<128xf32>
    %67 = vector.shape_cast %66 : vector<128xf32> to vector<128x1xf32>
    %cst_46 = arith.constant 3.200000e+01 : f32
    %68 = vector.broadcast %cst_46 : f32 to vector<128x1xf32>
    %69 = arith.divf %67, %68 : vector<128x1xf32>
    %70 = vector.broadcast %62 : vector<128x1xf32> to vector<128x32xf32>
    %71 = arith.subf %58, %70 : vector<128x32xf32>
    %cst_47 = arith.constant 9.99999974E-6 : f32
    %72 = vector.broadcast %cst_47 : f32 to vector<128x1xf32>
    %73 = arith.addf %69, %72 : vector<128x1xf32>
    %74 = math.rsqrt %73 : vector<128x1xf32>
    %75 = vector.broadcast %74 : vector<128x1xf32> to vector<128x32xf32>
    %76 = arith.mulf %71, %75 : vector<128x32xf32>
    %c0_48 = arith.constant 0 : index
    %c0_49 = arith.constant 0 : index
    %c0_50 = arith.constant 0 : index
    %c0_51 = arith.constant 0 : index
    %77 = vector.load %arg17[%c0_48, %c0_49, %c0_50, %c0_51] : memref<1x1x1x32xf32, #tpu.memory_space<vmem>>, vector<1x1x1x32xf32>
    %78 = vector.shape_cast %77 : vector<1x1x1x32xf32> to vector<1x32xf32>
    %79 = vector.broadcast %78 : vector<1x32xf32> to vector<128x32xf32>
    %80 = arith.mulf %76, %79 : vector<128x32xf32>
    %c0_52 = arith.constant 0 : index
    %c0_53 = arith.constant 0 : index
    %c0_54 = arith.constant 0 : index
    %c0_55 = arith.constant 0 : index
    %81 = vector.load %arg18[%c0_52, %c0_53, %c0_54, %c0_55] : memref<1x1x1x32xf32, #tpu.memory_space<vmem>>, vector<1x1x1x32xf32>
    %82 = vector.shape_cast %81 : vector<1x1x1x32xf32> to vector<1x32xf32>
    %83 = vector.broadcast %82 : vector<1x32xf32> to vector<128x32xf32>
    %84 = arith.addf %80, %83 : vector<128x32xf32>
    %85 = arith.truncf %84 : vector<128x32xf32> to vector<128x32xbf16>
    %c0_56 = arith.constant 0 : index
    %c0_57 = arith.constant 0 : index
    %c0_58 = arith.constant 0 : index
    %c0_59 = arith.constant 0 : index
    %86 = vector.load %arg13[%c0_56, %c0_57, %c0_58, %c0_59] : memref<1x1x32x64xbf16, #tpu.memory_space<vmem>>, vector<1x1x32x64xbf16>
    %87 = vector.shape_cast %86 : vector<1x1x32x64xbf16> to vector<32x64xbf16>
    %cst_60 = arith.constant dense<0.000000e+00> : vector<128x64xf32>
    %88 = tpu.matmul %85, %87, %cst_60 {dimension_numbers = #tpu.dot_dimension_numbers<[1], [0], [0], [1], [0, 0, 1, 1], [], []>} : vector<128x32xbf16>, vector<32x64xbf16>, vector<128x64xf32> -> vector<128x64xf32>
    %c0_61 = arith.constant 0 : index
    %c0_62 = arith.constant 0 : index
    %c0_63 = arith.constant 0 : index
    %c0_64 = arith.constant 0 : index
    %89 = vector.load %arg14[%c0_61, %c0_62, %c0_63, %c0_64] : memref<1x1x1x64xf32, #tpu.memory_space<vmem>>, vector<1x1x1x64xf32>
    %90 = vector.shape_cast %89 : vector<1x1x1x64xf32> to vector<1x64xf32>
    %91 = vector.broadcast %90 : vector<1x64xf32> to vector<128x64xf32>
    %92 = arith.addf %88, %91 : vector<128x64xf32>
    %cst_65 = arith.constant 0.000000e+00 : f32
    %93 = vector.broadcast %cst_65 : f32 to vector<128x64xf32>
    %94 = arith.maximumf %92, %93 : vector<128x64xf32>
    %95 = arith.truncf %94 : vector<128x64xf32> to vector<128x64xbf16>
    %c0_66 = arith.constant 0 : index
    %c0_67 = arith.constant 0 : index
    %c0_68 = arith.constant 0 : index
    %c0_69 = arith.constant 0 : index
    %96 = vector.load %arg15[%c0_66, %c0_67, %c0_68, %c0_69] : memref<1x1x64x32xbf16, #tpu.memory_space<vmem>>, vector<1x1x64x32xbf16>
    %97 = vector.shape_cast %96 : vector<1x1x64x32xbf16> to vector<64x32xbf16>
    %cst_70 = arith.constant dense<0.000000e+00> : vector<128x32xf32>
    %98 = tpu.matmul %95, %97, %cst_70 {dimension_numbers = #tpu.dot_dimension_numbers<[1], [0], [0], [1], [0, 0, 1, 1], [], []>} : vector<128x64xbf16>, vector<64x32xbf16>, vector<128x32xf32> -> vector<128x32xf32>
    %c0_71 = arith.constant 0 : index
    %c0_72 = arith.constant 0 : index
    %c0_73 = arith.constant 0 : index
    %c0_74 = arith.constant 0 : index
    %99 = vector.load %arg16[%c0_71, %c0_72, %c0_73, %c0_74] : memref<1x1x1x32xf32, #tpu.memory_space<vmem>>, vector<1x1x1x32xf32>
    %100 = vector.shape_cast %99 : vector<1x1x1x32xf32> to vector<1x32xf32>
    %101 = vector.broadcast %100 : vector<1x32xf32> to vector<128x32xf32>
    %102 = arith.addf %98, %101 : vector<128x32xf32>
    %103 = arith.addf %84, %102 : vector<128x32xf32>
    %cst_75 = arith.constant dense<0.000000e+00> : vector<128xf32>
    %104 = vector.multi_reduction <add>, %103, %cst_75 [1] : vector<128x32xf32> to vector<128xf32>
    %105 = vector.shape_cast %104 : vector<128xf32> to vector<128x1xf32>
    %cst_76 = arith.constant 3.200000e+01 : f32
    %106 = vector.broadcast %cst_76 : f32 to vector<128x1xf32>
    %107 = arith.divf %105, %106 : vector<128x1xf32>
    %108 = vector.broadcast %107 : vector<128x1xf32> to vector<128x32xf32>
    %109 = arith.subf %103, %108 : vector<128x32xf32>
    %110 = arith.mulf %109, %109 : vector<128x32xf32>
    %cst_77 = arith.constant dense<0.000000e+00> : vector<128xf32>
    %111 = vector.multi_reduction <add>, %110, %cst_77 [1] : vector<128x32xf32> to vector<128xf32>
    %112 = vector.shape_cast %111 : vector<128xf32> to vector<128x1xf32>
    %cst_78 = arith.constant 3.200000e+01 : f32
    %113 = vector.broadcast %cst_78 : f32 to vector<128x1xf32>
    %114 = arith.divf %112, %113 : vector<128x1xf32>
    %115 = vector.broadcast %107 : vector<128x1xf32> to vector<128x32xf32>
    %116 = arith.subf %103, %115 : vector<128x32xf32>
    %cst_79 = arith.constant 9.99999974E-6 : f32
    %117 = vector.broadcast %cst_79 : f32 to vector<128x1xf32>
    %118 = arith.addf %114, %117 : vector<128x1xf32>
    %119 = math.rsqrt %118 : vector<128x1xf32>
    %120 = vector.broadcast %119 : vector<128x1xf32> to vector<128x32xf32>
    %121 = arith.mulf %116, %120 : vector<128x32xf32>
    %c0_80 = arith.constant 0 : index
    %c0_81 = arith.constant 0 : index
    %c0_82 = arith.constant 0 : index
    %c0_83 = arith.constant 0 : index
    %122 = vector.load %arg19[%c0_80, %c0_81, %c0_82, %c0_83] : memref<1x1x1x32xf32, #tpu.memory_space<vmem>>, vector<1x1x1x32xf32>
    %123 = vector.shape_cast %122 : vector<1x1x1x32xf32> to vector<1x32xf32>
    %124 = vector.broadcast %123 : vector<1x32xf32> to vector<128x32xf32>
    %125 = arith.mulf %121, %124 : vector<128x32xf32>
    %c0_84 = arith.constant 0 : index
    %c0_85 = arith.constant 0 : index
    %c0_86 = arith.constant 0 : index
    %c0_87 = arith.constant 0 : index
    %126 = vector.load %arg20[%c0_84, %c0_85, %c0_86, %c0_87] : memref<1x1x1x32xf32, #tpu.memory_space<vmem>>, vector<1x1x1x32xf32>
    %127 = vector.shape_cast %126 : vector<1x1x1x32xf32> to vector<1x32xf32>
    %128 = vector.broadcast %127 : vector<1x32xf32> to vector<128x32xf32>
    %129 = arith.addf %125, %128 : vector<128x32xf32>
    %c1_i32 = arith.constant 1 : i32
    %130 = arith.cmpi eq, %arg1, %c1_i32 : i32
    %true = arith.constant true
    %131 = arith.xori %130, %true : i1
    %132 = arith.extui %131 : i1 to i32
    %c0_i32_88 = arith.constant 0 : i32
    %133 = arith.cmpi ne, %132, %c0_i32_88 : i32
    scf.if %133 {
      %c0_92 = arith.constant 0 : index
      %c0_93 = arith.constant 0 : index
      %140 = vector.load %arg24[%c0_92, %c0_93] : memref<128x32xf32, #tpu.memory_space<vmem>>, vector<128x32xf32>
      tpu.vector_store %arg24[%c0_92, %c0_93], %129 {strides = array<i32>} : memref<128x32xf32, #tpu.memory_space<vmem>>, vector<128x32xf32>,
    } else {
    }
    %134 = arith.extui %130 : i1 to i32
    %c0_i32_89 = arith.constant 0 : i32
    %135 = arith.cmpi ne, %134, %c0_i32_89 : i32
    scf.if %135 {
      %140 = vector.extract_strided_slice %129 {offsets = [0, 0], sizes = [16, 32], strides = [1, 1]} : vector<128x32xf32> to vector<16x32xf32>
      %c0_92 = arith.constant 0 : index
      %c0_93 = arith.constant 0 : index
      %141 = vector.load %arg4[%c0_92, %c0_93] : memref<2x16xf32, #tpu.memory_space<vmem>>, vector<2x16xf32>
      %cst_94 = arith.constant dense<0.000000e+00> : vector<2x32xf32>
      %142 = tpu.matmul %141, %140, %cst_94 {dimension_numbers = #tpu.dot_dimension_numbers<[1], [0], [0], [1], [0, 0, 1, 1], [], []>} : vector<2x16xf32>, vector<16x32xf32>, vector<2x32xf32> -> vector<2x32xf32>
      %c0_95 = arith.constant 0 : index
      %c0_96 = arith.constant 0 : index
      %143 = vector.load %arg25[%c0_95, %c0_96] : memref<2x4xf32, #tpu.memory_space<vmem>>, vector<2x4xf32>
      %c0_97 = arith.constant 0 : index
      %c0_98 = arith.constant 0 : index
      %c0_99 = arith.constant 0 : index
      %144 = vector.load %arg21[%c0_97, %c0_98, %c0_99] : memref<1x32x4xf32, #tpu.memory_space<vmem>>, vector<1x32x4xf32>
      %145 = vector.shape_cast %144 : vector<1x32x4xf32> to vector<32x4xf32>
      %cst_100 = arith.constant dense<0.000000e+00> : vector<2x4xf32>
      %146 = tpu.matmul %142, %145, %cst_100 {dimension_numbers = #tpu.dot_dimension_numbers<[1], [0], [0], [1], [0, 0, 1, 1], [], []>} : vector<2x32xf32>, vector<32x4xf32>, vector<2x4xf32> -> vector<2x4xf32>
      %c0_101 = arith.constant 0 : index
      %c0_102 = arith.constant 0 : index
      %c0_103 = arith.constant 0 : index
      %147 = vector.load %arg22[%c0_101, %c0_102, %c0_103] : memref<1x1x4xf32, #tpu.memory_space<vmem>>, vector<1x1x4xf32>
      %148 = vector.shape_cast %147 : vector<1x1x4xf32> to vector<1x4xf32>
      %149 = vector.broadcast %148 : vector<1x4xf32> to vector<2x4xf32>
      %150 = arith.addf %146, %149 : vector<2x4xf32>
      %151 = arith.addf %143, %150 : vector<2x4xf32>
      %c0_104 = arith.constant 0 : index
      %c0_105 = arith.constant 0 : index
      %152 = vector.load %arg25[%c0_104, %c0_105] : memref<2x4xf32, #tpu.memory_space<vmem>>, vector<2x4xf32>
      tpu.vector_store %arg25[%c0_104, %c0_105], %151 {strides = array<i32>} : memref<2x4xf32, #tpu.memory_space<vmem>>, vector<2x4xf32>,
      %c0_106 = arith.constant 0 : index
      %c0_107 = arith.constant 0 : index
      %153 = vector.load %arg25[%c0_106, %c0_107] : memref<2x4xf32, #tpu.memory_space<vmem>>, vector<2x4xf32>
      %c0_108 = arith.constant 0 : index
      %c0_109 = arith.constant 0 : index
      %154 = vector.load %arg23[%c0_108, %c0_109] : memref<2x4xf32, #tpu.memory_space<vmem>>, vector<2x4xf32>
      tpu.vector_store %arg23[%c0_108, %c0_109], %153 {strides = array<i32>} : memref<2x4xf32, #tpu.memory_space<vmem>>, vector<2x4xf32>,
    } else {
    }
    %c1_i32_90 = arith.constant 1 : i32
    %136 = arith.cmpi slt, %arg0, %c1_i32_90 : i32
    %137 = arith.andi %130, %136 : i1
    %138 = arith.extui %137 : i1 to i32
    %c0_i32_91 = arith.constant 0 : i32
    %139 = arith.cmpi ne, %138, %c0_i32_91 : i32
    scf.if %139 {
      %140 = vector.extract_strided_slice %129 {offsets = [0, 0], sizes = [16, 32], strides = [1, 1]} : vector<128x32xf32> to vector<16x32xf32>
      %c0_92 = arith.constant 0 : index
      %c0_93 = arith.constant 0 : index
      %141 = vector.load %arg3[%c0_92, %c0_93] : memref<128x16xf32, #tpu.memory_space<vmem>>, vector<128x16xf32>
      %cst_94 = arith.constant dense<0.000000e+00> : vector<128x32xf32>
      %142 = tpu.matmul %141, %140, %cst_94 {dimension_numbers = #tpu.dot_dimension_numbers<[1], [0], [0], [1], [0, 0, 1, 1], [], []>} : vector<128x16xf32>, vector<16x32xf32>, vector<128x32xf32> -> vector<128x32xf32>
      %c0_95 = arith.constant 0 : index
      %c0_96 = arith.constant 0 : index
      %143 = vector.load %arg24[%c0_95, %c0_96] : memref<128x32xf32, #tpu.memory_space<vmem>>, vector<128x32xf32>
      tpu.vector_store %arg24[%c0_95, %c0_96], %142 {strides = array<i32>} : memref<128x32xf32, #tpu.memory_space<vmem>>, vector<128x32xf32>,
    } else {
    }
    return
  }
  func.func @transform_0(%arg0: i32, %arg1: i32) -> (i32, i32) {
    %c0_i32 = arith.constant 0 : i32
    %c0_i32_0 = arith.constant 0 : i32
    %c0_i32_1 = arith.constant 0 : i32
    return %c0_i32, %c0_i32_0 : i32, i32
  }
  func.func @transform_1(%arg0: i32, %arg1: i32) -> (i32, i32) {
    %c0_i32 = arith.constant 0 : i32
    %c0_i32_0 = arith.constant 0 : i32
    %c0_i32_1 = arith.constant 0 : i32
    return %c0_i32, %c0_i32_0 : i32, i32
  }
  func.func @transform_2(%arg0: i32, %arg1: i32) -> (i32, i32) {
    %c0_i32 = arith.constant 0 : i32
    %c0_i32_0 = arith.constant 0 : i32
    %c0_i32_1 = arith.constant 0 : i32
    return %c0_i32, %c0_i32_0 : i32, i32
  }
  func.func @transform_3(%arg0: i32, %arg1: i32) -> (i32, i32, i32, i32) {
    %c0_i32 = arith.constant 0 : i32
    %c0_i32_0 = arith.constant 0 : i32
    %c0_i32_1 = arith.constant 0 : i32
    return %arg0, %arg1, %c0_i32, %c0_i32_0 : i32, i32, i32, i32
  }
  func.func @transform_4(%arg0: i32, %arg1: i32) -> (i32, i32, i32, i32) {
    %c0_i32 = arith.constant 0 : i32
    %c0_i32_0 = arith.constant 0 : i32
    %c0_i32_1 = arith.constant 0 : i32
    return %arg0, %arg1, %c0_i32, %c0_i32_0 : i32, i32, i32, i32
  }
  func.func @transform_5(%arg0: i32, %arg1: i32) -> (i32, i32, i32, i32) {
    %c0_i32 = arith.constant 0 : i32
    %c0_i32_0 = arith.constant 0 : i32
    %c0_i32_1 = arith.constant 0 : i32
    return %arg0, %arg1, %c0_i32, %c0_i32_0 : i32, i32, i32, i32
  }
  func.func @transform_6(%arg0: i32, %arg1: i32) -> (i32, i32, i32, i32) {
    %c0_i32 = arith.constant 0 : i32
    %c0_i32_0 = arith.constant 0 : i32
    %c0_i32_1 = arith.constant 0 : i32
    return %arg0, %arg1, %c0_i32, %c0_i32_0 : i32, i32, i32, i32
  }
  func.func @transform_7(%arg0: i32, %arg1: i32) -> (i32, i32, i32, i32) {
    %c0_i32 = arith.constant 0 : i32
    %c0_i32_0 = arith.constant 0 : i32
    %c0_i32_1 = arith.constant 0 : i32
    return %arg0, %arg1, %c0_i32, %c0_i32_0 : i32, i32, i32, i32
  }
  func.func @transform_8(%arg0: i32, %arg1: i32) -> (i32, i32, i32, i32) {
    %c0_i32 = arith.constant 0 : i32
    %c0_i32_0 = arith.constant 0 : i32
    %c0_i32_1 = arith.constant 0 : i32
    return %arg0, %arg1, %c0_i32, %c0_i32_0 : i32, i32, i32, i32
  }
  func.func @transform_9(%arg0: i32, %arg1: i32) -> (i32, i32, i32, i32) {
    %c0_i32 = arith.constant 0 : i32
    %c0_i32_0 = arith.constant 0 : i32
    %c0_i32_1 = arith.constant 0 : i32
    return %arg0, %arg1, %c0_i32, %c0_i32_0 : i32, i32, i32, i32
  }
  func.func @transform_10(%arg0: i32, %arg1: i32) -> (i32, i32, i32, i32) {
    %c0_i32 = arith.constant 0 : i32
    %c0_i32_0 = arith.constant 0 : i32
    %c0_i32_1 = arith.constant 0 : i32
    return %arg0, %arg1, %c0_i32, %c0_i32_0 : i32, i32, i32, i32
  }
  func.func @transform_11(%arg0: i32, %arg1: i32) -> (i32, i32, i32, i32) {
    %c0_i32 = arith.constant 0 : i32
    %c0_i32_0 = arith.constant 0 : i32
    %c0_i32_1 = arith.constant 0 : i32
    return %arg0, %arg1, %c0_i32, %c0_i32_0 : i32, i32, i32, i32
  }
  func.func @transform_12(%arg0: i32, %arg1: i32) -> (i32, i32, i32, i32) {
    %c0_i32 = arith.constant 0 : i32
    %c0_i32_0 = arith.constant 0 : i32
    %c0_i32_1 = arith.constant 0 : i32
    return %arg0, %arg1, %c0_i32, %c0_i32_0 : i32, i32, i32, i32
  }
  func.func @transform_13(%arg0: i32, %arg1: i32) -> (i32, i32, i32, i32) {
    %c0_i32 = arith.constant 0 : i32
    %c0_i32_0 = arith.constant 0 : i32
    %c0_i32_1 = arith.constant 0 : i32
    return %arg0, %arg1, %c0_i32, %c0_i32_0 : i32, i32, i32, i32
  }
  func.func @transform_14(%arg0: i32, %arg1: i32) -> (i32, i32, i32, i32) {
    %c0_i32 = arith.constant 0 : i32
    %c0_i32_0 = arith.constant 0 : i32
    %c0_i32_1 = arith.constant 0 : i32
    return %arg0, %arg1, %c0_i32, %c0_i32_0 : i32, i32, i32, i32
  }
  func.func @transform_15(%arg0: i32, %arg1: i32) -> (i32, i32, i32, i32) {
    %c0_i32 = arith.constant 0 : i32
    %c0_i32_0 = arith.constant 0 : i32
    %c0_i32_1 = arith.constant 0 : i32
    return %arg0, %arg1, %c0_i32, %c0_i32_0 : i32, i32, i32, i32
  }
  func.func @transform_16(%arg0: i32, %arg1: i32) -> (i32, i32, i32, i32) {
    %c0_i32 = arith.constant 0 : i32
    %c0_i32_0 = arith.constant 0 : i32
    %c0_i32_1 = arith.constant 0 : i32
    return %arg0, %arg1, %c0_i32, %c0_i32_0 : i32, i32, i32, i32
  }
  func.func @transform_17(%arg0: i32, %arg1: i32) -> (i32, i32, i32, i32) {
    %c0_i32 = arith.constant 0 : i32
    %c0_i32_0 = arith.constant 0 : i32
    %c0_i32_1 = arith.constant 0 : i32
    return %arg0, %arg1, %c0_i32, %c0_i32_0 : i32, i32, i32, i32
  }
  func.func @transform_18(%arg0: i32, %arg1: i32) -> (i32, i32, i32, i32) {
    %c0_i32 = arith.constant 0 : i32
    %c0_i32_0 = arith.constant 0 : i32
    %c0_i32_1 = arith.constant 0 : i32
    return %arg0, %arg1, %c0_i32, %c0_i32_0 : i32, i32, i32, i32
  }
  func.func @transform_19(%arg0: i32, %arg1: i32) -> (i32, i32, i32) {
    %c0_i32 = arith.constant 0 : i32
    %c0_i32_0 = arith.constant 0 : i32
    %c0_i32_1 = arith.constant 0 : i32
    return %arg0, %c0_i32, %c0_i32_0 : i32, i32, i32
  }
  func.func @transform_20(%arg0: i32, %arg1: i32) -> (i32, i32, i32) {
    %c0_i32 = arith.constant 0 : i32
    %c0_i32_0 = arith.constant 0 : i32
    %c0_i32_1 = arith.constant 0 : i32
    return %arg0, %c0_i32, %c0_i32_0 : i32, i32, i32
  }
  func.func @transform_21(%arg0: i32, %arg1: i32) -> (i32, i32) {
    %c0_i32 = arith.constant 0 : i32
    %c0_i32_0 = arith.constant 0 : i32
    %c0_i32_1 = arith.constant 0 : i32
    return %c0_i32, %c0_i32_0 : i32, i32
  }
}

</mosaic_0001>

<llo_original>
// kernel: tpu_custom_call.1
$region0: #{tpu_custom_call.1}
  #allocation0 [shape = 'u32[]', space=smem, size = 0x4, offset = 0x4, fixed_abs, tag = 'smem constant byte address 0x4 - core index']
  #allocation1 [shape = 'u32[144,128]{1,0:T(1,128)}', space=vmem, size = 0x12000, scoped, tag = 'internal scratch']
  #allocation2 [shape = 'f32[128,32]{1,0:T(8,128)}', space=vmem, size = 0x10000, scoped, tag = 'scratch operand']
  #allocation3 [shape = 'f32[2,4]{1,0:T(2,128)}', space=vmem, size = 0x400, scoped, tag = 'scratch operand']
  %s0 = inlined_call_operand.vmem [shape: f32[128,32], index: 0, kind: input, shape index: {}]
  %s1 = inlined_call_operand.vmem [shape: f32[128,16], index: 1, kind: input, shape index: {}]
  %s2 = inlined_call_operand.vmem [shape: f32[2,16], index: 2, kind: input, shape index: {}]
  %s3 = inlined_call_operand.vmem [shape: bf16[2,2,32,32], index: 3, kind: input, shape index: {}]
  %s4 = inlined_call_operand.vmem [shape: f32[2,2,1,32], index: 4, kind: input, shape index: {}]
  %s5 = inlined_call_operand.vmem [shape: bf16[2,2,32,32], index: 5, kind: input, shape index: {}]
  %s6 = inlined_call_operand.vmem [shape: f32[2,2,1,32], index: 6, kind: input, shape index: {}]
  %s7 = inlined_call_operand.vmem [shape: bf16[2,2,32,32], index: 7, kind: input, shape index: {}]
  %s8 = inlined_call_operand.vmem [shape: f32[2,2,1,32], index: 8, kind: input, shape index: {}]
  %s9 = inlined_call_operand.vmem [shape: bf16[2,2,32,32], index: 9, kind: input, shape index: {}]
  %s10 = inlined_call_operand.vmem [shape: f32[2,2,1,32], index: 10, kind: input, shape index: {}]
  %s11 = inlined_call_operand.vmem [shape: bf16[2,2,32,64], index: 11, kind: input, shape index: {}]
  %s12 = inlined_call_operand.vmem [shape: f32[2,2,1,64], index: 12, kind: input, shape index: {}]
  %s13 = inlined_call_operand.vmem [shape: bf16[2,2,64,32], index: 13, kind: input, shape index: {}]
  %s14 = inlined_call_operand.vmem [shape: f32[2,2,1,32], index: 14, kind: input, shape index: {}]
  %s15 = inlined_call_operand.vmem [shape: f32[2,2,1,32], index: 15, kind: input, shape index: {}]
  %s16 = inlined_call_operand.vmem [shape: f32[2,2,1,32], index: 16, kind: input, shape index: {}]
  %s17 = inlined_call_operand.vmem [shape: f32[2,2,1,32], index: 17, kind: input, shape index: {}]
  %s18 = inlined_call_operand.vmem [shape: f32[2,2,1,32], index: 18, kind: input, shape index: {}]
  %s19 = inlined_call_operand.vmem [shape: f32[2,32,4], index: 19, kind: input, shape index: {}]
  %s20 = inlined_call_operand.vmem [shape: f32[2,1,4], index: 20, kind: input, shape index: {}]
  %s21 = inlined_call_operand.hbm [shape: f32[2,4], index: 21, kind: output, shape index: {}]
  %s22 = sld [smem:[#allocation0]]
  $region133: #{tpu_custom_call.1} parent=0
    _
  %s24 = ssub.s32 1, %s22
  %s25 = scalar_select 0, %s24, %s22
  $region1: #{tpu_custom_call.1} parent=0
    #allocation4 [shape = 'u8[1024]{0}', space=vmem, size = 0x400, scoped, tag = 'output window, operand 0, single buffered']
    #allocation5 [shape = 's32[2]{0}', space=sflag, size = 0x8, scoped, tag = 'scoped memory for tpu_custom_call.1']
    %26 = vsyncpa [#allocation5], 0
    loop: start=0, step=1, limit=6
    $region2: #{tpu_custom_call.1} parent=1 // loop_pre_header
      _
    $region3: #{tpu_custom_call.1} parent=1 // loop_header
      %s28 = sphi 0, %s32
      %p29 = scmp.ge.s32.totalorder %s28, 6
      %s35 = sphi 0, %s47
      %s36 = sphi 0, %s43
      %s37 = sphi 0, %s35
      %s38 = sphi 0, %s36
      %s39 = sphi 0, %s37
      %s40 = sphi 0, %s38
      %s48 = sphi 0, %s48
      %s50 = sphi 0, %s48
      %s51 = sphi 0, %s50
      %s65 = sphi 0, %s51
      %s69 = sphi 0, %s69
      %s71 = sphi 0, %s69
      %s72 = sphi 0, %s71
      %s86 = sphi 0, %s72
      %s90 = sphi 0, %s90
      %s92 = sphi 0, %s90
      %s93 = sphi 0, %s92
      %s107 = sphi 0, %s93
      %s115 = sphi 0, %s117
      %s118 = sphi 0, %s115
      %s119 = sphi 0, %s118
      %s135 = sphi 0, %s119
      %s143 = sphi 0, %s145
      %s146 = sphi 0, %s143
      %s147 = sphi 0, %s146
      %s163 = sphi 0, %s147
      %s171 = sphi 0, %s173
      %s174 = sphi 0, %s171
      %s175 = sphi 0, %s174
      %s191 = sphi 0, %s175
      %s199 = sphi 0, %s201
      %s202 = sphi 0, %s199
      %s203 = sphi 0, %s202
      %s219 = sphi 0, %s203
      %s227 = sphi 0, %s229
      %s230 = sphi 0, %s227
      %s231 = sphi 0, %s230
      %s247 = sphi 0, %s231
      %s255 = sphi 0, %s257
      %s258 = sphi 0, %s255
      %s259 = sphi 0, %s258
      %s275 = sphi 0, %s259
      %s283 = sphi 0, %s285
      %s286 = sphi 0, %s283
      %s287 = sphi 0, %s286
      %s303 = sphi 0, %s287
      %s311 = sphi 0, %s313
      %s314 = sphi 0, %s311
      %s315 = sphi 0, %s314
      %s331 = sphi 0, %s315
      %s339 = sphi 0, %s341
      %s342 = sphi 0, %s339
      %s343 = sphi 0, %s342
      %s359 = sphi 0, %s343
      %s367 = sphi 0, %s369
      %s370 = sphi 0, %s367
      %s371 = sphi 0, %s370
      %s387 = sphi 0, %s371
      %s395 = sphi 0, %s397
      %s398 = sphi 0, %s395
      %s399 = sphi 0, %s398
      %s415 = sphi 0, %s399
      %s423 = sphi 0, %s425
      %s426 = sphi 0, %s423
      %s427 = sphi 0, %s426
      %s443 = sphi 0, %s427
      %s451 = sphi 0, %s453
      %s454 = sphi 0, %s451
      %s455 = sphi 0, %s454
      %s471 = sphi 0, %s455
      %s479 = sphi 0, %s481
      %s482 = sphi 0, %s479
      %s483 = sphi 0, %s482
      %s499 = sphi 0, %s483
      %s507 = sphi 0, %s509
      %s510 = sphi 0, %s507
      %s511 = sphi 0, %s510
      %s527 = sphi 0, %s511
      %s535 = sphi 0, %s537
      %s538 = sphi 0, %s535
      %s539 = sphi 0, %s538
      %s555 = sphi 0, %s539
      %s561 = sphi 0, %s563
      %s564 = sphi 0, %s561
      %s565 = sphi 0, %s564
      %s581 = sphi 0, %s565
      %s587 = sphi 0, %s589
      %s590 = sphi 0, %s587
      %s591 = sphi 0, %s590
      %s607 = sphi 0, %s591
      %s611 = sphi 0, %s611
      %s613 = sphi 0, %s611
      %s614 = sphi 0, %s613
      %s628 = sphi 0, %s614
    $region4: #{tpu_custom_call.1} parent=1 // loop_header_branch
      %31 = sbr.rel (%p29) target = $region8
    $region5: #{tpu_custom_call.1} parent=1 // loop_body
      %s33 = ssub.s32 %s28, 1
      %s34 = ssub.s32 %s28, 2
      %s41 = sadd.s32 1, %s36
      %p42 = scmp.ge.s32.totalorder %s41, 2
      %s43 = scalar_select %p42, 0, %s41
      %s44 = sadd.s32 1, %s35
      %s45 = scalar_select %p42, %s44, %s35
      %p46 = scmp.ge.s32.totalorder %s45, 2
      %s47 = scalar_select %p46, 0, %s45
      %s49 = sadd.s32 %s48, 1
      %p52 = scmp.eq.s32.totalorder %s28, 3
      %p53 = scmp.ne.s32.totalorder %s48, %s50
      %p54 = scmp.eq.s32.totalorder %s28, 0
      %p55 = por %p53, %p54
      %p56 = scmp.ne.s32.totalorder %s48, %s50
      %p57 = scmp.eq.s32.totalorder %s33, 3
      %p58 = por %p56, %p57
      %p59 = scmp.ne.s32.totalorder %s50, %s51
      %p60 = scmp.eq.s32.totalorder %s33, 0
      %p61 = por %p59, %p60
      %p62 = scmp.ne.s32.totalorder %s50, %s51
      %p63 = scmp.eq.s32.totalorder %s34, 3
      %p64 = por %p62, %p63
      %p66 = scmp.ne.s32.totalorder %s51, %s65
      %p67 = scmp.eq.s32.totalorder %s34, 0
      %p68 = por %p66, %p67
      %s70 = sadd.s32 %s69, 1
      %p73 = scmp.eq.s32.totalorder %s28, 3
      %p74 = scmp.ne.s32.totalorder %s69, %s71
      %p75 = scmp.eq.s32.totalorder %s28, 0
      %p76 = por %p74, %p75
      %p77 = scmp.ne.s32.totalorder %s69, %s71
      %p78 = scmp.eq.s32.totalorder %s33, 3
      %p79 = por %p77, %p78
      %p80 = scmp.ne.s32.totalorder %s71, %s72
      %p81 = scmp.eq.s32.totalorder %s33, 0
      %p82 = por %p80, %p81
      %p83 = scmp.ne.s32.totalorder %s71, %s72
      %p84 = scmp.eq.s32.totalorder %s34, 3
      %p85 = por %p83, %p84
      %p87 = scmp.ne.s32.totalorder %s72, %s86
      %p88 = scmp.eq.s32.totalorder %s34, 0
      %p89 = por %p87, %p88
      %s91 = sadd.s32 %s90, 1
      %p94 = scmp.eq.s32.totalorder %s28, 3
      %p95 = scmp.ne.s32.totalorder %s90, %s92
      %p96 = scmp.eq.s32.totalorder %s28, 0
      %p97 = por %p95, %p96
      %p98 = scmp.ne.s32.totalorder %s90, %s92
      %p99 = scmp.eq.s32.totalorder %s33, 3
      %p100 = por %p98, %p99
      %p101 = scmp.ne.s32.totalorder %s92, %s93
      %p102 = scmp.eq.s32.totalorder %s33, 0
      %p103 = por %p101, %p102
      %p104 = scmp.ne.s32.totalorder %s92, %s93
      %p105 = scmp.eq.s32.totalorder %s34, 3
      %p106 = por %p104, %p105
      %p108 = scmp.ne.s32.totalorder %s93, %s107
      %p109 = scmp.eq.s32.totalorder %s34, 0
      %p110 = por %p108, %p109
      %s111 = ssub.s32 %s35, %s47
      %s112 = ssub.s32 %s36, %s43
      %s113 = sor.u32 %s111, %s112
      %p114 = scmp.eq.s32.totalorder %s113, 0
      %s116 = sadd.s32 %s115, 1
      %s117 = scalar_select %p114, %s115, %s116
      %p120 = pneg %p114
      %p121 = scmp.eq.s32.totalorder %s28, 3
      %p122 = por %p120, %p121
      %p123 = scmp.ne.s32.totalorder %s115, %s118
      %p124 = scmp.eq.s32.totalorder %s28, 0
      %p125 = por %p123, %p124
      %p126 = scmp.ne.s32.totalorder %s115, %s118
      %p127 = scmp.eq.s32.totalorder %s33, 3
      %p128 = por %p126, %p127
      %p129 = scmp.ne.s32.totalorder %s118, %s119
      %p130 = scmp.eq.s32.totalorder %s33, 0
      %p131 = por %p129, %p130
      %p132 = scmp.ne.s32.totalorder %s118, %s119
      %p133 = scmp.eq.s32.totalorder %s34, 3
      %p134 = por %p132, %p133
      %p136 = scmp.ne.s32.totalorder %s119, %s135
      %p137 = scmp.eq.s32.totalorder %s34, 0
      %p138 = por %p136, %p137
      %s139 = ssub.s32 %s35, %s47
      %s140 = ssub.s32 %s36, %s43
      %s141 = sor.u32 %s139, %s140
      %p142 = scmp.eq.s32.totalorder %s141, 0
      %s144 = sadd.s32 %s143, 1
      %s145 = scalar_select %p142, %s143, %s144
      %p148 = pneg %p142
      %p149 = scmp.eq.s32.totalorder %s28, 3
      %p150 = por %p148, %p149
      %p151 = scmp.ne.s32.totalorder %s143, %s146
      %p152 = scmp.eq.s32.totalorder %s28, 0
      %p153 = por %p151, %p152
      %p154 = scmp.ne.s32.totalorder %s143, %s146
      %p155 = scmp.eq.s32.totalorder %s33, 3
      %p156 = por %p154, %p155
      %p157 = scmp.ne.s32.totalorder %s146, %s147
      %p158 = scmp.eq.s32.totalorder %s33, 0
      %p159 = por %p157, %p158
      %p160 = scmp.ne.s32.totalorder %s146, %s147
      %p161 = scmp.eq.s32.totalorder %s34, 3
      %p162 = por %p160, %p161
      %p164 = scmp.ne.s32.totalorder %s147, %s163
      %p165 = scmp.eq.s32.totalorder %s34, 0
      %p166 = por %p164, %p165
      %s167 = ssub.s32 %s35, %s47
      %s168 = ssub.s32 %s36, %s43
      %s169 = sor.u32 %s167, %s168
      %p170 = scmp.eq.s32.totalorder %s169, 0
      %s172 = sadd.s32 %s171, 1
      %s173 = scalar_select %p170, %s171, %s172
      %p176 = pneg %p170
      %p177 = scmp.eq.s32.totalorder %s28, 3
      %p178 = por %p176, %p177
      %p179 = scmp.ne.s32.totalorder %s171, %s174
      %p180 = scmp.eq.s32.totalorder %s28, 0
      %p181 = por %p179, %p180
      %p182 = scmp.ne.s32.totalorder %s171, %s174
      %p183 = scmp.eq.s32.totalorder %s33, 3
      %p184 = por %p182, %p183
      %p185 = scmp.ne.s32.totalorder %s174, %s175
      %p186 = scmp.eq.s32.totalorder %s33, 0
      %p187 = por %p185, %p186
      %p188 = scmp.ne.s32.totalorder %s174, %s175
      %p189 = scmp.eq.s32.totalorder %s34, 3
      %p190 = por %p188, %p189
      %p192 = scmp.ne.s32.totalorder %s175, %s191
      %p193 = scmp.eq.s32.totalorder %s34, 0
      %p194 = por %p192, %p193
      %s195 = ssub.s32 %s35, %s47
      %s196 = ssub.s32 %s36, %s43
      %s197 = sor.u32 %s195, %s196
      %p198 = scmp.eq.s32.totalorder %s197, 0
      %s200 = sadd.s32 %s199, 1
      %s201 = scalar_select %p198, %s199, %s200
      %p204 = pneg %p198
      %p205 = scmp.eq.s32.totalorder %s28, 3
      %p206 = por %p204, %p205
      %p207 = scmp.ne.s32.totalorder %s199, %s202
      %p208 = scmp.eq.s32.totalorder %s28, 0
      %p209 = por %p207, %p208
      %p210 = scmp.ne.s32.totalorder %s199, %s202
      %p211 = scmp.eq.s32.totalorder %s33, 3
      %p212 = por %p210, %p211
      %p213 = scmp.ne.s32.totalorder %s202, %s203
      %p214 = scmp.eq.s32.totalorder %s33, 0
      %p215 = por %p213, %p214
      %p216 = scmp.ne.s32.totalorder %s202, %s203
      %p217 = scmp.eq.s32.totalorder %s34, 3
      %p218 = por %p216, %p217
      %p220 = scmp.ne.s32.totalorder %s203, %s219
      %p221 = scmp.eq.s32.totalorder %s34, 0
      %p222 = por %p220, %p221
      %s223 = ssub.s32 %s35, %s47
      %s224 = ssub.s32 %s36, %s43
      %s225 = sor.u32 %s223, %s224
      %p226 = scmp.eq.s32.totalorder %s225, 0
      %s228 = sadd.s32 %s227, 1
      %s229 = scalar_select %p226, %s227, %s228
      %p232 = pneg %p226
      %p233 = scmp.eq.s32.totalorder %s28, 3
      %p234 = por %p232, %p233
      %p235 = scmp.ne.s32.totalorder %s227, %s230
      %p236 = scmp.eq.s32.totalorder %s28, 0
      %p237 = por %p235, %p236
      %p238 = scmp.ne.s32.totalorder %s227, %s230
      %p239 = scmp.eq.s32.totalorder %s33, 3
      %p240 = por %p238, %p239
      %p241 = scmp.ne.s32.totalorder %s230, %s231
      %p242 = scmp.eq.s32.totalorder %s33, 0
      %p243 = por %p241, %p242
      %p244 = scmp.ne.s32.totalorder %s230, %s231
      %p245 = scmp.eq.s32.totalorder %s34, 3
      %p246 = por %p244, %p245
      %p248 = scmp.ne.s32.totalorder %s231, %s247
      %p249 = scmp.eq.s32.totalorder %s34, 0
      %p250 = por %p248, %p249
      %s251 = ssub.s32 %s35, %s47
      %s252 = ssub.s32 %s36, %s43
      %s253 = sor.u32 %s251, %s252
      %p254 = scmp.eq.s32.totalorder %s253, 0
      %s256 = sadd.s32 %s255, 1
      %s257 = scalar_select %p254, %s255, %s256
      %p260 = pneg %p254
      %p261 = scmp.eq.s32.totalorder %s28, 3
      %p262 = por %p260, %p261
      %p263 = scmp.ne.s32.totalorder %s255, %s258
      %p264 = scmp.eq.s32.totalorder %s28, 0
      %p265 = por %p263, %p264
      %p266 = scmp.ne.s32.totalorder %s255, %s258
      %p267 = scmp.eq.s32.totalorder %s33, 3
      %p268 = por %p266, %p267
      %p269 = scmp.ne.s32.totalorder %s258, %s259
      %p270 = scmp.eq.s32.totalorder %s33, 0
      %p271 = por %p269, %p270
      %p272 = scmp.ne.s32.totalorder %s258, %s259
      %p273 = scmp.eq.s32.totalorder %s34, 3
      %p274 = por %p272, %p273
      %p276 = scmp.ne.s32.totalorder %s259, %s275
      %p277 = scmp.eq.s32.totalorder %s34, 0
      %p278 = por %p276, %p277
      %s279 = ssub.s32 %s35, %s47
      %s280 = ssub.s32 %s36, %s43
      %s281 = sor.u32 %s279, %s280
      %p282 = scmp.eq.s32.totalorder %s281, 0
      %s284 = sadd.s32 %s283, 1
      %s285 = scalar_select %p282, %s283, %s284
      %p288 = pneg %p282
      %p289 = scmp.eq.s32.totalorder %s28, 3
      %p290 = por %p288, %p289
      %p291 = scmp.ne.s32.totalorder %s283, %s286
      %p292 = scmp.eq.s32.totalorder %s28, 0
      %p293 = por %p291, %p292
      %p294 = scmp.ne.s32.totalorder %s283, %s286
      %p295 = scmp.eq.s32.totalorder %s33, 3
      %p296 = por %p294, %p295
      %p297 = scmp.ne.s32.totalorder %s286, %s287
      %p298 = scmp.eq.s32.totalorder %s33, 0
      %p299 = por %p297, %p298
      %p300 = scmp.ne.s32.totalorder %s286, %s287
      %p301 = scmp.eq.s32.totalorder %s34, 3
      %p302 = por %p300, %p301
      %p304 = scmp.ne.s32.totalorder %s287, %s303
      %p305 = scmp.eq.s32.totalorder %s34, 0
      %p306 = por %p304, %p305
      %s307 = ssub.s32 %s35, %s47
      %s308 = ssub.s32 %s36, %s43
      %s309 = sor.u32 %s307, %s308
      %p310 = scmp.eq.s32.totalorder %s309, 0
      %s312 = sadd.s32 %s311, 1
      %s313 = scalar_select %p310, %s311, %s312
      %p316 = pneg %p310
      %p317 = scmp.eq.s32.totalorder %s28, 3
      %p318 = por %p316, %p317
      %p319 = scmp.ne.s32.totalorder %s311, %s314
      %p320 = scmp.eq.s32.totalorder %s28, 0
      %p321 = por %p319, %p320
      %p322 = scmp.ne.s32.totalorder %s311, %s314
      %p323 = scmp.eq.s32.totalorder %s33, 3
      %p324 = por %p322, %p323
      %p325 = scmp.ne.s32.totalorder %s314, %s315
      %p326 = scmp.eq.s32.totalorder %s33, 0
      %p327 = por %p325, %p326
      %p328 = scmp.ne.s32.totalorder %s314, %s315
      %p329 = scmp.eq.s32.totalorder %s34, 3
      %p330 = por %p328, %p329
      %p332 = scmp.ne.s32.totalorder %s315, %s331
      %p333 = scmp.eq.s32.totalorder %s34, 0
      %p334 = por %p332, %p333
      %s335 = ssub.s32 %s35, %s47
      %s336 = ssub.s32 %s36, %s43
      %s337 = sor.u32 %s335, %s336
      %p338 = scmp.eq.s32.totalorder %s337, 0
      %s340 = sadd.s32 %s339, 1
      %s341 = scalar_select %p338, %s339, %s340
      %p344 = pneg %p338
      %p345 = scmp.eq.s32.totalorder %s28, 3
      %p346 = por %p344, %p345
      %p347 = scmp.ne.s32.totalorder %s339, %s342
      %p348 = scmp.eq.s32.totalorder %s28, 0
      %p349 = por %p347, %p348
      %p350 = scmp.ne.s32.totalorder %s339, %s342
      %p351 = scmp.eq.s32.totalorder %s33, 3
      %p352 = por %p350, %p351
      %p353 = scmp.ne.s32.totalorder %s342, %s343
      %p354 = scmp.eq.s32.totalorder %s33, 0
      %p355 = por %p353, %p354
      %p356 = scmp.ne.s32.totalorder %s342, %s343
      %p357 = scmp.eq.s32.totalorder %s34, 3
      %p358 = por %p356, %p357
      %p360 = scmp.ne.s32.totalorder %s343, %s359
      %p361 = scmp.eq.s32.totalorder %s34, 0
      %p362 = por %p360, %p361
      %s363 = ssub.s32 %s35, %s47
      %s364 = ssub.s32 %s36, %s43
      %s365 = sor.u32 %s363, %s364
      %p366 = scmp.eq.s32.totalorder %s365, 0
      %s368 = sadd.s32 %s367, 1
      %s369 = scalar_select %p366, %s367, %s368
      %p372 = pneg %p366
      %p373 = scmp.eq.s32.totalorder %s28, 3
      %p374 = por %p372, %p373
      %p375 = scmp.ne.s32.totalorder %s367, %s370
      %p376 = scmp.eq.s32.totalorder %s28, 0
      %p377 = por %p375, %p376
      %p378 = scmp.ne.s32.totalorder %s367, %s370
      %p379 = scmp.eq.s32.totalorder %s33, 3
      %p380 = por %p378, %p379
      %p381 = scmp.ne.s32.totalorder %s370, %s371
      %p382 = scmp.eq.s32.totalorder %s33, 0
      %p383 = por %p381, %p382
      %p384 = scmp.ne.s32.totalorder %s370, %s371
      %p385 = scmp.eq.s32.totalorder %s34, 3
      %p386 = por %p384, %p385
      %p388 = scmp.ne.s32.totalorder %s371, %s387
      %p389 = scmp.eq.s32.totalorder %s34, 0
      %p390 = por %p388, %p389
      %s391 = ssub.s32 %s35, %s47
      %s392 = ssub.s32 %s36, %s43
      %s393 = sor.u32 %s391, %s392
      %p394 = scmp.eq.s32.totalorder %s393, 0
      %s396 = sadd.s32 %s395, 1
      %s397 = scalar_select %p394, %s395, %s396
      %p400 = pneg %p394
      %p401 = scmp.eq.s32.totalorder %s28, 3
      %p402 = por %p400, %p401
      %p403 = scmp.ne.s32.totalorder %s395, %s398
      %p404 = scmp.eq.s32.totalorder %s28, 0
      %p405 = por %p403, %p404
      %p406 = scmp.ne.s32.totalorder %s395, %s398
      %p407 = scmp.eq.s32.totalorder %s33, 3
      %p408 = por %p406, %p407
      %p409 = scmp.ne.s32.totalorder %s398, %s399
      %p410 = scmp.eq.s32.totalorder %s33, 0
      %p411 = por %p409, %p410
      %p412 = scmp.ne.s32.totalorder %s398, %s399
      %p413 = scmp.eq.s32.totalorder %s34, 3
      %p414 = por %p412, %p413
      %p416 = scmp.ne.s32.totalorder %s399, %s415
      %p417 = scmp.eq.s32.totalorder %s34, 0
      %p418 = por %p416, %p417
      %s419 = ssub.s32 %s35, %s47
      %s420 = ssub.s32 %s36, %s43
      %s421 = sor.u32 %s419, %s420
      %p422 = scmp.eq.s32.totalorder %s421, 0
      %s424 = sadd.s32 %s423, 1
      %s425 = scalar_select %p422, %s423, %s424
      %p428 = pneg %p422
      %p429 = scmp.eq.s32.totalorder %s28, 3
      %p430 = por %p428, %p429
      %p431 = scmp.ne.s32.totalorder %s423, %s426
      %p432 = scmp.eq.s32.totalorder %s28, 0
      %p433 = por %p431, %p432
      %p434 = scmp.ne.s32.totalorder %s423, %s426
      %p435 = scmp.eq.s32.totalorder %s33, 3
      %p436 = por %p434, %p435
      %p437 = scmp.ne.s32.totalorder %s426, %s427
      %p438 = scmp.eq.s32.totalorder %s33, 0
      %p439 = por %p437, %p438
      %p440 = scmp.ne.s32.totalorder %s426, %s427
      %p441 = scmp.eq.s32.totalorder %s34, 3
      %p442 = por %p440, %p441
      %p444 = scmp.ne.s32.totalorder %s427, %s443
      %p445 = scmp.eq.s32.totalorder %s34, 0
      %p446 = por %p444, %p445
      %s447 = ssub.s32 %s35, %s47
      %s448 = ssub.s32 %s36, %s43
      %s449 = sor.u32 %s447, %s448
      %p450 = scmp.eq.s32.totalorder %s449, 0
      %s452 = sadd.s32 %s451, 1
      %s453 = scalar_select %p450, %s451, %s452
      %p456 = pneg %p450
      %p457 = scmp.eq.s32.totalorder %s28, 3
      %p458 = por %p456, %p457
      %p459 = scmp.ne.s32.totalorder %s451, %s454
      %p460 = scmp.eq.s32.totalorder %s28, 0
      %p461 = por %p459, %p460
      %p462 = scmp.ne.s32.totalorder %s451, %s454
      %p463 = scmp.eq.s32.totalorder %s33, 3
      %p464 = por %p462, %p463
      %p465 = scmp.ne.s32.totalorder %s454, %s455
      %p466 = scmp.eq.s32.totalorder %s33, 0
      %p467 = por %p465, %p466
      %p468 = scmp.ne.s32.totalorder %s454, %s455
      %p469 = scmp.eq.s32.totalorder %s34, 3
      %p470 = por %p468, %p469
      %p472 = scmp.ne.s32.totalorder %s455, %s471
      %p473 = scmp.eq.s32.totalorder %s34, 0
      %p474 = por %p472, %p473
      %s475 = ssub.s32 %s35, %s47
      %s476 = ssub.s32 %s36, %s43
      %s477 = sor.u32 %s475, %s476
      %p478 = scmp.eq.s32.totalorder %s477, 0
      %s480 = sadd.s32 %s479, 1
      %s481 = scalar_select %p478, %s479, %s480
      %p484 = pneg %p478
      %p485 = scmp.eq.s32.totalorder %s28, 3
      %p486 = por %p484, %p485
      %p487 = scmp.ne.s32.totalorder %s479, %s482
      %p488 = scmp.eq.s32.totalorder %s28, 0
      %p489 = por %p487, %p488
      %p490 = scmp.ne.s32.totalorder %s479, %s482
      %p491 = scmp.eq.s32.totalorder %s33, 3
      %p492 = por %p490, %p491
      %p493 = scmp.ne.s32.totalorder %s482, %s483
      %p494 = scmp.eq.s32.totalorder %s33, 0
      %p495 = por %p493, %p494
      %p496 = scmp.ne.s32.totalorder %s482, %s483
      %p497 = scmp.eq.s32.totalorder %s34, 3
      %p498 = por %p496, %p497
      %p500 = scmp.ne.s32.totalorder %s483, %s499
      %p501 = scmp.eq.s32.totalorder %s34, 0
      %p502 = por %p500, %p501
      %s503 = ssub.s32 %s35, %s47
      %s504 = ssub.s32 %s36, %s43
      %s505 = sor.u32 %s503, %s504
      %p506 = scmp.eq.s32.totalorder %s505, 0
      %s508 = sadd.s32 %s507, 1
      %s509 = scalar_select %p506, %s507, %s508
      %p512 = pneg %p506
      %p513 = scmp.eq.s32.totalorder %s28, 3
      %p514 = por %p512, %p513
      %p515 = scmp.ne.s32.totalorder %s507, %s510
      %p516 = scmp.eq.s32.totalorder %s28, 0
      %p517 = por %p515, %p516
      %p518 = scmp.ne.s32.totalorder %s507, %s510
      %p519 = scmp.eq.s32.totalorder %s33, 3
      %p520 = por %p518, %p519
      %p521 = scmp.ne.s32.totalorder %s510, %s511
      %p522 = scmp.eq.s32.totalorder %s33, 0
      %p523 = por %p521, %p522
      %p524 = scmp.ne.s32.totalorder %s510, %s511
      %p525 = scmp.eq.s32.totalorder %s34, 3
      %p526 = por %p524, %p525
      %p528 = scmp.ne.s32.totalorder %s511, %s527
      %p529 = scmp.eq.s32.totalorder %s34, 0
      %p530 = por %p528, %p529
      %s531 = ssub.s32 %s35, %s47
      %s532 = ssub.s32 %s36, %s43
      %s533 = sor.u32 %s531, %s532
      %p534 = scmp.eq.s32.totalorder %s533, 0
      %s536 = sadd.s32 %s535, 1
      %s537 = scalar_select %p534, %s535, %s536
      %p540 = pneg %p534
      %p541 = scmp.eq.s32.totalorder %s28, 3
      %p542 = por %p540, %p541
      %p543 = scmp.ne.s32.totalorder %s535, %s538
      %p544 = scmp.eq.s32.totalorder %s28, 0
      %p545 = por %p543, %p544
      %p546 = scmp.ne.s32.totalorder %s535, %s538
      %p547 = scmp.eq.s32.totalorder %s33, 3
      %p548 = por %p546, %p547
      %p549 = scmp.ne.s32.totalorder %s538, %s539
      %p550 = scmp.eq.s32.totalorder %s33, 0
      %p551 = por %p549, %p550
      %p552 = scmp.ne.s32.totalorder %s538, %s539
      %p553 = scmp.eq.s32.totalorder %s34, 3
      %p554 = por %p552, %p553
      %p556 = scmp.ne.s32.totalorder %s539, %s555
      %p557 = scmp.eq.s32.totalorder %s34, 0
      %p558 = por %p556, %p557
      %s559 = ssub.s32 %s35, %s47
      %p560 = scmp.eq.s32.totalorder %s559, 0
      %s562 = sadd.s32 %s561, 1
      %s563 = scalar_select %p560, %s561, %s562
      %p566 = pneg %p560
      %p567 = scmp.eq.s32.totalorder %s28, 3
      %p568 = por %p566, %p567
      %p569 = scmp.ne.s32.totalorder %s561, %s564
      %p570 = scmp.eq.s32.totalorder %s28, 0
      %p571 = por %p569, %p570
      %p572 = scmp.ne.s32.totalorder %s561, %s564
      %p573 = scmp.eq.s32.totalorder %s33, 3
      %p574 = por %p572, %p573
      %p575 = scmp.ne.s32.totalorder %s564, %s565
      %p576 = scmp.eq.s32.totalorder %s33, 0
      %p577 = por %p575, %p576
      %p578 = scmp.ne.s32.totalorder %s564, %s565
      %p579 = scmp.eq.s32.totalorder %s34, 3
      %p580 = por %p578, %p579
      %p582 = scmp.ne.s32.totalorder %s565, %s581
      %p583 = scmp.eq.s32.totalorder %s34, 0
      %p584 = por %p582, %p583
      %s585 = ssub.s32 %s35, %s47
      %p586 = scmp.eq.s32.totalorder %s585, 0
      %s588 = sadd.s32 %s587, 1
      %s589 = scalar_select %p586, %s587, %s588
      %p592 = pneg %p586
      %p593 = scmp.eq.s32.totalorder %s28, 3
      %p594 = por %p592, %p593
      %p595 = scmp.ne.s32.totalorder %s587, %s590
      %p596 = scmp.eq.s32.totalorder %s28, 0
      %p597 = por %p595, %p596
      %p598 = scmp.ne.s32.totalorder %s587, %s590
      %p599 = scmp.eq.s32.totalorder %s33, 3
      %p600 = por %p598, %p599
      %p601 = scmp.ne.s32.totalorder %s590, %s591
      %p602 = scmp.eq.s32.totalorder %s33, 0
      %p603 = por %p601, %p602
      %p604 = scmp.ne.s32.totalorder %s590, %s591
      %p605 = scmp.eq.s32.totalorder %s34, 3
      %p606 = por %p604, %p605
      %p608 = scmp.ne.s32.totalorder %s591, %s607
      %p609 = scmp.eq.s32.totalorder %s34, 0
      %p610 = por %p608, %p609
      %s612 = sadd.s32 %s611, 1
      %p615 = scmp.eq.s32.totalorder %s28, 3
      %p616 = scmp.ne.s32.totalorder %s611, %s613
      %p617 = scmp.eq.s32.totalorder %s28, 0
      %p618 = por %p616, %p617
      %p619 = scmp.ne.s32.totalorder %s611, %s613
      %p620 = scmp.eq.s32.totalorder %s33, 3
      %p621 = por %p619, %p620
      %p622 = scmp.ne.s32.totalorder %s613, %s614
      %p623 = scmp.eq.s32.totalorder %s33, 0
      %p624 = por %p622, %p623
      %p625 = scmp.ne.s32.totalorder %s613, %s614
      %p626 = scmp.eq.s32.totalorder %s34, 3
      %p627 = por %p625, %p626
      %p629 = scmp.ne.s32.totalorder %s614, %s628
      %p630 = scmp.eq.s32.totalorder %s34, 0
      %p631 = por %p629, %p630
      %p632 = scmp.le.s32.totalorder 1, %s28
      %p633 = scmp.lt.s32.totalorder %s28, 5
      %p634 = pnand %p632, %p633
      %p635 = pneg %p634
      // Predicated region
      $region9: #{tpu_custom_call.1} parent=5 // pred_check
        _
      $region10: #{tpu_custom_call.1} parent=5 // pred_check_branch
        %637 = sbr.rel (%p634) target = $region12
      $region11: #{tpu_custom_call.1} parent=5 // pred_region
        %s638 = ssub.s32 %s28, 1
        // Predicated region
        $region13: #{tpu_custom_call.1} parent=11 // pred_check
          %p639 = pneg %p61
        $region14: #{tpu_custom_call.1} parent=11 // pred_check_branch
          %641 = sbr.rel (%p639) target = $region16
        $region15: #{tpu_custom_call.1} parent=11 // pred_region
          _
        $region16: #{tpu_custom_call.1} parent=11 // pred_fallthru
          _
        // Predicated region
        $region17: #{tpu_custom_call.1} parent=11 // pred_check
          %p642 = pneg %p82
        $region18: #{tpu_custom_call.1} parent=11 // pred_check_branch
          %644 = sbr.rel (%p642) target = $region20
        $region19: #{tpu_custom_call.1} parent=11 // pred_region
          _
        $region20: #{tpu_custom_call.1} parent=11 // pred_fallthru
          _
        // Predicated region
        $region21: #{tpu_custom_call.1} parent=11 // pred_check
          %p645 = pneg %p103
        $region22: #{tpu_custom_call.1} parent=11 // pred_check_branch
          %647 = sbr.rel (%p645) target = $region24
        $region23: #{tpu_custom_call.1} parent=11 // pred_region
          _
        $region24: #{tpu_custom_call.1} parent=11 // pred_fallthru
          _
      $region12: #{tpu_custom_call.1} parent=5 // pred_fallthru
        _
      %p648 = scmp.lt.s32.totalorder %s28, 4
      // Predicated region
      $region25: #{tpu_custom_call.1} parent=5 // pred_check
        %p649 = pneg %p648
      $region26: #{tpu_custom_call.1} parent=5 // pred_check_branch
        %651 = sbr.rel (%p649) target = $region28
      $region27: #{tpu_custom_call.1} parent=5 // pred_region
        // Predicated region
        $region29: #{tpu_custom_call.1} parent=27 // pred_check
          %p652 = pneg %p125
        $region30: #{tpu_custom_call.1} parent=27 // pred_check_branch
          %654 = sbr.rel (%p652) target = $region32
        $region31: #{tpu_custom_call.1} parent=27 // pred_region
          %p655 = scmp.lt.s32.totalorder %s35, 1
          %s656 = scalar_select %p655, %s35, 1
          %p657 = scmp.lt.s32.totalorder %s36, 1
          %s658 = scalar_select %p657, %s36, 1
          %s659 = smul.addr %s658, 4
          %s660 = smul.addr %s656, 8
          %s661 = sadd.s32 %s659, %s660
          %s662 = smul.addr %s661, 4
          %s663 = scalar_lea.vmem %s3, %s662
        $region32: #{tpu_custom_call.1} parent=27 // pred_fallthru
          _
        // Predicated region
        $region33: #{tpu_custom_call.1} parent=27 // pred_check
          %p664 = pneg %p153
        $region34: #{tpu_custom_call.1} parent=27 // pred_check_branch
          %666 = sbr.rel (%p664) target = $region36
        $region35: #{tpu_custom_call.1} parent=27 // pred_region
          %p667 = scmp.lt.s32.totalorder %s35, 1
          %s668 = scalar_select %p667, %s35, 1
          %p669 = scmp.lt.s32.totalorder %s36, 1
          %s670 = scalar_select %p669, %s36, 1
          %s671 = smul.addr %s668, 2
          %s672 = sadd.s32 %s670, %s671
          %s673 = scalar_lea.vmem %s4, %s672
        $region36: #{tpu_custom_call.1} parent=27 // pred_fallthru
          _
        // Predicated region
        $region37: #{tpu_custom_call.1} parent=27 // pred_check
          %p674 = pneg %p181
        $region38: #{tpu_custom_call.1} parent=27 // pred_check_branch
          %676 = sbr.rel (%p674) target = $region40
        $region39: #{tpu_custom_call.1} parent=27 // pred_region
          %p677 = scmp.lt.s32.totalorder %s35, 1
          %s678 = scalar_select %p677, %s35, 1
          %p679 = scmp.lt.s32.totalorder %s36, 1
          %s680 = scalar_select %p679, %s36, 1
          %s681 = smul.addr %s680, 4
          %s682 = smul.addr %s678, 8
          %s683 = sadd.s32 %s681, %s682
          %s684 = smul.addr %s683, 4
          %s685 = scalar_lea.vmem %s5, %s684
        $region40: #{tpu_custom_call.1} parent=27 // pred_fallthru
          _
        // Predicated region
        $region41: #{tpu_custom_call.1} parent=27 // pred_check
          %p686 = pneg %p209
        $region42: #{tpu_custom_call.1} parent=27 // pred_check_branch
          %688 = sbr.rel (%p686) target = $region44
        $region43: #{tpu_custom_call.1} parent=27 // pred_region
          %p689 = scmp.lt.s32.totalorder %s35, 1
          %s690 = scalar_select %p689, %s35, 1
          %p691 = scmp.lt.s32.totalorder %s36, 1
          %s692 = scalar_select %p691, %s36, 1
          %s693 = smul.addr %s690, 2
          %s694 = sadd.s32 %s692, %s693
          %s695 = scalar_lea.vmem %s6, %s694
        $region44: #{tpu_custom_call.1} parent=27 // pred_fallthru
          _
        // Predicated region
        $region45: #{tpu_custom_call.1} parent=27 // pred_check
          %p696 = pneg %p237
        $region46: #{tpu_custom_call.1} parent=27 // pred_check_branch
          %698 = sbr.rel (%p696) target = $region48
        $region47: #{tpu_custom_call.1} parent=27 // pred_region
          %p699 = scmp.lt.s32.totalorder %s35, 1
          %s700 = scalar_select %p699, %s35, 1
          %p701 = scmp.lt.s32.totalorder %s36, 1
          %s702 = scalar_select %p701, %s36, 1
          %s703 = smul.addr %s702, 4
          %s704 = smul.addr %s700, 8
          %s705 = sadd.s32 %s703, %s704
          %s706 = smul.addr %s705, 4
          %s707 = scalar_lea.vmem %s7, %s706
        $region48: #{tpu_custom_call.1} parent=27 // pred_fallthru
          _
        // Predicated region
        $region49: #{tpu_custom_call.1} parent=27 // pred_check
          %p708 = pneg %p265
        $region50: #{tpu_custom_call.1} parent=27 // pred_check_branch
          %710 = sbr.rel (%p708) target = $region52
        $region51: #{tpu_custom_call.1} parent=27 // pred_region
          %p711 = scmp.lt.s32.totalorder %s35, 1
          %s712 = scalar_select %p711, %s35, 1
          %p713 = scmp.lt.s32.totalorder %s36, 1
          %s714 = scalar_select %p713, %s36, 1
          %s715 = smul.addr %s712, 2
          %s716 = sadd.s32 %s714, %s715
          %s717 = scalar_lea.vmem %s8, %s716
        $region52: #{tpu_custom_call.1} parent=27 // pred_fallthru
          _
        // Predicated region
        $region53: #{tpu_custom_call.1} parent=27 // pred_check
          %p718 = pneg %p293
        $region54: #{tpu_custom_call.1} parent=27 // pred_check_branch
          %720 = sbr.rel (%p718) target = $region56
        $region55: #{tpu_custom_call.1} parent=27 // pred_region
          %p721 = scmp.lt.s32.totalorder %s35, 1
          %s722 = scalar_select %p721, %s35, 1
          %p723 = scmp.lt.s32.totalorder %s36, 1
          %s724 = scalar_select %p723, %s36, 1
          %s725 = smul.addr %s724, 4
          %s726 = smul.addr %s722, 8
          %s727 = sadd.s32 %s725, %s726
          %s728 = smul.addr %s727, 4
          %s729 = scalar_lea.vmem %s9, %s728
        $region56: #{tpu_custom_call.1} parent=27 // pred_fallthru
          _
        // Predicated region
        $region57: #{tpu_custom_call.1} parent=27 // pred_check
          %p730 = pneg %p321
        $region58: #{tpu_custom_call.1} parent=27 // pred_check_branch
          %732 = sbr.rel (%p730) target = $region60
        $region59: #{tpu_custom_call.1} parent=27 // pred_region
          %p733 = scmp.lt.s32.totalorder %s35, 1
          %s734 = scalar_select %p733, %s35, 1
          %p735 = scmp.lt.s32.totalorder %s36, 1
          %s736 = scalar_select %p735, %s36, 1
          %s737 = smul.addr %s734, 2
          %s738 = sadd.s32 %s736, %s737
          %s739 = scalar_lea.vmem %s10, %s738
        $region60: #{tpu_custom_call.1} parent=27 // pred_fallthru
          _
        // Predicated region
        $region61: #{tpu_custom_call.1} parent=27 // pred_check
          %p740 = pneg %p349
        $region62: #{tpu_custom_call.1} parent=27 // pred_check_branch
          %742 = sbr.rel (%p740) target = $region64
        $region63: #{tpu_custom_call.1} parent=27 // pred_region
          %p743 = scmp.lt.s32.totalorder %s35, 1
          %s744 = scalar_select %p743, %s35, 1
          %p745 = scmp.lt.s32.totalorder %s36, 1
          %s746 = scalar_select %p745, %s36, 1
          %s747 = smul.addr %s746, 4
          %s748 = smul.addr %s744, 8
          %s749 = sadd.s32 %s747, %s748
          %s750 = smul.addr %s749, 4
          %s751 = scalar_lea.vmem %s11, %s750
        $region64: #{tpu_custom_call.1} parent=27 // pred_fallthru
          _
        // Predicated region
        $region65: #{tpu_custom_call.1} parent=27 // pred_check
          %p752 = pneg %p377
        $region66: #{tpu_custom_call.1} parent=27 // pred_check_branch
          %754 = sbr.rel (%p752) target = $region68
        $region67: #{tpu_custom_call.1} parent=27 // pred_region
          %p755 = scmp.lt.s32.totalorder %s35, 1
          %s756 = scalar_select %p755, %s35, 1
          %p757 = scmp.lt.s32.totalorder %s36, 1
          %s758 = scalar_select %p757, %s36, 1
          %s759 = smul.addr %s756, 2
          %s760 = sadd.s32 %s758, %s759
          %s761 = scalar_lea.vmem %s12, %s760
        $region68: #{tpu_custom_call.1} parent=27 // pred_fallthru
          _
        // Predicated region
        $region69: #{tpu_custom_call.1} parent=27 // pred_check
          %p762 = pneg %p405
        $region70: #{tpu_custom_call.1} parent=27 // pred_check_branch
          %764 = sbr.rel (%p762) target = $region72
        $region71: #{tpu_custom_call.1} parent=27 // pred_region
          %p765 = scmp.lt.s32.totalorder %s35, 1
          %s766 = scalar_select %p765, %s35, 1
          %p767 = scmp.lt.s32.totalorder %s36, 1
          %s768 = scalar_select %p767, %s36, 1
          %s769 = smul.addr %s768, 8
          %s770 = smul.addr %s766, 16
          %s771 = sadd.s32 %s769, %s770
          %s772 = smul.addr %s771, 4
          %s773 = scalar_lea.vmem %s13, %s772
        $region72: #{tpu_custom_call.1} parent=27 // pred_fallthru
          _
        // Predicated region
        $region73: #{tpu_custom_call.1} parent=27 // pred_check
          %p774 = pneg %p433
        $region74: #{tpu_custom_call.1} parent=27 // pred_check_branch
          %776 = sbr.rel (%p774) target = $region76
        $region75: #{tpu_custom_call.1} parent=27 // pred_region
          %p777 = scmp.lt.s32.totalorder %s35, 1
          %s778 = scalar_select %p777, %s35, 1
          %p779 = scmp.lt.s32.totalorder %s36, 1
          %s780 = scalar_select %p779, %s36, 1
          %s781 = smul.addr %s778, 2
          %s782 = sadd.s32 %s780, %s781
          %s783 = scalar_lea.vmem %s14, %s782
        $region76: #{tpu_custom_call.1} parent=27 // pred_fallthru
          _
        // Predicated region
        $region77: #{tpu_custom_call.1} parent=27 // pred_check
          %p784 = pneg %p461
        $region78: #{tpu_custom_call.1} parent=27 // pred_check_branch
          %786 = sbr.rel (%p784) target = $region80
        $region79: #{tpu_custom_call.1} parent=27 // pred_region
          %p787 = scmp.lt.s32.totalorder %s35, 1
          %s788 = scalar_select %p787, %s35, 1
          %p789 = scmp.lt.s32.totalorder %s36, 1
          %s790 = scalar_select %p789, %s36, 1
          %s791 = smul.addr %s788, 2
          %s792 = sadd.s32 %s790, %s791
          %s793 = scalar_lea.vmem %s15, %s792
        $region80: #{tpu_custom_call.1} parent=27 // pred_fallthru
          _
        // Predicated region
        $region81: #{tpu_custom_call.1} parent=27 // pred_check
          %p794 = pneg %p489
        $region82: #{tpu_custom_call.1} parent=27 // pred_check_branch
          %796 = sbr.rel (%p794) target = $region84
        $region83: #{tpu_custom_call.1} parent=27 // pred_region
          %p797 = scmp.lt.s32.totalorder %s35, 1
          %s798 = scalar_select %p797, %s35, 1
          %p799 = scmp.lt.s32.totalorder %s36, 1
          %s800 = scalar_select %p799, %s36, 1
          %s801 = smul.addr %s798, 2
          %s802 = sadd.s32 %s800, %s801
          %s803 = scalar_lea.vmem %s16, %s802
        $region84: #{tpu_custom_call.1} parent=27 // pred_fallthru
          _
        // Predicated region
        $region85: #{tpu_custom_call.1} parent=27 // pred_check
          %p804 = pneg %p517
        $region86: #{tpu_custom_call.1} parent=27 // pred_check_branch
          %806 = sbr.rel (%p804) target = $region88
        $region87: #{tpu_custom_call.1} parent=27 // pred_region
          %p807 = scmp.lt.s32.totalorder %s35, 1
          %s808 = scalar_select %p807, %s35, 1
          %p809 = scmp.lt.s32.totalorder %s36, 1
          %s810 = scalar_select %p809, %s36, 1
          %s811 = smul.addr %s808, 2
          %s812 = sadd.s32 %s810, %s811
          %s813 = scalar_lea.vmem %s17, %s812
        $region88: #{tpu_custom_call.1} parent=27 // pred_fallthru
          _
        // Predicated region
        $region89: #{tpu_custom_call.1} parent=27 // pred_check
          %p814 = pneg %p545
        $region90: #{tpu_custom_call.1} parent=27 // pred_check_branch
          %816 = sbr.rel (%p814) target = $region92
        $region91: #{tpu_custom_call.1} parent=27 // pred_region
          %p817 = scmp.lt.s32.totalorder %s35, 1
          %s818 = scalar_select %p817, %s35, 1
          %p819 = scmp.lt.s32.totalorder %s36, 1
          %s820 = scalar_select %p819, %s36, 1
          %s821 = smul.addr %s818, 2
          %s822 = sadd.s32 %s820, %s821
          %s823 = scalar_lea.vmem %s18, %s822
        $region92: #{tpu_custom_call.1} parent=27 // pred_fallthru
          _
        // Predicated region
        $region93: #{tpu_custom_call.1} parent=27 // pred_check
          %p824 = pneg %p571
        $region94: #{tpu_custom_call.1} parent=27 // pred_check_branch
          %826 = sbr.rel (%p824) target = $region96
        $region95: #{tpu_custom_call.1} parent=27 // pred_region
          %p827 = scmp.lt.s32.totalorder %s35, 1
          %s828 = scalar_select %p827, %s35, 1
          %s829 = smul.addr %s828, 4
          %s830 = smul.addr %s829, 8
          %s831 = scalar_lea.vmem %s19, %s830
        $region96: #{tpu_custom_call.1} parent=27 // pred_fallthru
          _
        // Predicated region
        $region97: #{tpu_custom_call.1} parent=27 // pred_check
          %p832 = pneg %p597
        $region98: #{tpu_custom_call.1} parent=27 // pred_check_branch
          %834 = sbr.rel (%p832) target = $region100
        $region99: #{tpu_custom_call.1} parent=27 // pred_region
          %p835 = scmp.lt.s32.totalorder %s35, 1
          %s836 = scalar_select %p835, %s35, 1
          %s837 = scalar_lea.vmem %s20, %s836
        $region100: #{tpu_custom_call.1} parent=27 // pred_fallthru
          _
      $region28: #{tpu_custom_call.1} parent=5 // pred_fallthru
        _
      %p838 = scmp.le.s32.totalorder 1, %s28
      %p839 = scmp.lt.s32.totalorder %s28, 5
      %p840 = pnand %p838, %p839
      %p841 = pneg %p840
      // Predicated region
      $region101: #{tpu_custom_call.1} parent=5 // pred_check
        _
      $region102: #{tpu_custom_call.1} parent=5 // pred_check_branch
        %843 = sbr.rel (%p840) target = $region104
      $region103: #{tpu_custom_call.1} parent=5 // pred_region
        %s844 = ssub.s32 %s28, 1
        %p845 = pneg %p61
        %p846 = pneg %p58
        %p847 = pneg %p82
        %p848 = pneg %p79
        %p849 = pneg %p103
        %p850 = pneg %p100
        %p851 = scmp.lt.s32.totalorder %s37, 1
        %s852 = scalar_select %p851, %s37, 1
        %p853 = scmp.lt.s32.totalorder %s38, 1
        %s854 = scalar_select %p853, %s38, 1
        %s855 = smul.addr %s854, 4
        %s856 = smul.addr %s852, 8
        %s857 = sadd.s32 %s855, %s856
        %s858 = smul.addr %s857, 4
        %s859 = scalar_lea.vmem %s3, %s858
        %p860 = pneg %p131
        %p861 = pneg %p128
        %p862 = scmp.lt.s32.totalorder %s37, 1
        %s863 = scalar_select %p862, %s37, 1
        %p864 = scmp.lt.s32.totalorder %s38, 1
        %s865 = scalar_select %p864, %s38, 1
        %s866 = smul.addr %s863, 2
        %s867 = sadd.s32 %s865, %s866
        %s868 = scalar_lea.vmem %s4, %s867
        %p869 = pneg %p159
        %p870 = pneg %p156
        %p871 = scmp.lt.s32.totalorder %s37, 1
        %s872 = scalar_select %p871, %s37, 1
        %p873 = scmp.lt.s32.totalorder %s38, 1
        %s874 = scalar_select %p873, %s38, 1
        %s875 = smul.addr %s874, 4
        %s876 = smul.addr %s872, 8
        %s877 = sadd.s32 %s875, %s876
        %s878 = smul.addr %s877, 4
        %s879 = scalar_lea.vmem %s5, %s878
        %p880 = pneg %p187
        %p881 = pneg %p184
        %p882 = scmp.lt.s32.totalorder %s37, 1
        %s883 = scalar_select %p882, %s37, 1
        %p884 = scmp.lt.s32.totalorder %s38, 1
        %s885 = scalar_select %p884, %s38, 1
        %s886 = smul.addr %s883, 2
        %s887 = sadd.s32 %s885, %s886
        %s888 = scalar_lea.vmem %s6, %s887
        %p889 = pneg %p215
        %p890 = pneg %p212
        %p891 = scmp.lt.s32.totalorder %s37, 1
        %s892 = scalar_select %p891, %s37, 1
        %p893 = scmp.lt.s32.totalorder %s38, 1
        %s894 = scalar_select %p893, %s38, 1
        %s895 = smul.addr %s894, 4
        %s896 = smul.addr %s892, 8
        %s897 = sadd.s32 %s895, %s896
        %s898 = smul.addr %s897, 4
        %s899 = scalar_lea.vmem %s7, %s898
        %p900 = pneg %p243
        %p901 = pneg %p240
        %p902 = scmp.lt.s32.totalorder %s37, 1
        %s903 = scalar_select %p902, %s37, 1
        %p904 = scmp.lt.s32.totalorder %s38, 1
        %s905 = scalar_select %p904, %s38, 1
        %s906 = smul.addr %s903, 2
        %s907 = sadd.s32 %s905, %s906
        %s908 = scalar_lea.vmem %s8, %s907
        %p909 = pneg %p271
        %p910 = pneg %p268
        %p911 = scmp.lt.s32.totalorder %s37, 1
        %s912 = scalar_select %p911, %s37, 1
        %p913 = scmp.lt.s32.totalorder %s38, 1
        %s914 = scalar_select %p913, %s38, 1
        %s915 = smul.addr %s914, 4
        %s916 = smul.addr %s912, 8
        %s917 = sadd.s32 %s915, %s916
        %s918 = smul.addr %s917, 4
        %s919 = scalar_lea.vmem %s9, %s918
        %p920 = pneg %p299
        %p921 = pneg %p296
        %p922 = scmp.lt.s32.totalorder %s37, 1
        %s923 = scalar_select %p922, %s37, 1
        %p924 = scmp.lt.s32.totalorder %s38, 1
        %s925 = scalar_select %p924, %s38, 1
        %s926 = smul.addr %s923, 2
        %s927 = sadd.s32 %s925, %s926
        %s928 = scalar_lea.vmem %s10, %s927
        %p929 = pneg %p327
        %p930 = pneg %p324
        %p931 = scmp.lt.s32.totalorder %s37, 1
        %s932 = scalar_select %p931, %s37, 1
        %p933 = scmp.lt.s32.totalorder %s38, 1
        %s934 = scalar_select %p933, %s38, 1
        %s935 = smul.addr %s934, 4
        %s936 = smul.addr %s932, 8
        %s937 = sadd.s32 %s935, %s936
        %s938 = smul.addr %s937, 4
        %s939 = scalar_lea.vmem %s11, %s938
        %p940 = pneg %p355
        %p941 = pneg %p352
        %p942 = scmp.lt.s32.totalorder %s37, 1
        %s943 = scalar_select %p942, %s37, 1
        %p944 = scmp.lt.s32.totalorder %s38, 1
        %s945 = scalar_select %p944, %s38, 1
        %s946 = smul.addr %s943, 2
        %s947 = sadd.s32 %s945, %s946
        %s948 = scalar_lea.vmem %s12, %s947
        %p949 = pneg %p383
        %p950 = pneg %p380
        %p951 = scmp.lt.s32.totalorder %s37, 1
        %s952 = scalar_select %p951, %s37, 1
        %p953 = scmp.lt.s32.totalorder %s38, 1
        %s954 = scalar_select %p953, %s38, 1
        %s955 = smul.addr %s954, 8
        %s956 = smul.addr %s952, 16
        %s957 = sadd.s32 %s955, %s956
        %s958 = smul.addr %s957, 4
        %s959 = scalar_lea.vmem %s13, %s958
        %p960 = pneg %p411
        %p961 = pneg %p408
        %p962 = scmp.lt.s32.totalorder %s37, 1
        %s963 = scalar_select %p962, %s37, 1
        %p964 = scmp.lt.s32.totalorder %s38, 1
        %s965 = scalar_select %p964, %s38, 1
        %s966 = smul.addr %s963, 2
        %s967 = sadd.s32 %s965, %s966
        %s968 = scalar_lea.vmem %s14, %s967
        %p969 = pneg %p439
        %p970 = pneg %p436
        %p971 = scmp.lt.s32.totalorder %s37, 1
        %s972 = scalar_select %p971, %s37, 1
        %p973 = scmp.lt.s32.totalorder %s38, 1
        %s974 = scalar_select %p973, %s38, 1
        %s975 = smul.addr %s972, 2
        %s976 = sadd.s32 %s974, %s975
        %s977 = scalar_lea.vmem %s15, %s976
        %p978 = pneg %p467
        %p979 = pneg %p464
        %p980 = scmp.lt.s32.totalorder %s37, 1
        %s981 = scalar_select %p980, %s37, 1
        %p982 = scmp.lt.s32.totalorder %s38, 1
        %s983 = scalar_select %p982, %s38, 1
        %s984 = smul.addr %s981, 2
        %s985 = sadd.s32 %s983, %s984
        %s986 = scalar_lea.vmem %s16, %s985
        %p987 = pneg %p495
        %p988 = pneg %p492
        %p989 = scmp.lt.s32.totalorder %s37, 1
        %s990 = scalar_select %p989, %s37, 1
        %p991 = scmp.lt.s32.totalorder %s38, 1
        %s992 = scalar_select %p991, %s38, 1
        %s993 = smul.addr %s990, 2
        %s994 = sadd.s32 %s992, %s993
        %s995 = scalar_lea.vmem %s17, %s994
        %p996 = pneg %p523
        %p997 = pneg %p520
        %p998 = scmp.lt.s32.totalorder %s37, 1
        %s999 = scalar_select %p998, %s37, 1
        %p1000 = scmp.lt.s32.totalorder %s38, 1
        %s1001 = scalar_select %p1000, %s38, 1
        %s1002 = smul.addr %s999, 2
        %s1003 = sadd.s32 %s1001, %s1002
        %s1004 = scalar_lea.vmem %s18, %s1003
        %p1005 = pneg %p551
        %p1006 = pneg %p548
        %p1007 = scmp.lt.s32.totalorder %s37, 1
        %s1008 = scalar_select %p1007, %s37, 1
        %s1009 = smul.addr %s1008, 4
        %s1010 = smul.addr %s1009, 8
        %s1011 = scalar_lea.vmem %s19, %s1010
        %p1012 = pneg %p577
        %p1013 = pneg %p574
        %p1014 = scmp.lt.s32.totalorder %s37, 1
        %s1015 = scalar_select %p1014, %s37, 1
        %s1016 = scalar_lea.vmem %s20, %s1015
        %p1017 = pneg %p603
        %p1018 = pneg %p600
        %p1019 = pneg %p624
        %p1020 = pneg %p621
        %p1021 = scmp.lt.s32.totalorder %s37, 1
        %s1022 = scalar_select %p1021, %s37, 1
        %p1023 = scmp.lt.s32.totalorder %s38, 1
        %s1024 = scalar_select %p1023, %s38, 1
        %s1025 = smul.addr %s1024, 4
        %s1026 = smul.addr %s1022, 8
        %s1027 = sadd.s32 %s1025, %s1026
        %s1028 = smul.addr %s1027, 4
        %s1029 = scalar_lea.vmem %s3, %s1028
        %p1030 = scmp.lt.s32.totalorder %s37, 1
        %s1031 = scalar_select %p1030, %s37, 1
        %p1032 = scmp.lt.s32.totalorder %s38, 1
        %s1033 = scalar_select %p1032, %s38, 1
        %s1034 = smul.addr %s1031, 2
        %s1035 = sadd.s32 %s1033, %s1034
        %s1036 = scalar_lea.vmem %s4, %s1035
        %p1037 = scmp.lt.s32.totalorder %s37, 1
        %s1038 = scalar_select %p1037, %s37, 1
        %p1039 = scmp.lt.s32.totalorder %s38, 1
        %s1040 = scalar_select %p1039, %s38, 1
        %s1041 = smul.addr %s1040, 4
        %s1042 = smul.addr %s1038, 8
        %s1043 = sadd.s32 %s1041, %s1042
        %s1044 = smul.addr %s1043, 4
        %s1045 = scalar_lea.vmem %s5, %s1044
        %p1046 = scmp.lt.s32.totalorder %s37, 1
        %s1047 = scalar_select %p1046, %s37, 1
        %p1048 = scmp.lt.s32.totalorder %s38, 1
        %s1049 = scalar_select %p1048, %s38, 1
        %s1050 = smul.addr %s1047, 2
        %s1051 = sadd.s32 %s1049, %s1050
        %s1052 = scalar_lea.vmem %s6, %s1051
        %p1053 = scmp.lt.s32.totalorder %s37, 1
        %s1054 = scalar_select %p1053, %s37, 1
        %p1055 = scmp.lt.s32.totalorder %s38, 1
        %s1056 = scalar_select %p1055, %s38, 1
        %s1057 = smul.addr %s1056, 4
        %s1058 = smul.addr %s1054, 8
        %s1059 = sadd.s32 %s1057, %s1058
        %s1060 = smul.addr %s1059, 4
        %s1061 = scalar_lea.vmem %s7, %s1060
        %p1062 = scmp.lt.s32.totalorder %s37, 1
        %s1063 = scalar_select %p1062, %s37, 1
        %p1064 = scmp.lt.s32.totalorder %s38, 1
        %s1065 = scalar_select %p1064, %s38, 1
        %s1066 = smul.addr %s1063, 2
        %s1067 = sadd.s32 %s1065, %s1066
        %s1068 = scalar_lea.vmem %s8, %s1067
        %p1069 = scmp.lt.s32.totalorder %s37, 1
        %s1070 = scalar_select %p1069, %s37, 1
        %p1071 = scmp.lt.s32.totalorder %s38, 1
        %s1072 = scalar_select %p1071, %s38, 1
        %s1073 = smul.addr %s1072, 4
        %s1074 = smul.addr %s1070, 8
        %s1075 = sadd.s32 %s1073, %s1074
        %s1076 = smul.addr %s1075, 4
        %s1077 = scalar_lea.vmem %s9, %s1076
        %p1078 = scmp.lt.s32.totalorder %s37, 1
        %s1079 = scalar_select %p1078, %s37, 1
        %p1080 = scmp.lt.s32.totalorder %s38, 1
        %s1081 = scalar_select %p1080, %s38, 1
        %s1082 = smul.addr %s1079, 2
        %s1083 = sadd.s32 %s1081, %s1082
        %s1084 = scalar_lea.vmem %s10, %s1083
        %p1085 = scmp.lt.s32.totalorder %s37, 1
        %s1086 = scalar_select %p1085, %s37, 1
        %p1087 = scmp.lt.s32.totalorder %s38, 1
        %s1088 = scalar_select %p1087, %s38, 1
        %s1089 = smul.addr %s1088, 4
        %s1090 = smul.addr %s1086, 8
        %s1091 = sadd.s32 %s1089, %s1090
        %s1092 = smul.addr %s1091, 4
        %s1093 = scalar_lea.vmem %s11, %s1092
        %p1094 = scmp.lt.s32.totalorder %s37, 1
        %s1095 = scalar_select %p1094, %s37, 1
        %p1096 = scmp.lt.s32.totalorder %s38, 1
        %s1097 = scalar_select %p1096, %s38, 1
        %s1098 = smul.addr %s1095, 2
        %s1099 = sadd.s32 %s1097, %s1098
        %s1100 = scalar_lea.vmem %s12, %s1099
        %p1101 = scmp.lt.s32.totalorder %s37, 1
        %s1102 = scalar_select %p1101, %s37, 1
        %p1103 = scmp.lt.s32.totalorder %s38, 1
        %s1104 = scalar_select %p1103, %s38, 1
        %s1105 = smul.addr %s1104, 8
        %s1106 = smul.addr %s1102, 16
        %s1107 = sadd.s32 %s1105, %s1106
        %s1108 = smul.addr %s1107, 4
        %s1109 = scalar_lea.vmem %s13, %s1108
        %p1110 = scmp.lt.s32.totalorder %s37, 1
        %s1111 = scalar_select %p1110, %s37, 1
        %p1112 = scmp.lt.s32.totalorder %s38, 1
        %s1113 = scalar_select %p1112, %s38, 1
        %s1114 = smul.addr %s1111, 2
        %s1115 = sadd.s32 %s1113, %s1114
        %s1116 = scalar_lea.vmem %s14, %s1115
        %p1117 = scmp.lt.s32.totalorder %s37, 1
        %s1118 = scalar_select %p1117, %s37, 1
        %p1119 = scmp.lt.s32.totalorder %s38, 1
        %s1120 = scalar_select %p1119, %s38, 1
        %s1121 = smul.addr %s1118, 2
        %s1122 = sadd.s32 %s1120, %s1121
        %s1123 = scalar_lea.vmem %s15, %s1122
        %p1124 = scmp.lt.s32.totalorder %s37, 1
        %s1125 = scalar_select %p1124, %s37, 1
        %p1126 = scmp.lt.s32.totalorder %s38, 1
        %s1127 = scalar_select %p1126, %s38, 1
        %s1128 = smul.addr %s1125, 2
        %s1129 = sadd.s32 %s1127, %s1128
        %s1130 = scalar_lea.vmem %s16, %s1129
        %p1131 = scmp.lt.s32.totalorder %s37, 1
        %s1132 = scalar_select %p1131, %s37, 1
        %p1133 = scmp.lt.s32.totalorder %s38, 1
        %s1134 = scalar_select %p1133, %s38, 1
        %s1135 = smul.addr %s1132, 2
        %s1136 = sadd.s32 %s1134, %s1135
        %s1137 = scalar_lea.vmem %s17, %s1136
        %p1138 = scmp.lt.s32.totalorder %s37, 1
        %s1139 = scalar_select %p1138, %s37, 1
        %p1140 = scmp.lt.s32.totalorder %s38, 1
        %s1141 = scalar_select %p1140, %s38, 1
        %s1142 = smul.addr %s1139, 2
        %s1143 = sadd.s32 %s1141, %s1142
        %s1144 = scalar_lea.vmem %s18, %s1143
        %p1145 = scmp.lt.s32.totalorder %s37, 1
        %s1146 = scalar_select %p1145, %s37, 1
        %s1147 = smul.addr %s1146, 4
        %s1148 = smul.addr %s1147, 8
        %s1149 = scalar_lea.vmem %s19, %s1148
        %p1150 = scmp.lt.s32.totalorder %s37, 1
        %s1151 = scalar_select %p1150, %s37, 1
        %s1152 = scalar_lea.vmem %s20, %s1151
        %p1154 = scmp.eq.s32.totalorder %s37, 0
        %p1155 = scmp.eq.s32.totalorder %s38, 0
        %p1156 = pnand %p1154, %p1155
        %p1157 = pneg %p1156
        // Predicated region
        $region105: #{tpu_custom_call.1} parent=103 // pred_check
          _
        $region106: #{tpu_custom_call.1} parent=103 // pred_check_branch
          %1159 = sbr.rel (%p1156) target = $region108
        $region107: #{tpu_custom_call.1} parent=103 // pred_region
          %v1160 = vld [vmem:[%s0] sm:$0xff]
          %v1161 = vld [vmem:[%s0 + $0x8] sm:$0xff]
          %v1162 = vld [vmem:[%s0 + $0x10] sm:$0xff]
          %v1163 = vld [vmem:[%s0 + $0x18] sm:$0xff]
          %v1164 = vld [vmem:[%s0 + $0x20] sm:$0xff]
          %v1165 = vld [vmem:[%s0 + $0x28] sm:$0xff]
          %v1166 = vld [vmem:[%s0 + $0x30] sm:$0xff]
          %v1167 = vld [vmem:[%s0 + $0x38] sm:$0xff]
          %v1168 = vld [vmem:[%s0 + $0x40] sm:$0xff]
          %v1169 = vld [vmem:[%s0 + $0x48] sm:$0xff]
          %v1170 = vld [vmem:[%s0 + $0x50] sm:$0xff]
          %v1171 = vld [vmem:[%s0 + $0x58] sm:$0xff]
          %v1172 = vld [vmem:[%s0 + $0x60] sm:$0xff]
          %v1173 = vld [vmem:[%s0 + $0x68] sm:$0xff]
          %v1174 = vld [vmem:[%s0 + $0x70] sm:$0xff]
          %v1175 = vld [vmem:[%s0 + $0x78] sm:$0xff]
          %vm1176 = vcmask 261120
          %1177 = vst.msk [vmem:[#allocation2] sm:$0xff] %vm1176, %v1160
          %1178 = vst.msk [vmem:[#allocation2 + $0x8] sm:$0xff] %vm1176, %v1161
          %1179 = vst.msk [vmem:[#allocation2 + $0x10] sm:$0xff] %vm1176, %v1162
          %1180 = vst.msk [vmem:[#allocation2 + $0x18] sm:$0xff] %vm1176, %v1163
          %1181 = vst.msk [vmem:[#allocation2 + $0x20] sm:$0xff] %vm1176, %v1164
          %1182 = vst.msk [vmem:[#allocation2 + $0x28] sm:$0xff] %vm1176, %v1165
          %1183 = vst.msk [vmem:[#allocation2 + $0x30] sm:$0xff] %vm1176, %v1166
          %1184 = vst.msk [vmem:[#allocation2 + $0x38] sm:$0xff] %vm1176, %v1167
          %1185 = vst.msk [vmem:[#allocation2 + $0x40] sm:$0xff] %vm1176, %v1168
          %1186 = vst.msk [vmem:[#allocation2 + $0x48] sm:$0xff] %vm1176, %v1169
          %1187 = vst.msk [vmem:[#allocation2 + $0x50] sm:$0xff] %vm1176, %v1170
          %1188 = vst.msk [vmem:[#allocation2 + $0x58] sm:$0xff] %vm1176, %v1171
          %1189 = vst.msk [vmem:[#allocation2 + $0x60] sm:$0xff] %vm1176, %v1172
          %1190 = vst.msk [vmem:[#allocation2 + $0x68] sm:$0xff] %vm1176, %v1173
          %1191 = vst.msk [vmem:[#allocation2 + $0x70] sm:$0xff] %vm1176, %v1174
          %1192 = vst.msk [vmem:[#allocation2 + $0x78] sm:$0xff] %vm1176, %v1175
          %vm1193 = vcmask 25600
          %1194 = vst.msk [vmem:[#allocation3] sm:$0x3] %vm1193, 0.0
        $region108: #{tpu_custom_call.1} parent=103 // pred_fallthru
          _
        %v1195 = vld [vmem:[#allocation2] sm:$0xff]
        %v1196 = vld [vmem:[#allocation2 + $0x8] sm:$0xff]
        %v1197 = vld [vmem:[#allocation2 + $0x10] sm:$0xff]
        %v1198 = vld [vmem:[#allocation2 + $0x18] sm:$0xff]
        %v1199 = vld [vmem:[#allocation2 + $0x20] sm:$0xff]
        %v1200 = vld [vmem:[#allocation2 + $0x28] sm:$0xff]
        %v1201 = vld [vmem:[#allocation2 + $0x30] sm:$0xff]
        %v1202 = vld [vmem:[#allocation2 + $0x38] sm:$0xff]
        %v1203 = vld [vmem:[#allocation2 + $0x40] sm:$0xff]
        %v1204 = vld [vmem:[#allocation2 + $0x48] sm:$0xff]
        %v1205 = vld [vmem:[#allocation2 + $0x50] sm:$0xff]
        %v1206 = vld [vmem:[#allocation2 + $0x58] sm:$0xff]
        %v1207 = vld [vmem:[#allocation2 + $0x60] sm:$0xff]
        %v1208 = vld [vmem:[#allocation2 + $0x68] sm:$0xff]
        %v1209 = vld [vmem:[#allocation2 + $0x70] sm:$0xff]
        %v1210 = vld [vmem:[#allocation2 + $0x78] sm:$0xff]
        %v1211 = vpack.c.bf16 %v1196, %v1195
        %v1212 = vpack.c.bf16 %v1198, %v1197
        %v1213 = vpack.c.bf16 %v1200, %v1199
        %v1214 = vpack.c.bf16 %v1202, %v1201
        %v1215 = vpack.c.bf16 %v1204, %v1203
        %v1216 = vpack.c.bf16 %v1206, %v1205
        %v1217 = vpack.c.bf16 %v1208, %v1207
        %v1218 = vpack.c.bf16 %v1210, %v1209
        %v1219 = vld [vmem:[%s1029] sm:$0xf]
        %v1220 = vld [vmem:[%s1029 + $0x4] sm:$0xf]
        %v1221 = vld [vmem:[%s1029 + $0x8] sm:$0xf]
        %v1222 = vld [vmem:[%s1029 + $0xc] sm:$0xf]
        %v1223 = vld [vmem:[%s1036] sm:$0x1]
        %v1225 = vlaneseq
        %v1226 = vshrl.u32 %v1225, 7
        %v1227 = vsub.s32 0, %v1226
        %v1228 = vrot.slane %v1223, %v1227
        %v1234 = vunpack.c.l.b16 %v1219
        %v1235 = vunpack.c.l.b16 %v1220
        %v1236 = vunpack.c.l.b16 %v1221
        %v1237 = vunpack.c.l.b16 %v1222
        %v1238 = vpack.c.b16 %v1235, %v1234
        %v1239 = vpack.c.b16 %v1237, %v1236
        %vm1242 = vcmask 261120
        %v1244 = vsel %vm1242, %v1211, 0
        %v1247 = vsel %vm1242, %v1212, 0
        %v1250 = vsel %vm1242, %v1213, 0
        %v1253 = vsel %vm1242, %v1214, 0
        %v1256 = vsel %vm1242, %v1215, 0
        %v1259 = vsel %vm1242, %v1216, 0
        %v1262 = vsel %vm1242, %v1217, 0
        %v1265 = vsel %vm1242, %v1218, 0
        %1267 = vmatprep.subr.bf16.mxu0 0
        %1268 = vmatpush1.bf16.msra.mxu0 %v1238
        %1269 = vmatprep.subr.bf16.mxu0 0
        %1270 = vmatpush1.bf16.msra.mxu0 %v1239
        %1271 = vmatprep.subr.bf16.mxu0 0
        %1272 = vmatpush1.bf16.msra.mxu0 0
        %1273 = vmatprep.subr.bf16.mxu0 0
        %1274 = vmatpush1.bf16.msra.mxu0 0
        %1275 = vmatprep.subr.bf16.mxu0 0
        %1276 = vmatpush1.bf16.msra.mxu0 0
        %1277 = vmatprep.subr.bf16.mxu0 0
        %1278 = vmatpush1.bf16.msra.mxu0 0
        %1279 = vmatprep.subr.bf16.mxu0 0
        %1280 = vmatpush1.bf16.msra.mxu0 0
        %1281 = vmatprep.subr.bf16.mxu0 0
        %1282 = vmatpush1.bf16.msra.mxu0 0
        %1283 = vmatprep.subr.bf16.mxu0 0
        %1284 = vmatpush1.bf16.msra.mxu0 0
        %1285 = vmatprep.subr.bf16.mxu0 0
        %1286 = vmatpush1.bf16.msra.mxu0 0
        %1287 = vmatprep.subr.bf16.mxu0 0
        %1288 = vmatpush1.bf16.msra.mxu0 0
        %1289 = vmatprep.subr.bf16.mxu0 0
        %1290 = vmatpush1.bf16.msra.mxu0 0
        %1291 = vmatprep.subr.bf16.mxu0 0
        %1292 = vmatpush1.bf16.msra.mxu0 0
        %1293 = vmatprep.subr.bf16.mxu0 0
        %1294 = vmatpush1.bf16.msra.mxu0 0
        %1295 = vmatprep.subr.bf16.mxu0 0
        %1296 = vmatpush1.bf16.msra.mxu0 0
        %1297 = vmatprep.subr.bf16.mxu0 0
        %1298 = vmatpush1.bf16.msra.mxu0 0
        %1299 = vmatprep.mubr.bf16.mxu0 0
        %1300 = vmatmul.mubr.bf16.gmra.mrb[0].mxu0 %v1244
        %v1301 = vpop.f32.mrb[0].mxu0
        %v1302 = vadd.f32 %v1228, %v1301
        %v1303 = vpop.f32.mrb[0].mxu0
        %v1304 = vpop.f32.mrb[0].mxu0
        %v1305 = vadd.f32 %v1228, %v1304
        %v1306 = vpop.f32.mrb[0].mxu0
        %1307 = vmatprep.mubr.bf16.mxu0 0
        %1308 = vmatmul.mubr.bf16.gmra.mrb[0].mxu0 %v1247
        %v1309 = vpop.f32.mrb[0].mxu0
        %v1310 = vadd.f32 %v1228, %v1309
        %v1311 = vpop.f32.mrb[0].mxu0
        %v1312 = vpop.f32.mrb[0].mxu0
        %v1313 = vadd.f32 %v1228, %v1312
        %v1314 = vpop.f32.mrb[0].mxu0
        %1315 = vmatprep.mubr.bf16.mxu0 0
        %1316 = vmatmul.mubr.bf16.gmra.mrb[0].mxu0 %v1250
        %v1317 = vpop.f32.mrb[0].mxu0
        %v1318 = vadd.f32 %v1228, %v1317
        %v1319 = vpop.f32.mrb[0].mxu0
        %v1320 = vpop.f32.mrb[0].mxu0
        %v1321 = vadd.f32 %v1228, %v1320
        %v1322 = vpop.f32.mrb[0].mxu0
        %1323 = vmatprep.mubr.bf16.mxu0 0
        %1324 = vmatmul.mubr.bf16.gmra.mrb[0].mxu0 %v1253
        %v1325 = vpop.f32.mrb[0].mxu0
        %v1326 = vadd.f32 %v1228, %v1325
        %v1327 = vpop.f32.mrb[0].mxu0
        %v1328 = vpop.f32.mrb[0].mxu0
        %v1329 = vadd.f32 %v1228, %v1328
        %v1330 = vpop.f32.mrb[0].mxu0
        %1331 = vmatprep.mubr.bf16.mxu0 0
        %1332 = vmatmul.mubr.bf16.gmra.mrb[0].mxu0 %v1256
        %v1333 = vpop.f32.mrb[0].mxu0
        %v1334 = vadd.f32 %v1228, %v1333
        %v1335 = vpop.f32.mrb[0].mxu0
        %v1336 = vpop.f32.mrb[0].mxu0
        %v1337 = vadd.f32 %v1228, %v1336
        %v1338 = vpop.f32.mrb[0].mxu0
        %1339 = vmatprep.mubr.bf16.mxu0 0
        %1340 = vmatmul.mubr.bf16.gmra.mrb[0].mxu0 %v1259
        %v1341 = vpop.f32.mrb[0].mxu0
        %v1342 = vadd.f32 %v1228, %v1341
        %v1343 = vpop.f32.mrb[0].mxu0
        %v1344 = vpop.f32.mrb[0].mxu0
        %v1345 = vadd.f32 %v1228, %v1344
        %v1346 = vpop.f32.mrb[0].mxu0
        %1347 = vmatprep.mubr.bf16.mxu0 0
        %1348 = vmatmul.mubr.bf16.gmra.mrb[0].mxu0 %v1262
        %v1349 = vpop.f32.mrb[0].mxu0
        %v1350 = vadd.f32 %v1228, %v1349
        %v1351 = vpop.f32.mrb[0].mxu0
        %v1352 = vpop.f32.mrb[0].mxu0
        %v1353 = vadd.f32 %v1228, %v1352
        %v1354 = vpop.f32.mrb[0].mxu0
        %1355 = vmatprep.mubr.bf16.mxu0 0
        %1356 = vmatmul.mubr.bf16.gmra.mrb[0].mxu0 %v1265
        %v1357 = vpop.f32.mrb[0].mxu0
        %v1358 = vadd.f32 %v1228, %v1357
        %v1359 = vpop.f32.mrb[0].mxu0
        %v1360 = vpop.f32.mrb[0].mxu0
        %v1361 = vadd.f32 %v1228, %v1360
        %v1362 = vpop.f32.mrb[0].mxu0
        %1363 = vdwg.mxu0
        %v1364 = vld [vmem:[%s1045] sm:$0xf]
        %v1365 = vld [vmem:[%s1045 + $0x4] sm:$0xf]
        %v1366 = vld [vmem:[%s1045 + $0x8] sm:$0xf]
        %v1367 = vld [vmem:[%s1045 + $0xc] sm:$0xf]
        %v1368 = vld [vmem:[%s1052] sm:$0x1]
        %v1370 = vlaneseq
        %v1371 = vshrl.u32 %v1370, 7
        %v1372 = vsub.s32 0, %v1371
        %v1373 = vrot.slane %v1368, %v1372
        %v1379 = vunpack.c.l.b16 %v1364
        %v1380 = vunpack.c.l.b16 %v1365
        %v1381 = vunpack.c.l.b16 %v1366
        %v1382 = vunpack.c.l.b16 %v1367
        %v1383 = vpack.c.b16 %v1380, %v1379
        %v1384 = vpack.c.b16 %v1382, %v1381
        %1387 = vmatprep.subr.bf16.mxu0 0
        %1388 = vmatpush1.bf16.msra.mxu0 %v1383
        %1389 = vmatprep.subr.bf16.mxu0 0
        %1390 = vmatpush1.bf16.msra.mxu0 %v1384
        %1391 = vmatprep.subr.bf16.mxu0 0
        %1392 = vmatpush1.bf16.msra.mxu0 0
        %1393 = vmatprep.subr.bf16.mxu0 0
        %1394 = vmatpush1.bf16.msra.mxu0 0
        %1395 = vmatprep.subr.bf16.mxu0 0
        %1396 = vmatpush1.bf16.msra.mxu0 0
        %1397 = vmatprep.subr.bf16.mxu0 0
        %1398 = vmatpush1.bf16.msra.mxu0 0
        %1399 = vmatprep.subr.bf16.mxu0 0
        %1400 = vmatpush1.bf16.msra.mxu0 0
        %1401 = vmatprep.subr.bf16.mxu0 0
        %1402 = vmatpush1.bf16.msra.mxu0 0
        %1403 = vmatprep.subr.bf16.mxu0 0
        %1404 = vmatpush1.bf16.msra.mxu0 0
        %1405 = vmatprep.subr.bf16.mxu0 0
        %1406 = vmatpush1.bf16.msra.mxu0 0
        %1407 = vmatprep.subr.bf16.mxu0 0
        %1408 = vmatpush1.bf16.msra.mxu0 0
        %1409 = vmatprep.subr.bf16.mxu0 0
        %1410 = vmatpush1.bf16.msra.mxu0 0
        %1411 = vmatprep.subr.bf16.mxu0 0
        %1412 = vmatpush1.bf16.msra.mxu0 0
        %1413 = vmatprep.subr.bf16.mxu0 0
        %1414 = vmatpush1.bf16.msra.mxu0 0
        %1415 = vmatprep.subr.bf16.mxu0 0
        %1416 = vmatpush1.bf16.msra.mxu0 0
        %1417 = vmatprep.subr.bf16.mxu0 0
        %1418 = vmatpush1.bf16.msra.mxu0 0
        %1419 = vmatprep.mubr.bf16.mxu0 0
        %1420 = vmatmul.mubr.bf16.gmra.mrb[0].mxu0 %v1244
        %v1421 = vpop.f32.mrb[0].mxu0
        %v1422 = vadd.f32 %v1373, %v1421
        %v1423 = vpop.f32.mrb[0].mxu0
        %v1424 = vpop.f32.mrb[0].mxu0
        %v1425 = vadd.f32 %v1373, %v1424
        %v1426 = vpop.f32.mrb[0].mxu0
        %1427 = vmatprep.mubr.bf16.mxu0 0
        %1428 = vmatmul.mubr.bf16.gmra.mrb[0].mxu0 %v1247
        %v1429 = vpop.f32.mrb[0].mxu0
        %v1430 = vadd.f32 %v1373, %v1429
        %v1431 = vpop.f32.mrb[0].mxu0
        %v1432 = vpop.f32.mrb[0].mxu0
        %v1433 = vadd.f32 %v1373, %v1432
        %v1434 = vpop.f32.mrb[0].mxu0
        %1435 = vmatprep.mubr.bf16.mxu0 0
        %1436 = vmatmul.mubr.bf16.gmra.mrb[0].mxu0 %v1250
        %v1437 = vpop.f32.mrb[0].mxu0
        %v1438 = vadd.f32 %v1373, %v1437
        %v1439 = vpop.f32.mrb[0].mxu0
        %v1440 = vpop.f32.mrb[0].mxu0
        %v1441 = vadd.f32 %v1373, %v1440
        %v1442 = vpop.f32.mrb[0].mxu0
        %1443 = vmatprep.mubr.bf16.mxu0 0
        %1444 = vmatmul.mubr.bf16.gmra.mrb[0].mxu0 %v1253
        %v1445 = vpop.f32.mrb[0].mxu0
        %v1446 = vadd.f32 %v1373, %v1445
        %v1447 = vpop.f32.mrb[0].mxu0
        %v1448 = vpop.f32.mrb[0].mxu0
        %v1449 = vadd.f32 %v1373, %v1448
        %v1450 = vpop.f32.mrb[0].mxu0
        %1451 = vmatprep.mubr.bf16.mxu0 0
        %1452 = vmatmul.mubr.bf16.gmra.mrb[0].mxu0 %v1256
        %v1453 = vpop.f32.mrb[0].mxu0
        %v1454 = vadd.f32 %v1373, %v1453
        %v1455 = vpop.f32.mrb[0].mxu0
        %v1456 = vpop.f32.mrb[0].mxu0
        %v1457 = vadd.f32 %v1373, %v1456
        %v1458 = vpop.f32.mrb[0].mxu0
        %1459 = vmatprep.mubr.bf16.mxu0 0
        %1460 = vmatmul.mubr.bf16.gmra.mrb[0].mxu0 %v1259
        %v1461 = vpop.f32.mrb[0].mxu0
        %v1462 = vadd.f32 %v1373, %v1461
        %v1463 = vpop.f32.mrb[0].mxu0
        %v1464 = vpop.f32.mrb[0].mxu0
        %v1465 = vadd.f32 %v1373, %v1464
        %v1466 = vpop.f32.mrb[0].mxu0
        %1467 = vmatprep.mubr.bf16.mxu0 0
        %1468 = vmatmul.mubr.bf16.gmra.mrb[0].mxu0 %v1262
        %v1469 = vpop.f32.mrb[0].mxu0
        %v1470 = vadd.f32 %v1373, %v1469
        %v1471 = vpop.f32.mrb[0].mxu0
        %v1472 = vpop.f32.mrb[0].mxu0
        %v1473 = vadd.f32 %v1373, %v1472
        %v1474 = vpop.f32.mrb[0].mxu0
        %1475 = vmatprep.mubr.bf16.mxu0 0
        %1476 = vmatmul.mubr.bf16.gmra.mrb[0].mxu0 %v1265
        %v1477 = vpop.f32.mrb[0].mxu0
        %v1478 = vadd.f32 %v1373, %v1477
        %v1479 = vpop.f32.mrb[0].mxu0
        %v1480 = vpop.f32.mrb[0].mxu0
        %v1481 = vadd.f32 %v1373, %v1480
        %v1482 = vpop.f32.mrb[0].mxu0
        %1483 = vdwg.mxu0
        %v1484 = vld [vmem:[%s1061] sm:$0xf]
        %v1485 = vld [vmem:[%s1061 + $0x4] sm:$0xf]
        %v1486 = vld [vmem:[%s1061 + $0x8] sm:$0xf]
        %v1487 = vld [vmem:[%s1061 + $0xc] sm:$0xf]
        %v1488 = vld [vmem:[%s1068] sm:$0x1]
        %v1490 = vlaneseq
        %v1491 = vshrl.u32 %v1490, 7
        %v1492 = vsub.s32 0, %v1491
        %v1493 = vrot.slane %v1488, %v1492
        %v1499 = vunpack.c.l.b16 %v1484
        %v1500 = vunpack.c.l.b16 %v1485
        %v1501 = vunpack.c.l.b16 %v1486
        %v1502 = vunpack.c.l.b16 %v1487
        %v1503 = vpack.c.b16 %v1500, %v1499
        %v1504 = vpack.c.b16 %v1502, %v1501
        %1507 = vmatprep.subr.bf16.mxu0 0
        %1508 = vmatpush1.bf16.msra.mxu0 %v1503
        %1509 = vmatprep.subr.bf16.mxu0 0
        %1510 = vmatpush1.bf16.msra.mxu0 %v1504
        %1511 = vmatprep.subr.bf16.mxu0 0
        %1512 = vmatpush1.bf16.msra.mxu0 0
        %1513 = vmatprep.subr.bf16.mxu0 0
        %1514 = vmatpush1.bf16.msra.mxu0 0
        %1515 = vmatprep.subr.bf16.mxu0 0
        %1516 = vmatpush1.bf16.msra.mxu0 0
        %1517 = vmatprep.subr.bf16.mxu0 0
        %1518 = vmatpush1.bf16.msra.mxu0 0
        %1519 = vmatprep.subr.bf16.mxu0 0
        %1520 = vmatpush1.bf16.msra.mxu0 0
        %1521 = vmatprep.subr.bf16.mxu0 0
        %1522 = vmatpush1.bf16.msra.mxu0 0
        %1523 = vmatprep.subr.bf16.mxu0 0
        %1524 = vmatpush1.bf16.msra.mxu0 0
        %1525 = vmatprep.subr.bf16.mxu0 0
        %1526 = vmatpush1.bf16.msra.mxu0 0
        %1527 = vmatprep.subr.bf16.mxu0 0
        %1528 = vmatpush1.bf16.msra.mxu0 0
        %1529 = vmatprep.subr.bf16.mxu0 0
        %1530 = vmatpush1.bf16.msra.mxu0 0
        %1531 = vmatprep.subr.bf16.mxu0 0
        %1532 = vmatpush1.bf16.msra.mxu0 0
        %1533 = vmatprep.subr.bf16.mxu0 0
        %1534 = vmatpush1.bf16.msra.mxu0 0
        %1535 = vmatprep.subr.bf16.mxu0 0
        %1536 = vmatpush1.bf16.msra.mxu0 0
        %1537 = vmatprep.subr.bf16.mxu0 0
        %1538 = vmatpush1.bf16.msra.mxu0 0
        %1539 = vmatprep.mubr.bf16.mxu0 0
        %1540 = vmatmul.mubr.bf16.gmra.mrb[0].mxu0 %v1244
        %v1541 = vpop.f32.mrb[0].mxu0
        %v1542 = vadd.f32 %v1493, %v1541
        %v1543 = vpop.f32.mrb[0].mxu0
        %v1544 = vpop.f32.mrb[0].mxu0
        %v1545 = vadd.f32 %v1493, %v1544
        %v1546 = vpop.f32.mrb[0].mxu0
        %1547 = vmatprep.mubr.bf16.mxu0 0
        %1548 = vmatmul.mubr.bf16.gmra.mrb[0].mxu0 %v1247
        %v1549 = vpop.f32.mrb[0].mxu0
        %v1550 = vadd.f32 %v1493, %v1549
        %v1551 = vpop.f32.mrb[0].mxu0
        %v1552 = vpop.f32.mrb[0].mxu0
        %v1553 = vadd.f32 %v1493, %v1552
        %v1554 = vpop.f32.mrb[0].mxu0
        %1555 = vmatprep.mubr.bf16.mxu0 0
        %1556 = vmatmul.mubr.bf16.gmra.mrb[0].mxu0 %v1250
        %v1557 = vpop.f32.mrb[0].mxu0
        %v1558 = vadd.f32 %v1493, %v1557
        %v1559 = vpop.f32.mrb[0].mxu0
        %v1560 = vpop.f32.mrb[0].mxu0
        %v1561 = vadd.f32 %v1493, %v1560
        %v1562 = vpop.f32.mrb[0].mxu0
        %1563 = vmatprep.mubr.bf16.mxu0 0
        %1564 = vmatmul.mubr.bf16.gmra.mrb[0].mxu0 %v1253
        %v1565 = vpop.f32.mrb[0].mxu0
        %v1566 = vadd.f32 %v1493, %v1565
        %v1567 = vpop.f32.mrb[0].mxu0
        %v1568 = vpop.f32.mrb[0].mxu0
        %v1569 = vadd.f32 %v1493, %v1568
        %v1570 = vpop.f32.mrb[0].mxu0
        %1571 = vmatprep.mubr.bf16.mxu0 0
        %1572 = vmatmul.mubr.bf16.gmra.mrb[0].mxu0 %v1256
        %v1573 = vpop.f32.mrb[0].mxu0
        %v1574 = vadd.f32 %v1493, %v1573
        %v1575 = vpop.f32.mrb[0].mxu0
        %v1576 = vpop.f32.mrb[0].mxu0
        %v1577 = vadd.f32 %v1493, %v1576
        %v1578 = vpop.f32.mrb[0].mxu0
        %1579 = vmatprep.mubr.bf16.mxu0 0
        %1580 = vmatmul.mubr.bf16.gmra.mrb[0].mxu0 %v1259
        %v1581 = vpop.f32.mrb[0].mxu0
        %v1582 = vadd.f32 %v1493, %v1581
        %v1583 = vpop.f32.mrb[0].mxu0
        %v1584 = vpop.f32.mrb[0].mxu0
        %v1585 = vadd.f32 %v1493, %v1584
        %v1586 = vpop.f32.mrb[0].mxu0
        %1587 = vmatprep.mubr.bf16.mxu0 0
        %1588 = vmatmul.mubr.bf16.gmra.mrb[0].mxu0 %v1262
        %v1589 = vpop.f32.mrb[0].mxu0
        %v1590 = vadd.f32 %v1493, %v1589
        %v1591 = vpop.f32.mrb[0].mxu0
        %v1592 = vpop.f32.mrb[0].mxu0
        %v1593 = vadd.f32 %v1493, %v1592
        %v1594 = vpop.f32.mrb[0].mxu0
        %1595 = vmatprep.mubr.bf16.mxu0 0
        %1596 = vmatmul.mubr.bf16.gmra.mrb[0].mxu0 %v1265
        %v1597 = vpop.f32.mrb[0].mxu0
        %v1598 = vadd.f32 %v1493, %v1597
        %v1599 = vpop.f32.mrb[0].mxu0
        %v1600 = vpop.f32.mrb[0].mxu0
        %v1601 = vadd.f32 %v1493, %v1600
        %v1602 = vpop.f32.mrb[0].mxu0
        %1603 = vdwg.mxu0
        %v1604 = vpack.c.bf16 %v1305, %v1302
        %v1605 = vpack.c.bf16 %v1313, %v1310
        %v1606 = vpack.c.bf16 %v1321, %v1318
        %v1607 = vpack.c.bf16 %v1329, %v1326
        %v1608 = vpack.c.bf16 %v1337, %v1334
        %v1609 = vpack.c.bf16 %v1345, %v1342
        %v1610 = vpack.c.bf16 %v1353, %v1350
        %v1611 = vpack.c.bf16 %v1361, %v1358
        %v1612 = vpack.c.bf16 %v1425, %v1422
        %v1613 = vpack.c.bf16 %v1433, %v1430
        %v1614 = vpack.c.bf16 %v1441, %v1438
        %v1615 = vpack.c.bf16 %v1449, %v1446
        %v1616 = vpack.c.bf16 %v1457, %v1454
        %v1617 = vpack.c.bf16 %v1465, %v1462
        %v1618 = vpack.c.bf16 %v1473, %v1470
        %v1619 = vpack.c.bf16 %v1481, %v1478
        %v1620 = vpack.c.bf16 %v1545, %v1542
        %v1621 = vpack.c.bf16 %v1553, %v1550
        %v1622 = vpack.c.bf16 %v1561, %v1558
        %v1623 = vpack.c.bf16 %v1569, %v1566
        %v1624 = vpack.c.bf16 %v1577, %v1574
        %v1625 = vpack.c.bf16 %v1585, %v1582
        %v1626 = vpack.c.bf16 %v1593, %v1590
        %v1627 = vpack.c.bf16 %v1601, %v1598
        %v1629 = vsel %vm1242, %v1604, 0
        %v1632 = vsel %vm1242, %v1612, 0
        %1634 = vmatprep.subr.bf16.mxu0 0
        %1635 = vmatpush1.bf16.xpose.msra.mxu0 %v1632
        %1636 = vmatprep.subr.bf16.mxu0 0
        %1637 = vmatpush1.bf16.xpose.msra.mxu0 0
        %1638 = vmatprep.subr.bf16.mxu0 0
        %1639 = vmatpush1.bf16.xpose.msra.mxu0 0
        %1640 = vmatprep.subr.bf16.mxu0 0
        %1641 = vmatpush1.bf16.xpose.msra.mxu0 0
        %1642 = vmatprep.subr.bf16.mxu0 0
        %1643 = vmatpush1.bf16.xpose.msra.mxu0 0
        %1644 = vmatprep.subr.bf16.mxu0 0
        %1645 = vmatpush1.bf16.xpose.msra.mxu0 0
        %1646 = vmatprep.subr.bf16.mxu0 0
        %1647 = vmatpush1.bf16.xpose.msra.mxu0 0
        %1648 = vmatprep.subr.bf16.mxu0 0
        %1649 = vmatpush1.bf16.xpose.msra.mxu0 0
        %1650 = vmatprep.subr.bf16.mxu0 0
        %1651 = vmatpush1.bf16.xpose.msra.mxu0 0
        %1652 = vmatprep.subr.bf16.mxu0 0
        %1653 = vmatpush1.bf16.xpose.msra.mxu0 0
        %1654 = vmatprep.subr.bf16.mxu0 0
        %1655 = vmatpush1.bf16.xpose.msra.mxu0 0
        %1656 = vmatprep.subr.bf16.mxu0 0
        %1657 = vmatpush1.bf16.xpose.msra.mxu0 0
        %1658 = vmatprep.subr.bf16.mxu0 0
        %1659 = vmatpush1.bf16.xpose.msra.mxu0 0
        %1660 = vmatprep.subr.bf16.mxu0 0
        %1661 = vmatpush1.bf16.xpose.msra.mxu0 0
        %1662 = vmatprep.subr.bf16.mxu0 0
        %1663 = vmatpush1.bf16.xpose.msra.mxu0 0
        %1664 = vmatprep.subr.bf16.mxu0 0
        %1665 = vmatpush1.bf16.xpose.msra.mxu0 0
        %1666 = vmatprep.mubr.bf16.mxu0 0
        %1667 = vmatmul.mubr.bf16.gmra.mrb[0].mxu0 %v1629
        %v1668 = vpop.f32.mrb[0].mxu0
        %v1669 = vadd.f32 0.0, %v1668
        %v1670 = vpop.f32.mrb[0].mxu0
        %v1671 = vpop.f32.mrb[0].mxu0
        %v1672 = vadd.f32 0.0, %v1671
        %v1673 = vpop.f32.mrb[0].mxu0
        %1674 = vdwg.mxu0
        %v1676 = vsel %vm1242, %v1605, 0
        %v1679 = vsel %vm1242, %v1613, 0
        %1681 = vmatprep.subr.bf16.mxu0 0
        %1682 = vmatpush1.bf16.xpose.msra.mxu0 %v1679
        %1683 = vmatprep.subr.bf16.mxu0 0
        %1684 = vmatpush1.bf16.xpose.msra.mxu0 0
        %1685 = vmatprep.subr.bf16.mxu0 0
        %1686 = vmatpush1.bf16.xpose.msra.mxu0 0
        %1687 = vmatprep.subr.bf16.mxu0 0
        %1688 = vmatpush1.bf16.xpose.msra.mxu0 0
        %1689 = vmatprep.subr.bf16.mxu0 0
        %1690 = vmatpush1.bf16.xpose.msra.mxu0 0
        %1691 = vmatprep.subr.bf16.mxu0 0
        %1692 = vmatpush1.bf16.xpose.msra.mxu0 0
        %1693 = vmatprep.subr.bf16.mxu0 0
        %1694 = vmatpush1.bf16.xpose.msra.mxu0 0
        %1695 = vmatprep.subr.bf16.mxu0 0
        %1696 = vmatpush1.bf16.xpose.msra.mxu0 0
        %1697 = vmatprep.subr.bf16.mxu0 0
        %1698 = vmatpush1.bf16.xpose.msra.mxu0 0
        %1699 = vmatprep.subr.bf16.mxu0 0
        %1700 = vmatpush1.bf16.xpose.msra.mxu0 0
        %1701 = vmatprep.subr.bf16.mxu0 0
        %1702 = vmatpush1.bf16.xpose.msra.mxu0 0
        %1703 = vmatprep.subr.bf16.mxu0 0
        %1704 = vmatpush1.bf16.xpose.msra.mxu0 0
        %1705 = vmatprep.subr.bf16.mxu0 0
        %1706 = vmatpush1.bf16.xpose.msra.mxu0 0
        %1707 = vmatprep.subr.bf16.mxu0 0
        %1708 = vmatpush1.bf16.xpose.msra.mxu0 0
        %1709 = vmatprep.subr.bf16.mxu0 0
        %1710 = vmatpush1.bf16.xpose.msra.mxu0 0
        %1711 = vmatprep.subr.bf16.mxu0 0
        %1712 = vmatpush1.bf16.xpose.msra.mxu0 0
        %1713 = vmatprep.mubr.bf16.mxu0 0
        %1714 = vmatmul.mubr.bf16.gmra.mrb[0].mxu0 %v1676
        %v1715 = vpop.f32.mrb[0].mxu0
        %v1716 = vadd.f32 0.0, %v1715
        %v1717 = vpop.f32.mrb[0].mxu0
        %v1718 = vpop.f32.mrb[0].mxu0
        %v1719 = vadd.f32 0.0, %v1718
        %v1720 = vpop.f32.mrb[0].mxu0
        %1721 = vdwg.mxu0
        %v1723 = vsel %vm1242, %v1606, 0
        %v1726 = vsel %vm1242, %v1614, 0
        %1728 = vmatprep.subr.bf16.mxu0 0
        %1729 = vmatpush1.bf16.xpose.msra.mxu0 %v1726
        %1730 = vmatprep.subr.bf16.mxu0 0
        %1731 = vmatpush1.bf16.xpose.msra.mxu0 0
        %1732 = vmatprep.subr.bf16.mxu0 0
        %1733 = vmatpush1.bf16.xpose.msra.mxu0 0
        %1734 = vmatprep.subr.bf16.mxu0 0
        %1735 = vmatpush1.bf16.xpose.msra.mxu0 0
        %1736 = vmatprep.subr.bf16.mxu0 0
        %1737 = vmatpush1.bf16.xpose.msra.mxu0 0
        %1738 = vmatprep.subr.bf16.mxu0 0
        %1739 = vmatpush1.bf16.xpose.msra.mxu0 0
        %1740 = vmatprep.subr.bf16.mxu0 0
        %1741 = vmatpush1.bf16.xpose.msra.mxu0 0
        %1742 = vmatprep.subr.bf16.mxu0 0
        %1743 = vmatpush1.bf16.xpose.msra.mxu0 0
        %1744 = vmatprep.subr.bf16.mxu0 0
        %1745 = vmatpush1.bf16.xpose.msra.mxu0 0
        %1746 = vmatprep.subr.bf16.mxu0 0
        %1747 = vmatpush1.bf16.xpose.msra.mxu0 0
        %1748 = vmatprep.subr.bf16.mxu0 0
        %1749 = vmatpush1.bf16.xpose.msra.mxu0 0
        %1750 = vmatprep.subr.bf16.mxu0 0
        %1751 = vmatpush1.bf16.xpose.msra.mxu0 0
        %1752 = vmatprep.subr.bf16.mxu0 0
        %1753 = vmatpush1.bf16.xpose.msra.mxu0 0
        %1754 = vmatprep.subr.bf16.mxu0 0
        %1755 = vmatpush1.bf16.xpose.msra.mxu0 0
        %1756 = vmatprep.subr.bf16.mxu0 0
        %1757 = vmatpush1.bf16.xpose.msra.mxu0 0
        %1758 = vmatprep.subr.bf16.mxu0 0
        %1759 = vmatpush1.bf16.xpose.msra.mxu0 0
        %1760 = vmatprep.mubr.bf16.mxu0 0
        %1761 = vmatmul.mubr.bf16.gmra.mrb[0].mxu0 %v1723
        %v1762 = vpop.f32.mrb[0].mxu0
        %v1763 = vadd.f32 0.0, %v1762
        %v1764 = vpop.f32.mrb[0].mxu0
        %v1765 = vpop.f32.mrb[0].mxu0
        %v1766 = vadd.f32 0.0, %v1765
        %v1767 = vpop.f32.mrb[0].mxu0
        %1768 = vdwg.mxu0
        %v1770 = vsel %vm1242, %v1607, 0
        %v1773 = vsel %vm1242, %v1615, 0
        %1775 = vmatprep.subr.bf16.mxu0 0
        %1776 = vmatpush1.bf16.xpose.msra.mxu0 %v1773
        %1777 = vmatprep.subr.bf16.mxu0 0
        %1778 = vmatpush1.bf16.xpose.msra.mxu0 0
        %1779 = vmatprep.subr.bf16.mxu0 0
        %1780 = vmatpush1.bf16.xpose.msra.mxu0 0
        %1781 = vmatprep.subr.bf16.mxu0 0
        %1782 = vmatpush1.bf16.xpose.msra.mxu0 0
        %1783 = vmatprep.subr.bf16.mxu0 0
        %1784 = vmatpush1.bf16.xpose.msra.mxu0 0
        %1785 = vmatprep.subr.bf16.mxu0 0
        %1786 = vmatpush1.bf16.xpose.msra.mxu0 0
        %1787 = vmatprep.subr.bf16.mxu0 0
        %1788 = vmatpush1.bf16.xpose.msra.mxu0 0
        %1789 = vmatprep.subr.bf16.mxu0 0
        %1790 = vmatpush1.bf16.xpose.msra.mxu0 0
        %1791 = vmatprep.subr.bf16.mxu0 0
        %1792 = vmatpush1.bf16.xpose.msra.mxu0 0
        %1793 = vmatprep.subr.bf16.mxu0 0
        %1794 = vmatpush1.bf16.xpose.msra.mxu0 0
        %1795 = vmatprep.subr.bf16.mxu0 0
        %1796 = vmatpush1.bf16.xpose.msra.mxu0 0
        %1797 = vmatprep.subr.bf16.mxu0 0
        %1798 = vmatpush1.bf16.xpose.msra.mxu0 0
        %1799 = vmatprep.subr.bf16.mxu0 0
        %1800 = vmatpush1.bf16.xpose.msra.mxu0 0
        %1801 = vmatprep.subr.bf16.mxu0 0
        %1802 = vmatpush1.bf16.xpose.msra.mxu0 0
        %1803 = vmatprep.subr.bf16.mxu0 0
        %1804 = vmatpush1.bf16.xpose.msra.mxu0 0
        %1805 = vmatprep.subr.bf16.mxu0 0
        %1806 = vmatpush1.bf16.xpose.msra.mxu0 0
        %1807 = vmatprep.mubr.bf16.mxu0 0
        %1808 = vmatmul.mubr.bf16.gmra.mrb[0].mxu0 %v1770
        %v1809 = vpop.f32.mrb[0].mxu0
        %v1810 = vadd.f32 0.0, %v1809
        %v1811 = vpop.f32.mrb[0].mxu0
        %v1812 = vpop.f32.mrb[0].mxu0
        %v1813 = vadd.f32 0.0, %v1812
        %v1814 = vpop.f32.mrb[0].mxu0
        %1815 = vdwg.mxu0
        %v1817 = vsel %vm1242, %v1608, 0
        %v1820 = vsel %vm1242, %v1616, 0
        %1822 = vmatprep.subr.bf16.mxu0 0
        %1823 = vmatpush1.bf16.xpose.msra.mxu0 %v1820
        %1824 = vmatprep.subr.bf16.mxu0 0
        %1825 = vmatpush1.bf16.xpose.msra.mxu0 0
        %1826 = vmatprep.subr.bf16.mxu0 0
        %1827 = vmatpush1.bf16.xpose.msra.mxu0 0
        %1828 = vmatprep.subr.bf16.mxu0 0
        %1829 = vmatpush1.bf16.xpose.msra.mxu0 0
        %1830 = vmatprep.subr.bf16.mxu0 0
        %1831 = vmatpush1.bf16.xpose.msra.mxu0 0
        %1832 = vmatprep.subr.bf16.mxu0 0
        %1833 = vmatpush1.bf16.xpose.msra.mxu0 0
        %1834 = vmatprep.subr.bf16.mxu0 0
        %1835 = vmatpush1.bf16.xpose.msra.mxu0 0
        %1836 = vmatprep.subr.bf16.mxu0 0
        %1837 = vmatpush1.bf16.xpose.msra.mxu0 0
        %1838 = vmatprep.subr.bf16.mxu0 0
        %1839 = vmatpush1.bf16.xpose.msra.mxu0 0
        %1840 = vmatprep.subr.bf16.mxu0 0
        %1841 = vmatpush1.bf16.xpose.msra.mxu0 0
        %1842 = vmatprep.subr.bf16.mxu0 0
        %1843 = vmatpush1.bf16.xpose.msra.mxu0 0
        %1844 = vmatprep.subr.bf16.mxu0 0
        %1845 = vmatpush1.bf16.xpose.msra.mxu0 0
        %1846 = vmatprep.subr.bf16.mxu0 0
        %1847 = vmatpush1.bf16.xpose.msra.mxu0 0
        %1848 = vmatprep.subr.bf16.mxu0 0
        %1849 = vmatpush1.bf16.xpose.msra.mxu0 0
        %1850 = vmatprep.subr.bf16.mxu0 0
        %1851 = vmatpush1.bf16.xpose.msra.mxu0 0
        %1852 = vmatprep.subr.bf16.mxu0 0
        %1853 = vmatpush1.bf16.xpose.msra.mxu0 0
        %1854 = vmatprep.mubr.bf16.mxu0 0
        %1855 = vmatmul.mubr.bf16.gmra.mrb[0].mxu0 %v1817
        %v1856 = vpop.f32.mrb[0].mxu0
        %v1857 = vadd.f32 0.0, %v1856
        %v1858 = vpop.f32.mrb[0].mxu0
        %v1859 = vpop.f32.mrb[0].mxu0
        %v1860 = vadd.f32 0.0, %v1859
        %v1861 = vpop.f32.mrb[0].mxu0
        %1862 = vdwg.mxu0
        %v1864 = vsel %vm1242, %v1609, 0
        %v1867 = vsel %vm1242, %v1617, 0
        %1869 = vmatprep.subr.bf16.mxu0 0
        %1870 = vmatpush1.bf16.xpose.msra.mxu0 %v1867
        %1871 = vmatprep.subr.bf16.mxu0 0
        %1872 = vmatpush1.bf16.xpose.msra.mxu0 0
        %1873 = vmatprep.subr.bf16.mxu0 0
        %1874 = vmatpush1.bf16.xpose.msra.mxu0 0
        %1875 = vmatprep.subr.bf16.mxu0 0
        %1876 = vmatpush1.bf16.xpose.msra.mxu0 0
        %1877 = vmatprep.subr.bf16.mxu0 0
        %1878 = vmatpush1.bf16.xpose.msra.mxu0 0
        %1879 = vmatprep.subr.bf16.mxu0 0
        %1880 = vmatpush1.bf16.xpose.msra.mxu0 0
        %1881 = vmatprep.subr.bf16.mxu0 0
        %1882 = vmatpush1.bf16.xpose.msra.mxu0 0
        %1883 = vmatprep.subr.bf16.mxu0 0
        %1884 = vmatpush1.bf16.xpose.msra.mxu0 0
        %1885 = vmatprep.subr.bf16.mxu0 0
        %1886 = vmatpush1.bf16.xpose.msra.mxu0 0
        %1887 = vmatprep.subr.bf16.mxu0 0
        %1888 = vmatpush1.bf16.xpose.msra.mxu0 0
        %1889 = vmatprep.subr.bf16.mxu0 0
        %1890 = vmatpush1.bf16.xpose.msra.mxu0 0
        %1891 = vmatprep.subr.bf16.mxu0 0
        %1892 = vmatpush1.bf16.xpose.msra.mxu0 0
        %1893 = vmatprep.subr.bf16.mxu0 0
        %1894 = vmatpush1.bf16.xpose.msra.mxu0 0
        %1895 = vmatprep.subr.bf16.mxu0 0
        %1896 = vmatpush1.bf16.xpose.msra.mxu0 0
        %1897 = vmatprep.subr.bf16.mxu0 0
        %1898 = vmatpush1.bf16.xpose.msra.mxu0 0
        %1899 = vmatprep.subr.bf16.mxu0 0
        %1900 = vmatpush1.bf16.xpose.msra.mxu0 0
        %1901 = vmatprep.mubr.bf16.mxu0 0
        %1902 = vmatmul.mubr.bf16.gmra.mrb[0].mxu0 %v1864
        %v1903 = vpop.f32.mrb[0].mxu0
        %v1904 = vadd.f32 0.0, %v1903
        %v1905 = vpop.f32.mrb[0].mxu0
        %v1906 = vpop.f32.mrb[0].mxu0
        %v1907 = vadd.f32 0.0, %v1906
        %v1908 = vpop.f32.mrb[0].mxu0
        %1909 = vdwg.mxu0
        %v1911 = vsel %vm1242, %v1610, 0
        %v1914 = vsel %vm1242, %v1618, 0
        %1916 = vmatprep.subr.bf16.mxu0 0
        %1917 = vmatpush1.bf16.xpose.msra.mxu0 %v1914
        %1918 = vmatprep.subr.bf16.mxu0 0
        %1919 = vmatpush1.bf16.xpose.msra.mxu0 0
        %1920 = vmatprep.subr.bf16.mxu0 0
        %1921 = vmatpush1.bf16.xpose.msra.mxu0 0
        %1922 = vmatprep.subr.bf16.mxu0 0
        %1923 = vmatpush1.bf16.xpose.msra.mxu0 0
        %1924 = vmatprep.subr.bf16.mxu0 0
        %1925 = vmatpush1.bf16.xpose.msra.mxu0 0
        %1926 = vmatprep.subr.bf16.mxu0 0
        %1927 = vmatpush1.bf16.xpose.msra.mxu0 0
        %1928 = vmatprep.subr.bf16.mxu0 0
        %1929 = vmatpush1.bf16.xpose.msra.mxu0 0
        %1930 = vmatprep.subr.bf16.mxu0 0
        %1931 = vmatpush1.bf16.xpose.msra.mxu0 0
        %1932 = vmatprep.subr.bf16.mxu0 0
        %1933 = vmatpush1.bf16.xpose.msra.mxu0 0
        %1934 = vmatprep.subr.bf16.mxu0 0
        %1935 = vmatpush1.bf16.xpose.msra.mxu0 0
        %1936 = vmatprep.subr.bf16.mxu0 0
        %1937 = vmatpush1.bf16.xpose.msra.mxu0 0
        %1938 = vmatprep.subr.bf16.mxu0 0
        %1939 = vmatpush1.bf16.xpose.msra.mxu0 0
        %1940 = vmatprep.subr.bf16.mxu0 0
        %1941 = vmatpush1.bf16.xpose.msra.mxu0 0
        %1942 = vmatprep.subr.bf16.mxu0 0
        %1943 = vmatpush1.bf16.xpose.msra.mxu0 0
        %1944 = vmatprep.subr.bf16.mxu0 0
        %1945 = vmatpush1.bf16.xpose.msra.mxu0 0
        %1946 = vmatprep.subr.bf16.mxu0 0
        %1947 = vmatpush1.bf16.xpose.msra.mxu0 0
        %1948 = vmatprep.mubr.bf16.mxu0 0
        %1949 = vmatmul.mubr.bf16.gmra.mrb[0].mxu0 %v1911
        %v1950 = vpop.f32.mrb[0].mxu0
        %v1951 = vadd.f32 0.0, %v1950
        %v1952 = vpop.f32.mrb[0].mxu0
        %v1953 = vpop.f32.mrb[0].mxu0
        %v1954 = vadd.f32 0.0, %v1953
        %v1955 = vpop.f32.mrb[0].mxu0
        %1956 = vdwg.mxu0
        %v1958 = vsel %vm1242, %v1611, 0
        %v1961 = vsel %vm1242, %v1619, 0
        %1963 = vmatprep.subr.bf16.mxu0 0
        %1964 = vmatpush1.bf16.xpose.msra.mxu0 %v1961
        %1965 = vmatprep.subr.bf16.mxu0 0
        %1966 = vmatpush1.bf16.xpose.msra.mxu0 0
        %1967 = vmatprep.subr.bf16.mxu0 0
        %1968 = vmatpush1.bf16.xpose.msra.mxu0 0
        %1969 = vmatprep.subr.bf16.mxu0 0
        %1970 = vmatpush1.bf16.xpose.msra.mxu0 0
        %1971 = vmatprep.subr.bf16.mxu0 0
        %1972 = vmatpush1.bf16.xpose.msra.mxu0 0
        %1973 = vmatprep.subr.bf16.mxu0 0
        %1974 = vmatpush1.bf16.xpose.msra.mxu0 0
        %1975 = vmatprep.subr.bf16.mxu0 0
        %1976 = vmatpush1.bf16.xpose.msra.mxu0 0
        %1977 = vmatprep.subr.bf16.mxu0 0
        %1978 = vmatpush1.bf16.xpose.msra.mxu0 0
        %1979 = vmatprep.subr.bf16.mxu0 0
        %1980 = vmatpush1.bf16.xpose.msra.mxu0 0
        %1981 = vmatprep.subr.bf16.mxu0 0
        %1982 = vmatpush1.bf16.xpose.msra.mxu0 0
        %1983 = vmatprep.subr.bf16.mxu0 0
        %1984 = vmatpush1.bf16.xpose.msra.mxu0 0
        %1985 = vmatprep.subr.bf16.mxu0 0
        %1986 = vmatpush1.bf16.xpose.msra.mxu0 0
        %1987 = vmatprep.subr.bf16.mxu0 0
        %1988 = vmatpush1.bf16.xpose.msra.mxu0 0
        %1989 = vmatprep.subr.bf16.mxu0 0
        %1990 = vmatpush1.bf16.xpose.msra.mxu0 0
        %1991 = vmatprep.subr.bf16.mxu0 0
        %1992 = vmatpush1.bf16.xpose.msra.mxu0 0
        %1993 = vmatprep.subr.bf16.mxu0 0
        %1994 = vmatpush1.bf16.xpose.msra.mxu0 0
        %1995 = vmatprep.mubr.bf16.mxu0 0
        %1996 = vmatmul.mubr.bf16.gmra.mrb[0].mxu0 %v1958
        %v1997 = vpop.f32.mrb[0].mxu0
        %v1998 = vadd.f32 0.0, %v1997
        %v1999 = vpop.f32.mrb[0].mxu0
        %v2000 = vpop.f32.mrb[0].mxu0
        %v2001 = vadd.f32 0.0, %v2000
        %v2002 = vpop.f32.mrb[0].mxu0
        %2003 = vdwg.mxu0
        %v2004 = vmul.f32 %v1669, 0.17677669
        %v2005 = vmul.f32 %v1672, 0.17677669
        %v2006 = vmul.f32 %v1716, 0.17677669
        %v2007 = vmul.f32 %v1719, 0.17677669
        %v2008 = vmul.f32 %v1763, 0.17677669
        %v2009 = vmul.f32 %v1766, 0.17677669
        %v2010 = vmul.f32 %v1810, 0.17677669
        %v2011 = vmul.f32 %v1813, 0.17677669
        %v2012 = vmul.f32 %v1857, 0.17677669
        %v2013 = vmul.f32 %v1860, 0.17677669
        %v2014 = vmul.f32 %v1904, 0.17677669
        %v2015 = vmul.f32 %v1907, 0.17677669
        %v2016 = vmul.f32 %v1951, 0.17677669
        %v2017 = vmul.f32 %v1954, 0.17677669
        %v2018 = vmul.f32 %v1998, 0.17677669
        %v2019 = vmul.f32 %v2001, 0.17677669
        %vm2020 = vcmask 130048
        %v2021 = vsel %vm2020, %v2004, -inf
        %2022 = vmax.xlane.f32.xlu0 %v2021
        %v2023 = vpop.xlane.xlu0 %2022
        %v2024 = vsel %vm2020, %v2005, -inf
        %2025 = vmax.xlane.f32.xlu0 %v2024
        %v2026 = vpop.xlane.xlu0 %2025
        %v2027 = vsel %vm2020, %v2006, -inf
        %2028 = vmax.xlane.f32.xlu0 %v2027
        %v2029 = vpop.xlane.xlu0 %2028
        %v2030 = vsel %vm2020, %v2007, -inf
        %2031 = vmax.xlane.f32.xlu0 %v2030
        %v2032 = vpop.xlane.xlu0 %2031
        %v2033 = vsel %vm2020, %v2008, -inf
        %2034 = vmax.xlane.f32.xlu0 %v2033
        %v2035 = vpop.xlane.xlu0 %2034
        %v2036 = vsel %vm2020, %v2009, -inf
        %2037 = vmax.xlane.f32.xlu0 %v2036
        %v2038 = vpop.xlane.xlu0 %2037
        %v2039 = vsel %vm2020, %v2010, -inf
        %2040 = vmax.xlane.f32.xlu0 %v2039
        %v2041 = vpop.xlane.xlu0 %2040
        %v2042 = vsel %vm2020, %v2011, -inf
        %2043 = vmax.xlane.f32.xlu0 %v2042
        %v2044 = vpop.xlane.xlu0 %2043
        %v2045 = vsel %vm2020, %v2012, -inf
        %2046 = vmax.xlane.f32.xlu0 %v2045
        %v2047 = vpop.xlane.xlu0 %2046
        %v2048 = vsel %vm2020, %v2013, -inf
        %2049 = vmax.xlane.f32.xlu0 %v2048
        %v2050 = vpop.xlane.xlu0 %2049
        %v2051 = vsel %vm2020, %v2014, -inf
        %2052 = vmax.xlane.f32.xlu0 %v2051
        %v2053 = vpop.xlane.xlu0 %2052
        %v2054 = vsel %vm2020, %v2015, -inf
        %2055 = vmax.xlane.f32.xlu0 %v2054
        %v2056 = vpop.xlane.xlu0 %2055
        %v2057 = vsel %vm2020, %v2016, -inf
        %2058 = vmax.xlane.f32.xlu0 %v2057
        %v2059 = vpop.xlane.xlu0 %2058
        %v2060 = vsel %vm2020, %v2017, -inf
        %2061 = vmax.xlane.f32.xlu0 %v2060
        %v2062 = vpop.xlane.xlu0 %2061
        %v2063 = vsel %vm2020, %v2018, -inf
        %2064 = vmax.xlane.f32.xlu0 %v2063
        %v2065 = vpop.xlane.xlu0 %2064
        %v2066 = vsel %vm2020, %v2019, -inf
        %2067 = vmax.xlane.f32.xlu0 %v2066
        %v2068 = vpop.xlane.xlu0 %2067
        %v2069 = vsub.f32 %v2004, %v2023
        %v2070 = vsub.f32 %v2005, %v2026
        %v2071 = vsub.f32 %v2006, %v2029
        %v2072 = vsub.f32 %v2007, %v2032
        %v2073 = vsub.f32 %v2008, %v2035
        %v2074 = vsub.f32 %v2009, %v2038
        %v2075 = vsub.f32 %v2010, %v2041
        %v2076 = vsub.f32 %v2011, %v2044
        %v2077 = vsub.f32 %v2012, %v2047
        %v2078 = vsub.f32 %v2013, %v2050
        %v2079 = vsub.f32 %v2014, %v2053
        %v2080 = vsub.f32 %v2015, %v2056
        %v2081 = vsub.f32 %v2016, %v2059
        %v2082 = vsub.f32 %v2017, %v2062
        %v2083 = vsub.f32 %v2018, %v2065
        %v2084 = vsub.f32 %v2019, %v2068
        %v2085 = vmul.f32 %v2069, 1.442695
        %v2086 = vpow.pop %v2085
        %v2087 = vmul.f32 %v2070, 1.442695
        %v2088 = vpow.pop %v2087
        %v2089 = vmul.f32 %v2071, 1.442695
        %v2090 = vpow.pop %v2089
        %v2091 = vmul.f32 %v2072, 1.442695
        %v2092 = vpow.pop %v2091
        %v2093 = vmul.f32 %v2073, 1.442695
        %v2094 = vpow.pop %v2093
        %v2095 = vmul.f32 %v2074, 1.442695
        %v2096 = vpow.pop %v2095
        %v2097 = vmul.f32 %v2075, 1.442695
        %v2098 = vpow.pop %v2097
        %v2099 = vmul.f32 %v2076, 1.442695
        %v2100 = vpow.pop %v2099
        %v2101 = vmul.f32 %v2077, 1.442695
        %v2102 = vpow.pop %v2101
        %v2103 = vmul.f32 %v2078, 1.442695
        %v2104 = vpow.pop %v2103
        %v2105 = vmul.f32 %v2079, 1.442695
        %v2106 = vpow.pop %v2105
        %v2107 = vmul.f32 %v2080, 1.442695
        %v2108 = vpow.pop %v2107
        %v2109 = vmul.f32 %v2081, 1.442695
        %v2110 = vpow.pop %v2109
        %v2111 = vmul.f32 %v2082, 1.442695
        %v2112 = vpow.pop %v2111
        %v2113 = vmul.f32 %v2083, 1.442695
        %v2114 = vpow.pop %v2113
        %v2115 = vmul.f32 %v2084, 1.442695
        %v2116 = vpow.pop %v2115
        %v2117 = vsel %vm2020, %v2086, 0.0
        %2118 = vadd.xlane.f32.xlu0 %v2117
        %v2119 = vpop.xlane.xlu0 %2118
        %v2120 = vsel %vm2020, %v2088, 0.0
        %2121 = vadd.xlane.f32.xlu0 %v2120
        %v2122 = vpop.xlane.xlu0 %2121
        %v2123 = vsel %vm2020, %v2090, 0.0
        %2124 = vadd.xlane.f32.xlu0 %v2123
        %v2125 = vpop.xlane.xlu0 %2124
        %v2126 = vsel %vm2020, %v2092, 0.0
        %2127 = vadd.xlane.f32.xlu0 %v2126
        %v2128 = vpop.xlane.xlu0 %2127
        %v2129 = vsel %vm2020, %v2094, 0.0
        %2130 = vadd.xlane.f32.xlu0 %v2129
        %v2131 = vpop.xlane.xlu0 %2130
        %v2132 = vsel %vm2020, %v2096, 0.0
        %2133 = vadd.xlane.f32.xlu0 %v2132
        %v2134 = vpop.xlane.xlu0 %2133
        %v2135 = vsel %vm2020, %v2098, 0.0
        %2136 = vadd.xlane.f32.xlu0 %v2135
        %v2137 = vpop.xlane.xlu0 %2136
        %v2138 = vsel %vm2020, %v2100, 0.0
        %2139 = vadd.xlane.f32.xlu0 %v2138
        %v2140 = vpop.xlane.xlu0 %2139
        %v2141 = vsel %vm2020, %v2102, 0.0
        %2142 = vadd.xlane.f32.xlu0 %v2141
        %v2143 = vpop.xlane.xlu0 %2142
        %v2144 = vsel %vm2020, %v2104, 0.0
        %2145 = vadd.xlane.f32.xlu0 %v2144
        %v2146 = vpop.xlane.xlu0 %2145
        %v2147 = vsel %vm2020, %v2106, 0.0
        %2148 = vadd.xlane.f32.xlu0 %v2147
        %v2149 = vpop.xlane.xlu0 %2148
        %v2150 = vsel %vm2020, %v2108, 0.0
        %2151 = vadd.xlane.f32.xlu0 %v2150
        %v2152 = vpop.xlane.xlu0 %2151
        %v2153 = vsel %vm2020, %v2110, 0.0
        %2154 = vadd.xlane.f32.xlu0 %v2153
        %v2155 = vpop.xlane.xlu0 %2154
        %v2156 = vsel %vm2020, %v2112, 0.0
        %2157 = vadd.xlane.f32.xlu0 %v2156
        %v2158 = vpop.xlane.xlu0 %2157
        %v2159 = vsel %vm2020, %v2114, 0.0
        %2160 = vadd.xlane.f32.xlu0 %v2159
        %v2161 = vpop.xlane.xlu0 %2160
        %v2162 = vsel %vm2020, %v2116, 0.0
        %2163 = vadd.xlane.f32.xlu0 %v2162
        %v2164 = vpop.xlane.xlu0 %2163
        %v2165 = vrcp.pop %v2119
        %v2166 = vrcp.pop %v2122
        %v2167 = vrcp.pop %v2125
        %v2168 = vrcp.pop %v2128
        %v2169 = vrcp.pop %v2131
        %v2170 = vrcp.pop %v2134
        %v2171 = vrcp.pop %v2137
        %v2172 = vrcp.pop %v2140
        %v2173 = vrcp.pop %v2143
        %v2174 = vrcp.pop %v2146
        %v2175 = vrcp.pop %v2149
        %v2176 = vrcp.pop %v2152
        %v2177 = vrcp.pop %v2155
        %v2178 = vrcp.pop %v2158
        %v2179 = vrcp.pop %v2161
        %v2180 = vrcp.pop %v2164
        %v2181 = vmul.f32 %v2086, %v2165
        %v2182 = vmul.f32 %v2088, %v2166
        %v2183 = vmul.f32 %v2090, %v2167
        %v2184 = vmul.f32 %v2092, %v2168
        %v2185 = vmul.f32 %v2094, %v2169
        %v2186 = vmul.f32 %v2096, %v2170
        %v2187 = vmul.f32 %v2098, %v2171
        %v2188 = vmul.f32 %v2100, %v2172
        %v2189 = vmul.f32 %v2102, %v2173
        %v2190 = vmul.f32 %v2104, %v2174
        %v2191 = vmul.f32 %v2106, %v2175
        %v2192 = vmul.f32 %v2108, %v2176
        %v2193 = vmul.f32 %v2110, %v2177
        %v2194 = vmul.f32 %v2112, %v2178
        %v2195 = vmul.f32 %v2114, %v2179
        %v2196 = vmul.f32 %v2116, %v2180
        %v2197 = vpack.c.bf16 %v2182, %v2181
        %v2198 = vpack.c.bf16 %v2184, %v2183
        %v2199 = vpack.c.bf16 %v2186, %v2185
        %v2200 = vpack.c.bf16 %v2188, %v2187
        %v2201 = vpack.c.bf16 %v2190, %v2189
        %v2202 = vpack.c.bf16 %v2192, %v2191
        %v2203 = vpack.c.bf16 %v2194, %v2193
        %v2204 = vpack.c.bf16 %v2196, %v2195
        %v2206 = vsel %vm2020, %v2197, 0
        %2208 = vmatprep.subr.bf16.mxu0 0
        %2209 = vmatpush1.bf16.msra.mxu0 %v1620
        %2210 = vmatprep.subr.bf16.mxu0 0
        %2211 = vmatpush1.bf16.msra.mxu0 0
        %2212 = vmatprep.subr.bf16.mxu0 0
        %2213 = vmatpush1.bf16.msra.mxu0 0
        %2214 = vmatprep.subr.bf16.mxu0 0
        %2215 = vmatpush1.bf16.msra.mxu0 0
        %2216 = vmatprep.subr.bf16.mxu0 0
        %2217 = vmatpush1.bf16.msra.mxu0 0
        %2218 = vmatprep.subr.bf16.mxu0 0
        %2219 = vmatpush1.bf16.msra.mxu0 0
        %2220 = vmatprep.subr.bf16.mxu0 0
        %2221 = vmatpush1.bf16.msra.mxu0 0
        %2222 = vmatprep.subr.bf16.mxu0 0
        %2223 = vmatpush1.bf16.msra.mxu0 0
        %2224 = vmatprep.subr.bf16.mxu0 0
        %2225 = vmatpush1.bf16.msra.mxu0 0
        %2226 = vmatprep.subr.bf16.mxu0 0
        %2227 = vmatpush1.bf16.msra.mxu0 0
        %2228 = vmatprep.subr.bf16.mxu0 0
        %2229 = vmatpush1.bf16.msra.mxu0 0
        %2230 = vmatprep.subr.bf16.mxu0 0
        %2231 = vmatpush1.bf16.msra.mxu0 0
        %2232 = vmatprep.subr.bf16.mxu0 0
        %2233 = vmatpush1.bf16.msra.mxu0 0
        %2234 = vmatprep.subr.bf16.mxu0 0
        %2235 = vmatpush1.bf16.msra.mxu0 0
        %2236 = vmatprep.subr.bf16.mxu0 0
        %2237 = vmatpush1.bf16.msra.mxu0 0
        %2238 = vmatprep.subr.bf16.mxu0 0
        %2239 = vmatpush1.bf16.msra.mxu0 0
        %2240 = vmatprep.mubr.bf16.mxu0 0
        %2241 = vmatmul.mubr.bf16.gmra.mrb[0].mxu0 %v2206
        %v2242 = vpop.f32.mrb[0].mxu0
        %v2243 = vadd.f32 0.0, %v2242
        %v2244 = vpop.f32.mrb[0].mxu0
        %v2245 = vpop.f32.mrb[0].mxu0
        %v2246 = vadd.f32 0.0, %v2245
        %v2247 = vpop.f32.mrb[0].mxu0
        %2248 = vdwg.mxu0
        %v2250 = vsel %vm2020, %v2198, 0
        %2252 = vmatprep.subr.bf16.mxu0 0
        %2253 = vmatpush1.bf16.msra.mxu0 %v1621
        %2254 = vmatprep.subr.bf16.mxu0 0
        %2255 = vmatpush1.bf16.msra.mxu0 0
        %2256 = vmatprep.subr.bf16.mxu0 0
        %2257 = vmatpush1.bf16.msra.mxu0 0
        %2258 = vmatprep.subr.bf16.mxu0 0
        %2259 = vmatpush1.bf16.msra.mxu0 0
        %2260 = vmatprep.subr.bf16.mxu0 0
        %2261 = vmatpush1.bf16.msra.mxu0 0
        %2262 = vmatprep.subr.bf16.mxu0 0
        %2263 = vmatpush1.bf16.msra.mxu0 0
        %2264 = vmatprep.subr.bf16.mxu0 0
        %2265 = vmatpush1.bf16.msra.mxu0 0
        %2266 = vmatprep.subr.bf16.mxu0 0
        %2267 = vmatpush1.bf16.msra.mxu0 0
        %2268 = vmatprep.subr.bf16.mxu0 0
        %2269 = vmatpush1.bf16.msra.mxu0 0
        %2270 = vmatprep.subr.bf16.mxu0 0
        %2271 = vmatpush1.bf16.msra.mxu0 0
        %2272 = vmatprep.subr.bf16.mxu0 0
        %2273 = vmatpush1.bf16.msra.mxu0 0
        %2274 = vmatprep.subr.bf16.mxu0 0
        %2275 = vmatpush1.bf16.msra.mxu0 0
        %2276 = vmatprep.subr.bf16.mxu0 0
        %2277 = vmatpush1.bf16.msra.mxu0 0
        %2278 = vmatprep.subr.bf16.mxu0 0
        %2279 = vmatpush1.bf16.msra.mxu0 0
        %2280 = vmatprep.subr.bf16.mxu0 0
        %2281 = vmatpush1.bf16.msra.mxu0 0
        %2282 = vmatprep.subr.bf16.mxu0 0
        %2283 = vmatpush1.bf16.msra.mxu0 0
        %2284 = vmatprep.mubr.bf16.mxu0 0
        %2285 = vmatmul.mubr.bf16.gmra.mrb[0].mxu0 %v2250
        %v2286 = vpop.f32.mrb[0].mxu0
        %v2287 = vadd.f32 0.0, %v2286
        %v2288 = vpop.f32.mrb[0].mxu0
        %v2289 = vpop.f32.mrb[0].mxu0
        %v2290 = vadd.f32 0.0, %v2289
        %v2291 = vpop.f32.mrb[0].mxu0
        %2292 = vdwg.mxu0
        %v2294 = vsel %vm2020, %v2199, 0
        %2296 = vmatprep.subr.bf16.mxu0 0
        %2297 = vmatpush1.bf16.msra.mxu0 %v1622
        %2298 = vmatprep.subr.bf16.mxu0 0
        %2299 = vmatpush1.bf16.msra.mxu0 0
        %2300 = vmatprep.subr.bf16.mxu0 0
        %2301 = vmatpush1.bf16.msra.mxu0 0
        %2302 = vmatprep.subr.bf16.mxu0 0
        %2303 = vmatpush1.bf16.msra.mxu0 0
        %2304 = vmatprep.subr.bf16.mxu0 0
        %2305 = vmatpush1.bf16.msra.mxu0 0
        %2306 = vmatprep.subr.bf16.mxu0 0
        %2307 = vmatpush1.bf16.msra.mxu0 0
        %2308 = vmatprep.subr.bf16.mxu0 0
        %2309 = vmatpush1.bf16.msra.mxu0 0
        %2310 = vmatprep.subr.bf16.mxu0 0
        %2311 = vmatpush1.bf16.msra.mxu0 0
        %2312 = vmatprep.subr.bf16.mxu0 0
        %2313 = vmatpush1.bf16.msra.mxu0 0
        %2314 = vmatprep.subr.bf16.mxu0 0
        %2315 = vmatpush1.bf16.msra.mxu0 0
        %2316 = vmatprep.subr.bf16.mxu0 0
        %2317 = vmatpush1.bf16.msra.mxu0 0
        %2318 = vmatprep.subr.bf16.mxu0 0
        %2319 = vmatpush1.bf16.msra.mxu0 0
        %2320 = vmatprep.subr.bf16.mxu0 0
        %2321 = vmatpush1.bf16.msra.mxu0 0
        %2322 = vmatprep.subr.bf16.mxu0 0
        %2323 = vmatpush1.bf16.msra.mxu0 0
        %2324 = vmatprep.subr.bf16.mxu0 0
        %2325 = vmatpush1.bf16.msra.mxu0 0
        %2326 = vmatprep.subr.bf16.mxu0 0
        %2327 = vmatpush1.bf16.msra.mxu0 0
        %2328 = vmatprep.mubr.bf16.mxu0 0
        %2329 = vmatmul.mubr.bf16.gmra.mrb[0].mxu0 %v2294
        %v2330 = vpop.f32.mrb[0].mxu0
        %v2331 = vadd.f32 0.0, %v2330
        %v2332 = vpop.f32.mrb[0].mxu0
        %v2333 = vpop.f32.mrb[0].mxu0
        %v2334 = vadd.f32 0.0, %v2333
        %v2335 = vpop.f32.mrb[0].mxu0
        %2336 = vdwg.mxu0
        %v2338 = vsel %vm2020, %v2200, 0
        %2340 = vmatprep.subr.bf16.mxu0 0
        %2341 = vmatpush1.bf16.msra.mxu0 %v1623
        %2342 = vmatprep.subr.bf16.mxu0 0
        %2343 = vmatpush1.bf16.msra.mxu0 0
        %2344 = vmatprep.subr.bf16.mxu0 0
        %2345 = vmatpush1.bf16.msra.mxu0 0
        %2346 = vmatprep.subr.bf16.mxu0 0
        %2347 = vmatpush1.bf16.msra.mxu0 0
        %2348 = vmatprep.subr.bf16.mxu0 0
        %2349 = vmatpush1.bf16.msra.mxu0 0
        %2350 = vmatprep.subr.bf16.mxu0 0
        %2351 = vmatpush1.bf16.msra.mxu0 0
        %2352 = vmatprep.subr.bf16.mxu0 0
        %2353 = vmatpush1.bf16.msra.mxu0 0
        %2354 = vmatprep.subr.bf16.mxu0 0
        %2355 = vmatpush1.bf16.msra.mxu0 0
        %2356 = vmatprep.subr.bf16.mxu0 0
        %2357 = vmatpush1.bf16.msra.mxu0 0
        %2358 = vmatprep.subr.bf16.mxu0 0
        %2359 = vmatpush1.bf16.msra.mxu0 0
        %2360 = vmatprep.subr.bf16.mxu0 0
        %2361 = vmatpush1.bf16.msra.mxu0 0
        %2362 = vmatprep.subr.bf16.mxu0 0
        %2363 = vmatpush1.bf16.msra.mxu0 0
        %2364 = vmatprep.subr.bf16.mxu0 0
        %2365 = vmatpush1.bf16.msra.mxu0 0
        %2366 = vmatprep.subr.bf16.mxu0 0
        %2367 = vmatpush1.bf16.msra.mxu0 0
        %2368 = vmatprep.subr.bf16.mxu0 0
        %2369 = vmatpush1.bf16.msra.mxu0 0
        %2370 = vmatprep.subr.bf16.mxu0 0
        %2371 = vmatpush1.bf16.msra.mxu0 0
        %2372 = vmatprep.mubr.bf16.mxu0 0
        %2373 = vmatmul.mubr.bf16.gmra.mrb[0].mxu0 %v2338
        %v2374 = vpop.f32.mrb[0].mxu0
        %v2375 = vadd.f32 0.0, %v2374
        %v2376 = vpop.f32.mrb[0].mxu0
        %v2377 = vpop.f32.mrb[0].mxu0
        %v2378 = vadd.f32 0.0, %v2377
        %v2379 = vpop.f32.mrb[0].mxu0
        %2380 = vdwg.mxu0
        %v2382 = vsel %vm2020, %v2201, 0
        %2384 = vmatprep.subr.bf16.mxu0 0
        %2385 = vmatpush1.bf16.msra.mxu0 %v1624
        %2386 = vmatprep.subr.bf16.mxu0 0
        %2387 = vmatpush1.bf16.msra.mxu0 0
        %2388 = vmatprep.subr.bf16.mxu0 0
        %2389 = vmatpush1.bf16.msra.mxu0 0
        %2390 = vmatprep.subr.bf16.mxu0 0
        %2391 = vmatpush1.bf16.msra.mxu0 0
        %2392 = vmatprep.subr.bf16.mxu0 0
        %2393 = vmatpush1.bf16.msra.mxu0 0
        %2394 = vmatprep.subr.bf16.mxu0 0
        %2395 = vmatpush1.bf16.msra.mxu0 0
        %2396 = vmatprep.subr.bf16.mxu0 0
        %2397 = vmatpush1.bf16.msra.mxu0 0
        %2398 = vmatprep.subr.bf16.mxu0 0
        %2399 = vmatpush1.bf16.msra.mxu0 0
        %2400 = vmatprep.subr.bf16.mxu0 0
        %2401 = vmatpush1.bf16.msra.mxu0 0
        %2402 = vmatprep.subr.bf16.mxu0 0
        %2403 = vmatpush1.bf16.msra.mxu0 0
        %2404 = vmatprep.subr.bf16.mxu0 0
        %2405 = vmatpush1.bf16.msra.mxu0 0
        %2406 = vmatprep.subr.bf16.mxu0 0
        %2407 = vmatpush1.bf16.msra.mxu0 0
        %2408 = vmatprep.subr.bf16.mxu0 0
        %2409 = vmatpush1.bf16.msra.mxu0 0
        %2410 = vmatprep.subr.bf16.mxu0 0
        %2411 = vmatpush1.bf16.msra.mxu0 0
        %2412 = vmatprep.subr.bf16.mxu0 0
        %2413 = vmatpush1.bf16.msra.mxu0 0
        %2414 = vmatprep.subr.bf16.mxu0 0
        %2415 = vmatpush1.bf16.msra.mxu0 0
        %2416 = vmatprep.mubr.bf16.mxu0 0
        %2417 = vmatmul.mubr.bf16.gmra.mrb[0].mxu0 %v2382
        %v2418 = vpop.f32.mrb[0].mxu0
        %v2419 = vadd.f32 0.0, %v2418
        %v2420 = vpop.f32.mrb[0].mxu0
        %v2421 = vpop.f32.mrb[0].mxu0
        %v2422 = vadd.f32 0.0, %v2421
        %v2423 = vpop.f32.mrb[0].mxu0
        %2424 = vdwg.mxu0
        %v2426 = vsel %vm2020, %v2202, 0
        %2428 = vmatprep.subr.bf16.mxu0 0
        %2429 = vmatpush1.bf16.msra.mxu0 %v1625
        %2430 = vmatprep.subr.bf16.mxu0 0
        %2431 = vmatpush1.bf16.msra.mxu0 0
        %2432 = vmatprep.subr.bf16.mxu0 0
        %2433 = vmatpush1.bf16.msra.mxu0 0
        %2434 = vmatprep.subr.bf16.mxu0 0
        %2435 = vmatpush1.bf16.msra.mxu0 0
        %2436 = vmatprep.subr.bf16.mxu0 0
        %2437 = vmatpush1.bf16.msra.mxu0 0
        %2438 = vmatprep.subr.bf16.mxu0 0
        %2439 = vmatpush1.bf16.msra.mxu0 0
        %2440 = vmatprep.subr.bf16.mxu0 0
        %2441 = vmatpush1.bf16.msra.mxu0 0
        %2442 = vmatprep.subr.bf16.mxu0 0
        %2443 = vmatpush1.bf16.msra.mxu0 0
        %2444 = vmatprep.subr.bf16.mxu0 0
        %2445 = vmatpush1.bf16.msra.mxu0 0
        %2446 = vmatprep.subr.bf16.mxu0 0
        %2447 = vmatpush1.bf16.msra.mxu0 0
        %2448 = vmatprep.subr.bf16.mxu0 0
        %2449 = vmatpush1.bf16.msra.mxu0 0
        %2450 = vmatprep.subr.bf16.mxu0 0
        %2451 = vmatpush1.bf16.msra.mxu0 0
        %2452 = vmatprep.subr.bf16.mxu0 0
        %2453 = vmatpush1.bf16.msra.mxu0 0
        %2454 = vmatprep.subr.bf16.mxu0 0
        %2455 = vmatpush1.bf16.msra.mxu0 0
        %2456 = vmatprep.subr.bf16.mxu0 0
        %2457 = vmatpush1.bf16.msra.mxu0 0
        %2458 = vmatprep.subr.bf16.mxu0 0
        %2459 = vmatpush1.bf16.msra.mxu0 0
        %2460 = vmatprep.mubr.bf16.mxu0 0
        %2461 = vmatmul.mubr.bf16.gmra.mrb[0].mxu0 %v2426
        %v2462 = vpop.f32.mrb[0].mxu0
        %v2463 = vadd.f32 0.0, %v2462
        %v2464 = vpop.f32.mrb[0].mxu0
        %v2465 = vpop.f32.mrb[0].mxu0
        %v2466 = vadd.f32 0.0, %v2465
        %v2467 = vpop.f32.mrb[0].mxu0
        %2468 = vdwg.mxu0
        %v2470 = vsel %vm2020, %v2203, 0
        %2472 = vmatprep.subr.bf16.mxu0 0
        %2473 = vmatpush1.bf16.msra.mxu0 %v1626
        %2474 = vmatprep.subr.bf16.mxu0 0
        %2475 = vmatpush1.bf16.msra.mxu0 0
        %2476 = vmatprep.subr.bf16.mxu0 0
        %2477 = vmatpush1.bf16.msra.mxu0 0
        %2478 = vmatprep.subr.bf16.mxu0 0
        %2479 = vmatpush1.bf16.msra.mxu0 0
        %2480 = vmatprep.subr.bf16.mxu0 0
        %2481 = vmatpush1.bf16.msra.mxu0 0
        %2482 = vmatprep.subr.bf16.mxu0 0
        %2483 = vmatpush1.bf16.msra.mxu0 0
        %2484 = vmatprep.subr.bf16.mxu0 0
        %2485 = vmatpush1.bf16.msra.mxu0 0
        %2486 = vmatprep.subr.bf16.mxu0 0
        %2487 = vmatpush1.bf16.msra.mxu0 0
        %2488 = vmatprep.subr.bf16.mxu0 0
        %2489 = vmatpush1.bf16.msra.mxu0 0
        %2490 = vmatprep.subr.bf16.mxu0 0
        %2491 = vmatpush1.bf16.msra.mxu0 0
        %2492 = vmatprep.subr.bf16.mxu0 0
        %2493 = vmatpush1.bf16.msra.mxu0 0
        %2494 = vmatprep.subr.bf16.mxu0 0
        %2495 = vmatpush1.bf16.msra.mxu0 0
        %2496 = vmatprep.subr.bf16.mxu0 0
        %2497 = vmatpush1.bf16.msra.mxu0 0
        %2498 = vmatprep.subr.bf16.mxu0 0
        %2499 = vmatpush1.bf16.msra.mxu0 0
        %2500 = vmatprep.subr.bf16.mxu0 0
        %2501 = vmatpush1.bf16.msra.mxu0 0
        %2502 = vmatprep.subr.bf16.mxu0 0
        %2503 = vmatpush1.bf16.msra.mxu0 0
        %2504 = vmatprep.mubr.bf16.mxu0 0
        %2505 = vmatmul.mubr.bf16.gmra.mrb[0].mxu0 %v2470
        %v2506 = vpop.f32.mrb[0].mxu0
        %v2507 = vadd.f32 0.0, %v2506
        %v2508 = vpop.f32.mrb[0].mxu0
        %v2509 = vpop.f32.mrb[0].mxu0
        %v2510 = vadd.f32 0.0, %v2509
        %v2511 = vpop.f32.mrb[0].mxu0
        %2512 = vdwg.mxu0
        %v2514 = vsel %vm2020, %v2204, 0
        %2516 = vmatprep.subr.bf16.mxu0 0
        %2517 = vmatpush1.bf16.msra.mxu0 %v1627
        %2518 = vmatprep.subr.bf16.mxu0 0
        %2519 = vmatpush1.bf16.msra.mxu0 0
        %2520 = vmatprep.subr.bf16.mxu0 0
        %2521 = vmatpush1.bf16.msra.mxu0 0
        %2522 = vmatprep.subr.bf16.mxu0 0
        %2523 = vmatpush1.bf16.msra.mxu0 0
        %2524 = vmatprep.subr.bf16.mxu0 0
        %2525 = vmatpush1.bf16.msra.mxu0 0
        %2526 = vmatprep.subr.bf16.mxu0 0
        %2527 = vmatpush1.bf16.msra.mxu0 0
        %2528 = vmatprep.subr.bf16.mxu0 0
        %2529 = vmatpush1.bf16.msra.mxu0 0
        %2530 = vmatprep.subr.bf16.mxu0 0
        %2531 = vmatpush1.bf16.msra.mxu0 0
        %2532 = vmatprep.subr.bf16.mxu0 0
        %2533 = vmatpush1.bf16.msra.mxu0 0
        %2534 = vmatprep.subr.bf16.mxu0 0
        %2535 = vmatpush1.bf16.msra.mxu0 0
        %2536 = vmatprep.subr.bf16.mxu0 0
        %2537 = vmatpush1.bf16.msra.mxu0 0
        %2538 = vmatprep.subr.bf16.mxu0 0
        %2539 = vmatpush1.bf16.msra.mxu0 0
        %2540 = vmatprep.subr.bf16.mxu0 0
        %2541 = vmatpush1.bf16.msra.mxu0 0
        %2542 = vmatprep.subr.bf16.mxu0 0
        %2543 = vmatpush1.bf16.msra.mxu0 0
        %2544 = vmatprep.subr.bf16.mxu0 0
        %2545 = vmatpush1.bf16.msra.mxu0 0
        %2546 = vmatprep.subr.bf16.mxu0 0
        %2547 = vmatpush1.bf16.msra.mxu0 0
        %2548 = vmatprep.mubr.bf16.mxu0 0
        %2549 = vmatmul.mubr.bf16.gmra.mrb[0].mxu0 %v2514
        %v2550 = vpop.f32.mrb[0].mxu0
        %v2551 = vadd.f32 0.0, %v2550
        %v2552 = vpop.f32.mrb[0].mxu0
        %v2553 = vpop.f32.mrb[0].mxu0
        %v2554 = vadd.f32 0.0, %v2553
        %v2555 = vpop.f32.mrb[0].mxu0
        %2556 = vdwg.mxu0
        %v2557 = vpack.c.bf16 %v2246, %v2243
        %v2558 = vpack.c.bf16 %v2290, %v2287
        %v2559 = vpack.c.bf16 %v2334, %v2331
        %v2560 = vpack.c.bf16 %v2378, %v2375
        %v2561 = vpack.c.bf16 %v2422, %v2419
        %v2562 = vpack.c.bf16 %v2466, %v2463
        %v2563 = vpack.c.bf16 %v2510, %v2507
        %v2564 = vpack.c.bf16 %v2554, %v2551
        %v2565 = vld [vmem:[%s1077] sm:$0xf]
        %v2566 = vld [vmem:[%s1077 + $0x4] sm:$0xf]
        %v2567 = vld [vmem:[%s1077 + $0x8] sm:$0xf]
        %v2568 = vld [vmem:[%s1077 + $0xc] sm:$0xf]
        %v2569 = vld [vmem:[%s1084] sm:$0x1]
        %v2571 = vlaneseq
        %v2572 = vshrl.u32 %v2571, 7
        %v2573 = vsub.s32 0, %v2572
        %v2574 = vrot.slane %v2569, %v2573
        %v2580 = vunpack.c.l.b16 %v2565
        %v2581 = vunpack.c.l.b16 %v2566
        %v2582 = vunpack.c.l.b16 %v2567
        %v2583 = vunpack.c.l.b16 %v2568
        %v2584 = vpack.c.b16 %v2581, %v2580
        %v2585 = vpack.c.b16 %v2583, %v2582
        %v2589 = vsel %vm1242, %v2557, 0
        %v2592 = vsel %vm1242, %v2558, 0
        %v2595 = vsel %vm1242, %v2559, 0
        %v2598 = vsel %vm1242, %v2560, 0
        %v2601 = vsel %vm1242, %v2561, 0
        %v2604 = vsel %vm1242, %v2562, 0
        %v2607 = vsel %vm1242, %v2563, 0
        %v2610 = vsel %vm1242, %v2564, 0
        %2612 = vmatprep.subr.bf16.mxu0 0
        %2613 = vmatpush1.bf16.msra.mxu0 %v2584
        %2614 = vmatprep.subr.bf16.mxu0 0
        %2615 = vmatpush1.bf16.msra.mxu0 %v2585
        %2616 = vmatprep.subr.bf16.mxu0 0
        %2617 = vmatpush1.bf16.msra.mxu0 0
        %2618 = vmatprep.subr.bf16.mxu0 0
        %2619 = vmatpush1.bf16.msra.mxu0 0
        %2620 = vmatprep.subr.bf16.mxu0 0
        %2621 = vmatpush1.bf16.msra.mxu0 0
        %2622 = vmatprep.subr.bf16.mxu0 0
        %2623 = vmatpush1.bf16.msra.mxu0 0
        %2624 = vmatprep.subr.bf16.mxu0 0
        %2625 = vmatpush1.bf16.msra.mxu0 0
        %2626 = vmatprep.subr.bf16.mxu0 0
        %2627 = vmatpush1.bf16.msra.mxu0 0
        %2628 = vmatprep.subr.bf16.mxu0 0
        %2629 = vmatpush1.bf16.msra.mxu0 0
        %2630 = vmatprep.subr.bf16.mxu0 0
        %2631 = vmatpush1.bf16.msra.mxu0 0
        %2632 = vmatprep.subr.bf16.mxu0 0
        %2633 = vmatpush1.bf16.msra.mxu0 0
        %2634 = vmatprep.subr.bf16.mxu0 0
        %2635 = vmatpush1.bf16.msra.mxu0 0
        %2636 = vmatprep.subr.bf16.mxu0 0
        %2637 = vmatpush1.bf16.msra.mxu0 0
        %2638 = vmatprep.subr.bf16.mxu0 0
        %2639 = vmatpush1.bf16.msra.mxu0 0
        %2640 = vmatprep.subr.bf16.mxu0 0
        %2641 = vmatpush1.bf16.msra.mxu0 0
        %2642 = vmatprep.subr.bf16.mxu0 0
        %2643 = vmatpush1.bf16.msra.mxu0 0
        %2644 = vmatprep.mubr.bf16.mxu0 0
        %2645 = vmatmul.mubr.bf16.gmra.mrb[0].mxu0 %v2589
        %v2646 = vpop.f32.mrb[0].mxu0
        %v2647 = vadd.f32 %v2574, %v2646
        %v2648 = vpop.f32.mrb[0].mxu0
        %v2649 = vpop.f32.mrb[0].mxu0
        %v2650 = vadd.f32 %v2574, %v2649
        %v2651 = vpop.f32.mrb[0].mxu0
        %2652 = vmatprep.mubr.bf16.mxu0 0
        %2653 = vmatmul.mubr.bf16.gmra.mrb[0].mxu0 %v2592
        %v2654 = vpop.f32.mrb[0].mxu0
        %v2655 = vadd.f32 %v2574, %v2654
        %v2656 = vpop.f32.mrb[0].mxu0
        %v2657 = vpop.f32.mrb[0].mxu0
        %v2658 = vadd.f32 %v2574, %v2657
        %v2659 = vpop.f32.mrb[0].mxu0
        %2660 = vmatprep.mubr.bf16.mxu0 0
        %2661 = vmatmul.mubr.bf16.gmra.mrb[0].mxu0 %v2595
        %v2662 = vpop.f32.mrb[0].mxu0
        %v2663 = vadd.f32 %v2574, %v2662
        %v2664 = vpop.f32.mrb[0].mxu0
        %v2665 = vpop.f32.mrb[0].mxu0
        %v2666 = vadd.f32 %v2574, %v2665
        %v2667 = vpop.f32.mrb[0].mxu0
        %2668 = vmatprep.mubr.bf16.mxu0 0
        %2669 = vmatmul.mubr.bf16.gmra.mrb[0].mxu0 %v2598
        %v2670 = vpop.f32.mrb[0].mxu0
        %v2671 = vadd.f32 %v2574, %v2670
        %v2672 = vpop.f32.mrb[0].mxu0
        %v2673 = vpop.f32.mrb[0].mxu0
        %v2674 = vadd.f32 %v2574, %v2673
        %v2675 = vpop.f32.mrb[0].mxu0
        %2676 = vmatprep.mubr.bf16.mxu0 0
        %2677 = vmatmul.mubr.bf16.gmra.mrb[0].mxu0 %v2601
        %v2678 = vpop.f32.mrb[0].mxu0
        %v2679 = vadd.f32 %v2574, %v2678
        %v2680 = vpop.f32.mrb[0].mxu0
        %v2681 = vpop.f32.mrb[0].mxu0
        %v2682 = vadd.f32 %v2574, %v2681
        %v2683 = vpop.f32.mrb[0].mxu0
        %2684 = vmatprep.mubr.bf16.mxu0 0
        %2685 = vmatmul.mubr.bf16.gmra.mrb[0].mxu0 %v2604
        %v2686 = vpop.f32.mrb[0].mxu0
        %v2687 = vadd.f32 %v2574, %v2686
        %v2688 = vpop.f32.mrb[0].mxu0
        %v2689 = vpop.f32.mrb[0].mxu0
        %v2690 = vadd.f32 %v2574, %v2689
        %v2691 = vpop.f32.mrb[0].mxu0
        %2692 = vmatprep.mubr.bf16.mxu0 0
        %2693 = vmatmul.mubr.bf16.gmra.mrb[0].mxu0 %v2607
        %v2694 = vpop.f32.mrb[0].mxu0
        %v2695 = vadd.f32 %v2574, %v2694
        %v2696 = vpop.f32.mrb[0].mxu0
        %v2697 = vpop.f32.mrb[0].mxu0
        %v2698 = vadd.f32 %v2574, %v2697
        %v2699 = vpop.f32.mrb[0].mxu0
        %2700 = vmatprep.mubr.bf16.mxu0 0
        %2701 = vmatmul.mubr.bf16.gmra.mrb[0].mxu0 %v2610
        %v2702 = vpop.f32.mrb[0].mxu0
        %v2703 = vadd.f32 %v2574, %v2702
        %v2704 = vpop.f32.mrb[0].mxu0
        %v2705 = vpop.f32.mrb[0].mxu0
        %v2706 = vadd.f32 %v2574, %v2705
        %v2707 = vpop.f32.mrb[0].mxu0
        %2708 = vdwg.mxu0
        %v2709 = vadd.f32 %v1195, %v2647
        %v2710 = vadd.f32 %v1196, %v2650
        %v2711 = vadd.f32 %v1197, %v2655
        %v2712 = vadd.f32 %v1198, %v2658
        %v2713 = vadd.f32 %v1199, %v2663
        %v2714 = vadd.f32 %v1200, %v2666
        %v2715 = vadd.f32 %v1201, %v2671
        %v2716 = vadd.f32 %v1202, %v2674
        %v2717 = vadd.f32 %v1203, %v2679
        %v2718 = vadd.f32 %v1204, %v2682
        %v2719 = vadd.f32 %v1205, %v2687
        %v2720 = vadd.f32 %v1206, %v2690
        %v2721 = vadd.f32 %v1207, %v2695
        %v2722 = vadd.f32 %v1208, %v2698
        %v2723 = vadd.f32 %v1209, %v2703
        %v2724 = vadd.f32 %v1210, %v2706
        %v2725 = vsel %vm1242, %v2709, 0.0
        %2726 = vadd.xlane.f32.xlu0 %v2725
        %v2727 = vpop.xlane.xlu0 %2726
        %v2728 = vsel %vm1242, %v2710, 0.0
        %2729 = vadd.xlane.f32.xlu0 %v2728
        %v2730 = vpop.xlane.xlu0 %2729
        %v2731 = vsel %vm1242, %v2711, 0.0
        %2732 = vadd.xlane.f32.xlu0 %v2731
        %v2733 = vpop.xlane.xlu0 %2732
        %v2734 = vsel %vm1242, %v2712, 0.0
        %2735 = vadd.xlane.f32.xlu0 %v2734
        %v2736 = vpop.xlane.xlu0 %2735
        %v2737 = vsel %vm1242, %v2713, 0.0
        %2738 = vadd.xlane.f32.xlu0 %v2737
        %v2739 = vpop.xlane.xlu0 %2738
        %v2740 = vsel %vm1242, %v2714, 0.0
        %2741 = vadd.xlane.f32.xlu0 %v2740
        %v2742 = vpop.xlane.xlu0 %2741
        %v2743 = vsel %vm1242, %v2715, 0.0
        %2744 = vadd.xlane.f32.xlu0 %v2743
        %v2745 = vpop.xlane.xlu0 %2744
        %v2746 = vsel %vm1242, %v2716, 0.0
        %2747 = vadd.xlane.f32.xlu0 %v2746
        %v2748 = vpop.xlane.xlu0 %2747
        %v2749 = vsel %vm1242, %v2717, 0.0
        %2750 = vadd.xlane.f32.xlu0 %v2749
        %v2751 = vpop.xlane.xlu0 %2750
        %v2752 = vsel %vm1242, %v2718, 0.0
        %2753 = vadd.xlane.f32.xlu0 %v2752
        %v2754 = vpop.xlane.xlu0 %2753
        %v2755 = vsel %vm1242, %v2719, 0.0
        %2756 = vadd.xlane.f32.xlu0 %v2755
        %v2757 = vpop.xlane.xlu0 %2756
        %v2758 = vsel %vm1242, %v2720, 0.0
        %2759 = vadd.xlane.f32.xlu0 %v2758
        %v2760 = vpop.xlane.xlu0 %2759
        %v2761 = vsel %vm1242, %v2721, 0.0
        %2762 = vadd.xlane.f32.xlu0 %v2761
        %v2763 = vpop.xlane.xlu0 %2762
        %v2764 = vsel %vm1242, %v2722, 0.0
        %2765 = vadd.xlane.f32.xlu0 %v2764
        %v2766 = vpop.xlane.xlu0 %2765
        %v2767 = vsel %vm1242, %v2723, 0.0
        %2768 = vadd.xlane.f32.xlu0 %v2767
        %v2769 = vpop.xlane.xlu0 %2768
        %v2770 = vsel %vm1242, %v2724, 0.0
        %2771 = vadd.xlane.f32.xlu0 %v2770
        %v2772 = vpop.xlane.xlu0 %2771
        %v2773 = vrcp.pop 32.0
        %v2774 = vmul.f32 %v2727, %v2773
        %v2775 = vmul.f32 %v2730, %v2773
        %v2776 = vmul.f32 %v2733, %v2773
        %v2777 = vmul.f32 %v2736, %v2773
        %v2778 = vmul.f32 %v2739, %v2773
        %v2779 = vmul.f32 %v2742, %v2773
        %v2780 = vmul.f32 %v2745, %v2773
        %v2781 = vmul.f32 %v2748, %v2773
        %v2782 = vmul.f32 %v2751, %v2773
        %v2783 = vmul.f32 %v2754, %v2773
        %v2784 = vmul.f32 %v2757, %v2773
        %v2785 = vmul.f32 %v2760, %v2773
        %v2786 = vmul.f32 %v2763, %v2773
        %v2787 = vmul.f32 %v2766, %v2773
        %v2788 = vmul.f32 %v2769, %v2773
        %v2789 = vmul.f32 %v2772, %v2773
        %v2790 = vsub.f32 %v2709, %v2774
        %v2791 = vsub.f32 %v2710, %v2775
        %v2792 = vsub.f32 %v2711, %v2776
        %v2793 = vsub.f32 %v2712, %v2777
        %v2794 = vsub.f32 %v2713, %v2778
        %v2795 = vsub.f32 %v2714, %v2779
        %v2796 = vsub.f32 %v2715, %v2780
        %v2797 = vsub.f32 %v2716, %v2781
        %v2798 = vsub.f32 %v2717, %v2782
        %v2799 = vsub.f32 %v2718, %v2783
        %v2800 = vsub.f32 %v2719, %v2784
        %v2801 = vsub.f32 %v2720, %v2785
        %v2802 = vsub.f32 %v2721, %v2786
        %v2803 = vsub.f32 %v2722, %v2787
        %v2804 = vsub.f32 %v2723, %v2788
        %v2805 = vsub.f32 %v2724, %v2789
        %v2806 = vmul.f32 %v2790, %v2790
        %v2807 = vmul.f32 %v2791, %v2791
        %v2808 = vmul.f32 %v2792, %v2792
        %v2809 = vmul.f32 %v2793, %v2793
        %v2810 = vmul.f32 %v2794, %v2794
        %v2811 = vmul.f32 %v2795, %v2795
        %v2812 = vmul.f32 %v2796, %v2796
        %v2813 = vmul.f32 %v2797, %v2797
        %v2814 = vmul.f32 %v2798, %v2798
        %v2815 = vmul.f32 %v2799, %v2799
        %v2816 = vmul.f32 %v2800, %v2800
        %v2817 = vmul.f32 %v2801, %v2801
        %v2818 = vmul.f32 %v2802, %v2802
        %v2819 = vmul.f32 %v2803, %v2803
        %v2820 = vmul.f32 %v2804, %v2804
        %v2821 = vmul.f32 %v2805, %v2805
        %v2822 = vsel %vm1242, %v2806, 0.0
        %2823 = vadd.xlane.f32.xlu0 %v2822
        %v2824 = vpop.xlane.xlu0 %2823
        %v2825 = vsel %vm1242, %v2807, 0.0
        %2826 = vadd.xlane.f32.xlu0 %v2825
        %v2827 = vpop.xlane.xlu0 %2826
        %v2828 = vsel %vm1242, %v2808, 0.0
        %2829 = vadd.xlane.f32.xlu0 %v2828
        %v2830 = vpop.xlane.xlu0 %2829
        %v2831 = vsel %vm1242, %v2809, 0.0
        %2832 = vadd.xlane.f32.xlu0 %v2831
        %v2833 = vpop.xlane.xlu0 %2832
        %v2834 = vsel %vm1242, %v2810, 0.0
        %2835 = vadd.xlane.f32.xlu0 %v2834
        %v2836 = vpop.xlane.xlu0 %2835
        %v2837 = vsel %vm1242, %v2811, 0.0
        %2838 = vadd.xlane.f32.xlu0 %v2837
        %v2839 = vpop.xlane.xlu0 %2838
        %v2840 = vsel %vm1242, %v2812, 0.0
        %2841 = vadd.xlane.f32.xlu0 %v2840
        %v2842 = vpop.xlane.xlu0 %2841
        %v2843 = vsel %vm1242, %v2813, 0.0
        %2844 = vadd.xlane.f32.xlu0 %v2843
        %v2845 = vpop.xlane.xlu0 %2844
        %v2846 = vsel %vm1242, %v2814, 0.0
        %2847 = vadd.xlane.f32.xlu0 %v2846
        %v2848 = vpop.xlane.xlu0 %2847
        %v2849 = vsel %vm1242, %v2815, 0.0
        %2850 = vadd.xlane.f32.xlu0 %v2849
        %v2851 = vpop.xlane.xlu0 %2850
        %v2852 = vsel %vm1242, %v2816, 0.0
        %2853 = vadd.xlane.f32.xlu0 %v2852
        %v2854 = vpop.xlane.xlu0 %2853
        %v2855 = vsel %vm1242, %v2817, 0.0
        %2856 = vadd.xlane.f32.xlu0 %v2855
        %v2857 = vpop.xlane.xlu0 %2856
        %v2858 = vsel %vm1242, %v2818, 0.0
        %2859 = vadd.xlane.f32.xlu0 %v2858
        %v2860 = vpop.xlane.xlu0 %2859
        %v2861 = vsel %vm1242, %v2819, 0.0
        %2862 = vadd.xlane.f32.xlu0 %v2861
        %v2863 = vpop.xlane.xlu0 %2862
        %v2864 = vsel %vm1242, %v2820, 0.0
        %2865 = vadd.xlane.f32.xlu0 %v2864
        %v2866 = vpop.xlane.xlu0 %2865
        %v2867 = vsel %vm1242, %v2821, 0.0
        %2868 = vadd.xlane.f32.xlu0 %v2867
        %v2869 = vpop.xlane.xlu0 %2868
        %v2870 = vmul.f32 %v2824, %v2773
        %v2871 = vmul.f32 %v2827, %v2773
        %v2872 = vmul.f32 %v2830, %v2773
        %v2873 = vmul.f32 %v2833, %v2773
        %v2874 = vmul.f32 %v2836, %v2773
        %v2875 = vmul.f32 %v2839, %v2773
        %v2876 = vmul.f32 %v2842, %v2773
        %v2877 = vmul.f32 %v2845, %v2773
        %v2878 = vmul.f32 %v2848, %v2773
        %v2879 = vmul.f32 %v2851, %v2773
        %v2880 = vmul.f32 %v2854, %v2773
        %v2881 = vmul.f32 %v2857, %v2773
        %v2882 = vmul.f32 %v2860, %v2773
        %v2883 = vmul.f32 %v2863, %v2773
        %v2884 = vmul.f32 %v2866, %v2773
        %v2885 = vmul.f32 %v2869, %v2773
        %v2886 = vadd.f32 %v2870, 1e-05
        %v2887 = vadd.f32 %v2871, 1e-05
        %v2888 = vadd.f32 %v2872, 1e-05
        %v2889 = vadd.f32 %v2873, 1e-05
        %v2890 = vadd.f32 %v2874, 1e-05
        %v2891 = vadd.f32 %v2875, 1e-05
        %v2892 = vadd.f32 %v2876, 1e-05
        %v2893 = vadd.f32 %v2877, 1e-05
        %v2894 = vadd.f32 %v2878, 1e-05
        %v2895 = vadd.f32 %v2879, 1e-05
        %v2896 = vadd.f32 %v2880, 1e-05
        %v2897 = vadd.f32 %v2881, 1e-05
        %v2898 = vadd.f32 %v2882, 1e-05
        %v2899 = vadd.f32 %v2883, 1e-05
        %v2900 = vadd.f32 %v2884, 1e-05
        %v2901 = vadd.f32 %v2885, 1e-05
        %v2902 = vrsqrt.pop %v2886
        %v2903 = vrsqrt.pop %v2887
        %v2904 = vrsqrt.pop %v2888
        %v2905 = vrsqrt.pop %v2889
        %v2906 = vrsqrt.pop %v2890
        %v2907 = vrsqrt.pop %v2891
        %v2908 = vrsqrt.pop %v2892
        %v2909 = vrsqrt.pop %v2893
        %v2910 = vrsqrt.pop %v2894
        %v2911 = vrsqrt.pop %v2895
        %v2912 = vrsqrt.pop %v2896
        %v2913 = vrsqrt.pop %v2897
        %v2914 = vrsqrt.pop %v2898
        %v2915 = vrsqrt.pop %v2899
        %v2916 = vrsqrt.pop %v2900
        %v2917 = vrsqrt.pop %v2901
        %v2918 = vmul.f32 %v2790, %v2902
        %v2919 = vmul.f32 %v2791, %v2903
        %v2920 = vmul.f32 %v2792, %v2904
        %v2921 = vmul.f32 %v2793, %v2905
        %v2922 = vmul.f32 %v2794, %v2906
        %v2923 = vmul.f32 %v2795, %v2907
        %v2924 = vmul.f32 %v2796, %v2908
        %v2925 = vmul.f32 %v2797, %v2909
        %v2926 = vmul.f32 %v2798, %v2910
        %v2927 = vmul.f32 %v2799, %v2911
        %v2928 = vmul.f32 %v2800, %v2912
        %v2929 = vmul.f32 %v2801, %v2913
        %v2930 = vmul.f32 %v2802, %v2914
        %v2931 = vmul.f32 %v2803, %v2915
        %v2932 = vmul.f32 %v2804, %v2916
        %v2933 = vmul.f32 %v2805, %v2917
        %v2934 = vld [vmem:[%s1123] sm:$0x1]
        %v2936 = vlaneseq
        %v2937 = vshrl.u32 %v2936, 7
        %v2938 = vsub.s32 0, %v2937
        %v2939 = vrot.slane %v2934, %v2938
        %v2941 = vmul.f32 %v2918, %v2939
        %v2942 = vmul.f32 %v2919, %v2939
        %v2943 = vmul.f32 %v2920, %v2939
        %v2944 = vmul.f32 %v2921, %v2939
        %v2945 = vmul.f32 %v2922, %v2939
        %v2946 = vmul.f32 %v2923, %v2939
        %v2947 = vmul.f32 %v2924, %v2939
        %v2948 = vmul.f32 %v2925, %v2939
        %v2949 = vmul.f32 %v2926, %v2939
        %v2950 = vmul.f32 %v2927, %v2939
        %v2951 = vmul.f32 %v2928, %v2939
        %v2952 = vmul.f32 %v2929, %v2939
        %v2953 = vmul.f32 %v2930, %v2939
        %v2954 = vmul.f32 %v2931, %v2939
        %v2955 = vmul.f32 %v2932, %v2939
        %v2956 = vmul.f32 %v2933, %v2939
        %v2957 = vld [vmem:[%s1130] sm:$0x1]
        %v2959 = vlaneseq
        %v2960 = vshrl.u32 %v2959, 7
        %v2961 = vsub.s32 0, %v2960
        %v2962 = vrot.slane %v2957, %v2961
        %v2964 = vadd.f32 %v2941, %v2962
        %v2965 = vadd.f32 %v2942, %v2962
        %v2966 = vadd.f32 %v2943, %v2962
        %v2967 = vadd.f32 %v2944, %v2962
        %v2968 = vadd.f32 %v2945, %v2962
        %v2969 = vadd.f32 %v2946, %v2962
        %v2970 = vadd.f32 %v2947, %v2962
        %v2971 = vadd.f32 %v2948, %v2962
        %v2972 = vadd.f32 %v2949, %v2962
        %v2973 = vadd.f32 %v2950, %v2962
        %v2974 = vadd.f32 %v2951, %v2962
        %v2975 = vadd.f32 %v2952, %v2962
        %v2976 = vadd.f32 %v2953, %v2962
        %v2977 = vadd.f32 %v2954, %v2962
        %v2978 = vadd.f32 %v2955, %v2962
        %v2979 = vadd.f32 %v2956, %v2962
        %v2980 = vpack.c.bf16 %v2965, %v2964
        %v2981 = vpack.c.bf16 %v2967, %v2966
        %v2982 = vpack.c.bf16 %v2969, %v2968
        %v2983 = vpack.c.bf16 %v2971, %v2970
        %v2984 = vpack.c.bf16 %v2973, %v2972
        %v2985 = vpack.c.bf16 %v2975, %v2974
        %v2986 = vpack.c.bf16 %v2977, %v2976
        %v2987 = vpack.c.bf16 %v2979, %v2978
        %v2988 = vld [vmem:[%s1093] sm:$0xf]
        %v2989 = vld [vmem:[%s1093 + $0x4] sm:$0xf]
        %v2990 = vld [vmem:[%s1093 + $0x8] sm:$0xf]
        %v2991 = vld [vmem:[%s1093 + $0xc] sm:$0xf]
        %v2992 = vld [vmem:[%s1100] sm:$0x1]
        %v2994 = vlaneseq
        %v2995 = vshrl.u32 %v2994, 7
        %v2996 = vsub.s32 0, %v2995
        %v2997 = vrot.slane %v2992, %v2996
        %v3003 = vunpack.c.l.b16 %v2988
        %v3004 = vunpack.c.l.b16 %v2989
        %v3005 = vunpack.c.l.b16 %v2990
        %v3006 = vunpack.c.l.b16 %v2991
        %v3007 = vpack.c.b16 %v3004, %v3003
        %v3008 = vpack.c.b16 %v3006, %v3005
        %v3012 = vsel %vm1242, %v2980, 0
        %v3015 = vsel %vm1242, %v2981, 0
        %v3018 = vsel %vm1242, %v2982, 0
        %v3021 = vsel %vm1242, %v2983, 0
        %v3024 = vsel %vm1242, %v2984, 0
        %v3027 = vsel %vm1242, %v2985, 0
        %v3030 = vsel %vm1242, %v2986, 0
        %v3033 = vsel %vm1242, %v2987, 0
        %3035 = vmatprep.subr.bf16.mxu0 0
        %3036 = vmatpush1.bf16.msra.mxu0 %v3007
        %3037 = vmatprep.subr.bf16.mxu0 0
        %3038 = vmatpush1.bf16.msra.mxu0 %v3008
        %3039 = vmatprep.subr.bf16.mxu0 0
        %3040 = vmatpush1.bf16.msra.mxu0 0
        %3041 = vmatprep.subr.bf16.mxu0 0
        %3042 = vmatpush1.bf16.msra.mxu0 0
        %3043 = vmatprep.subr.bf16.mxu0 0
        %3044 = vmatpush1.bf16.msra.mxu0 0
        %3045 = vmatprep.subr.bf16.mxu0 0
        %3046 = vmatpush1.bf16.msra.mxu0 0
        %3047 = vmatprep.subr.bf16.mxu0 0
        %3048 = vmatpush1.bf16.msra.mxu0 0
        %3049 = vmatprep.subr.bf16.mxu0 0
        %3050 = vmatpush1.bf16.msra.mxu0 0
        %3051 = vmatprep.subr.bf16.mxu0 0
        %3052 = vmatpush1.bf16.msra.mxu0 0
        %3053 = vmatprep.subr.bf16.mxu0 0
        %3054 = vmatpush1.bf16.msra.mxu0 0
        %3055 = vmatprep.subr.bf16.mxu0 0
        %3056 = vmatpush1.bf16.msra.mxu0 0
        %3057 = vmatprep.subr.bf16.mxu0 0
        %3058 = vmatpush1.bf16.msra.mxu0 0
        %3059 = vmatprep.subr.bf16.mxu0 0
        %3060 = vmatpush1.bf16.msra.mxu0 0
        %3061 = vmatprep.subr.bf16.mxu0 0
        %3062 = vmatpush1.bf16.msra.mxu0 0
        %3063 = vmatprep.subr.bf16.mxu0 0
        %3064 = vmatpush1.bf16.msra.mxu0 0
        %3065 = vmatprep.subr.bf16.mxu0 0
        %3066 = vmatpush1.bf16.msra.mxu0 0
        %3067 = vmatprep.mubr.bf16.mxu0 0
        %3068 = vmatmul.mubr.bf16.gmra.mrb[0].mxu0 %v3012
        %v3069 = vpop.f32.mrb[0].mxu0
        %v3070 = vadd.f32 %v2997, %v3069
        %v3071 = vpop.f32.mrb[0].mxu0
        %v3072 = vpop.f32.mrb[0].mxu0
        %v3073 = vadd.f32 %v2997, %v3072
        %v3074 = vpop.f32.mrb[0].mxu0
        %3075 = vmatprep.mubr.bf16.mxu0 0
        %3076 = vmatmul.mubr.bf16.gmra.mrb[0].mxu0 %v3015
        %v3077 = vpop.f32.mrb[0].mxu0
        %v3078 = vadd.f32 %v2997, %v3077
        %v3079 = vpop.f32.mrb[0].mxu0
        %v3080 = vpop.f32.mrb[0].mxu0
        %v3081 = vadd.f32 %v2997, %v3080
        %v3082 = vpop.f32.mrb[0].mxu0
        %3083 = vmatprep.mubr.bf16.mxu0 0
        %3084 = vmatmul.mubr.bf16.gmra.mrb[0].mxu0 %v3018
        %v3085 = vpop.f32.mrb[0].mxu0
        %v3086 = vadd.f32 %v2997, %v3085
        %v3087 = vpop.f32.mrb[0].mxu0
        %v3088 = vpop.f32.mrb[0].mxu0
        %v3089 = vadd.f32 %v2997, %v3088
        %v3090 = vpop.f32.mrb[0].mxu0
        %3091 = vmatprep.mubr.bf16.mxu0 0
        %3092 = vmatmul.mubr.bf16.gmra.mrb[0].mxu0 %v3021
        %v3093 = vpop.f32.mrb[0].mxu0
        %v3094 = vadd.f32 %v2997, %v3093
        %v3095 = vpop.f32.mrb[0].mxu0
        %v3096 = vpop.f32.mrb[0].mxu0
        %v3097 = vadd.f32 %v2997, %v3096
        %v3098 = vpop.f32.mrb[0].mxu0
        %3099 = vmatprep.mubr.bf16.mxu0 0
        %3100 = vmatmul.mubr.bf16.gmra.mrb[0].mxu0 %v3024
        %v3101 = vpop.f32.mrb[0].mxu0
        %v3102 = vadd.f32 %v2997, %v3101
        %v3103 = vpop.f32.mrb[0].mxu0
        %v3104 = vpop.f32.mrb[0].mxu0
        %v3105 = vadd.f32 %v2997, %v3104
        %v3106 = vpop.f32.mrb[0].mxu0
        %3107 = vmatprep.mubr.bf16.mxu0 0
        %3108 = vmatmul.mubr.bf16.gmra.mrb[0].mxu0 %v3027
        %v3109 = vpop.f32.mrb[0].mxu0
        %v3110 = vadd.f32 %v2997, %v3109
        %v3111 = vpop.f32.mrb[0].mxu0
        %v3112 = vpop.f32.mrb[0].mxu0
        %v3113 = vadd.f32 %v2997, %v3112
        %v3114 = vpop.f32.mrb[0].mxu0
        %3115 = vmatprep.mubr.bf16.mxu0 0
        %3116 = vmatmul.mubr.bf16.gmra.mrb[0].mxu0 %v3030
        %v3117 = vpop.f32.mrb[0].mxu0
        %v3118 = vadd.f32 %v2997, %v3117
        %v3119 = vpop.f32.mrb[0].mxu0
        %v3120 = vpop.f32.mrb[0].mxu0
        %v3121 = vadd.f32 %v2997, %v3120
        %v3122 = vpop.f32.mrb[0].mxu0
        %3123 = vmatprep.mubr.bf16.mxu0 0
        %3124 = vmatmul.mubr.bf16.gmra.mrb[0].mxu0 %v3033
        %v3125 = vpop.f32.mrb[0].mxu0
        %v3126 = vadd.f32 %v2997, %v3125
        %v3127 = vpop.f32.mrb[0].mxu0
        %v3128 = vpop.f32.mrb[0].mxu0
        %v3129 = vadd.f32 %v2997, %v3128
        %v3130 = vpop.f32.mrb[0].mxu0
        %3131 = vdwg.mxu0
        %v3132 = vmax.f32 %v3070, 0.0
        %v3133 = vmax.f32 %v3073, 0.0
        %v3134 = vmax.f32 %v3078, 0.0
        %v3135 = vmax.f32 %v3081, 0.0
        %v3136 = vmax.f32 %v3086, 0.0
        %v3137 = vmax.f32 %v3089, 0.0
        %v3138 = vmax.f32 %v3094, 0.0
        %v3139 = vmax.f32 %v3097, 0.0
        %v3140 = vmax.f32 %v3102, 0.0
        %v3141 = vmax.f32 %v3105, 0.0
        %v3142 = vmax.f32 %v3110, 0.0
        %v3143 = vmax.f32 %v3113, 0.0
        %v3144 = vmax.f32 %v3118, 0.0
        %v3145 = vmax.f32 %v3121, 0.0
        %v3146 = vmax.f32 %v3126, 0.0
        %v3147 = vmax.f32 %v3129, 0.0
        %v3148 = vpack.c.bf16 %v3133, %v3132
        %v3149 = vpack.c.bf16 %v3135, %v3134
        %v3150 = vpack.c.bf16 %v3137, %v3136
        %v3151 = vpack.c.bf16 %v3139, %v3138
        %v3152 = vpack.c.bf16 %v3141, %v3140
        %v3153 = vpack.c.bf16 %v3143, %v3142
        %v3154 = vpack.c.bf16 %v3145, %v3144
        %v3155 = vpack.c.bf16 %v3147, %v3146
        %v3156 = vld [vmem:[%s1109] sm:$0xf]
        %v3157 = vld [vmem:[%s1109 + $0x4] sm:$0xf]
        %v3158 = vld [vmem:[%s1109 + $0x8] sm:$0xf]
        %v3159 = vld [vmem:[%s1109 + $0xc] sm:$0xf]
        %v3160 = vld [vmem:[%s1109 + $0x10] sm:$0xf]
        %v3161 = vld [vmem:[%s1109 + $0x14] sm:$0xf]
        %v3162 = vld [vmem:[%s1109 + $0x18] sm:$0xf]
        %v3163 = vld [vmem:[%s1109 + $0x1c] sm:$0xf]
        %v3164 = vld [vmem:[%s1116] sm:$0x1]
        %v3166 = vlaneseq
        %v3167 = vshrl.u32 %v3166, 7
        %v3168 = vsub.s32 0, %v3167
        %v3169 = vrot.slane %v3164, %v3168
        %v3179 = vunpack.c.l.b16 %v3156
        %v3180 = vunpack.c.l.b16 %v3157
        %v3181 = vunpack.c.l.b16 %v3158
        %v3182 = vunpack.c.l.b16 %v3159
        %v3183 = vunpack.c.l.b16 %v3160
        %v3184 = vunpack.c.l.b16 %v3161
        %v3185 = vunpack.c.l.b16 %v3162
        %v3186 = vunpack.c.l.b16 %v3163
        %v3187 = vpack.c.b16 %v3180, %v3179
        %v3188 = vpack.c.b16 %v3182, %v3181
        %v3189 = vpack.c.b16 %v3184, %v3183
        %v3190 = vpack.c.b16 %v3186, %v3185
        %vm3195 = vcmask 523264
        %v3197 = vsel %vm3195, %v3148, 0
        %v3200 = vsel %vm3195, %v3149, 0
        %v3203 = vsel %vm3195, %v3150, 0
        %v3206 = vsel %vm3195, %v3151, 0
        %v3209 = vsel %vm3195, %v3152, 0
        %v3212 = vsel %vm3195, %v3153, 0
        %v3215 = vsel %vm3195, %v3154, 0
        %v3218 = vsel %vm3195, %v3155, 0
        %3220 = vmatprep.subr.bf16.mxu0 0
        %3221 = vmatpush1.bf16.msra.mxu0 %v3187
        %3222 = vmatprep.subr.bf16.mxu0 0
        %3223 = vmatpush1.bf16.msra.mxu0 %v3188
        %3224 = vmatprep.subr.bf16.mxu0 0
        %3225 = vmatpush1.bf16.msra.mxu0 %v3189
        %3226 = vmatprep.subr.bf16.mxu0 0
        %3227 = vmatpush1.bf16.msra.mxu0 %v3190
        %3228 = vmatprep.subr.bf16.mxu0 0
        %3229 = vmatpush1.bf16.msra.mxu0 0
        %3230 = vmatprep.subr.bf16.mxu0 0
        %3231 = vmatpush1.bf16.msra.mxu0 0
        %3232 = vmatprep.subr.bf16.mxu0 0
        %3233 = vmatpush1.bf16.msra.mxu0 0
        %3234 = vmatprep.subr.bf16.mxu0 0
        %3235 = vmatpush1.bf16.msra.mxu0 0
        %3236 = vmatprep.subr.bf16.mxu0 0
        %3237 = vmatpush1.bf16.msra.mxu0 0
        %3238 = vmatprep.subr.bf16.mxu0 0
        %3239 = vmatpush1.bf16.msra.mxu0 0
        %3240 = vmatprep.subr.bf16.mxu0 0
        %3241 = vmatpush1.bf16.msra.mxu0 0
        %3242 = vmatprep.subr.bf16.mxu0 0
        %3243 = vmatpush1.bf16.msra.mxu0 0
        %3244 = vmatprep.subr.bf16.mxu0 0
        %3245 = vmatpush1.bf16.msra.mxu0 0
        %3246 = vmatprep.subr.bf16.mxu0 0
        %3247 = vmatpush1.bf16.msra.mxu0 0
        %3248 = vmatprep.subr.bf16.mxu0 0
        %3249 = vmatpush1.bf16.msra.mxu0 0
        %3250 = vmatprep.subr.bf16.mxu0 0
        %3251 = vmatpush1.bf16.msra.mxu0 0
        %3252 = vmatprep.mubr.bf16.mxu0 0
        %3253 = vmatmul.mubr.bf16.gmra.mrb[0].mxu0 %v3197
        %v3254 = vpop.f32.mrb[0].mxu0
        %v3255 = vadd.f32 %v3169, %v3254
        %v3256 = vpop.f32.mrb[0].mxu0
        %v3257 = vpop.f32.mrb[0].mxu0
        %v3258 = vadd.f32 %v3169, %v3257
        %v3259 = vpop.f32.mrb[0].mxu0
        %3260 = vmatprep.mubr.bf16.mxu0 0
        %3261 = vmatmul.mubr.bf16.gmra.mrb[0].mxu0 %v3200
        %v3262 = vpop.f32.mrb[0].mxu0
        %v3263 = vadd.f32 %v3169, %v3262
        %v3264 = vpop.f32.mrb[0].mxu0
        %v3265 = vpop.f32.mrb[0].mxu0
        %v3266 = vadd.f32 %v3169, %v3265
        %v3267 = vpop.f32.mrb[0].mxu0
        %3268 = vmatprep.mubr.bf16.mxu0 0
        %3269 = vmatmul.mubr.bf16.gmra.mrb[0].mxu0 %v3203
        %v3270 = vpop.f32.mrb[0].mxu0
        %v3271 = vadd.f32 %v3169, %v3270
        %v3272 = vpop.f32.mrb[0].mxu0
        %v3273 = vpop.f32.mrb[0].mxu0
        %v3274 = vadd.f32 %v3169, %v3273
        %v3275 = vpop.f32.mrb[0].mxu0
        %3276 = vmatprep.mubr.bf16.mxu0 0
        %3277 = vmatmul.mubr.bf16.gmra.mrb[0].mxu0 %v3206
        %v3278 = vpop.f32.mrb[0].mxu0
        %v3279 = vadd.f32 %v3169, %v3278
        %v3280 = vpop.f32.mrb[0].mxu0
        %v3281 = vpop.f32.mrb[0].mxu0
        %v3282 = vadd.f32 %v3169, %v3281
        %v3283 = vpop.f32.mrb[0].mxu0
        %3284 = vmatprep.mubr.bf16.mxu0 0
        %3285 = vmatmul.mubr.bf16.gmra.mrb[0].mxu0 %v3209
        %v3286 = vpop.f32.mrb[0].mxu0
        %v3287 = vadd.f32 %v3169, %v3286
        %v3288 = vpop.f32.mrb[0].mxu0
        %v3289 = vpop.f32.mrb[0].mxu0
        %v3290 = vadd.f32 %v3169, %v3289
        %v3291 = vpop.f32.mrb[0].mxu0
        %3292 = vmatprep.mubr.bf16.mxu0 0
        %3293 = vmatmul.mubr.bf16.gmra.mrb[0].mxu0 %v3212
        %v3294 = vpop.f32.mrb[0].mxu0
        %v3295 = vadd.f32 %v3169, %v3294
        %v3296 = vpop.f32.mrb[0].mxu0
        %v3297 = vpop.f32.mrb[0].mxu0
        %v3298 = vadd.f32 %v3169, %v3297
        %v3299 = vpop.f32.mrb[0].mxu0
        %3300 = vmatprep.mubr.bf16.mxu0 0
        %3301 = vmatmul.mubr.bf16.gmra.mrb[0].mxu0 %v3215
        %v3302 = vpop.f32.mrb[0].mxu0
        %v3303 = vadd.f32 %v3169, %v3302
        %v3304 = vpop.f32.mrb[0].mxu0
        %v3305 = vpop.f32.mrb[0].mxu0
        %v3306 = vadd.f32 %v3169, %v3305
        %v3307 = vpop.f32.mrb[0].mxu0
        %3308 = vmatprep.mubr.bf16.mxu0 0
        %3309 = vmatmul.mubr.bf16.gmra.mrb[0].mxu0 %v3218
        %v3310 = vpop.f32.mrb[0].mxu0
        %v3311 = vadd.f32 %v3169, %v3310
        %v3312 = vpop.f32.mrb[0].mxu0
        %v3313 = vpop.f32.mrb[0].mxu0
        %v3314 = vadd.f32 %v3169, %v3313
        %v3315 = vpop.f32.mrb[0].mxu0
        %3316 = vdwg.mxu0
        %v3317 = vadd.f32 %v2964, %v3255
        %v3318 = vadd.f32 %v2965, %v3258
        %v3319 = vadd.f32 %v2966, %v3263
        %v3320 = vadd.f32 %v2967, %v3266
        %v3321 = vadd.f32 %v2968, %v3271
        %v3322 = vadd.f32 %v2969, %v3274
        %v3323 = vadd.f32 %v2970, %v3279
        %v3324 = vadd.f32 %v2971, %v3282
        %v3325 = vadd.f32 %v2972, %v3287
        %v3326 = vadd.f32 %v2973, %v3290
        %v3327 = vadd.f32 %v2974, %v3295
        %v3328 = vadd.f32 %v2975, %v3298
        %v3329 = vadd.f32 %v2976, %v3303
        %v3330 = vadd.f32 %v2977, %v3306
        %v3331 = vadd.f32 %v2978, %v3311
        %v3332 = vadd.f32 %v2979, %v3314
        %v3333 = vsel %vm1242, %v3317, 0.0
        %3334 = vadd.xlane.f32.xlu0 %v3333
        %v3335 = vpop.xlane.xlu0 %3334
        %v3336 = vsel %vm1242, %v3318, 0.0
        %3337 = vadd.xlane.f32.xlu0 %v3336
        %v3338 = vpop.xlane.xlu0 %3337
        %v3339 = vsel %vm1242, %v3319, 0.0
        %3340 = vadd.xlane.f32.xlu0 %v3339
        %v3341 = vpop.xlane.xlu0 %3340
        %v3342 = vsel %vm1242, %v3320, 0.0
        %3343 = vadd.xlane.f32.xlu0 %v3342
        %v3344 = vpop.xlane.xlu0 %3343
        %v3345 = vsel %vm1242, %v3321, 0.0
        %3346 = vadd.xlane.f32.xlu0 %v3345
        %v3347 = vpop.xlane.xlu0 %3346
        %v3348 = vsel %vm1242, %v3322, 0.0
        %3349 = vadd.xlane.f32.xlu0 %v3348
        %v3350 = vpop.xlane.xlu0 %3349
        %v3351 = vsel %vm1242, %v3323, 0.0
        %3352 = vadd.xlane.f32.xlu0 %v3351
        %v3353 = vpop.xlane.xlu0 %3352
        %v3354 = vsel %vm1242, %v3324, 0.0
        %3355 = vadd.xlane.f32.xlu0 %v3354
        %v3356 = vpop.xlane.xlu0 %3355
        %v3357 = vsel %vm1242, %v3325, 0.0
        %3358 = vadd.xlane.f32.xlu0 %v3357
        %v3359 = vpop.xlane.xlu0 %3358
        %v3360 = vsel %vm1242, %v3326, 0.0
        %3361 = vadd.xlane.f32.xlu0 %v3360
        %v3362 = vpop.xlane.xlu0 %3361
        %v3363 = vsel %vm1242, %v3327, 0.0
        %3364 = vadd.xlane.f32.xlu0 %v3363
        %v3365 = vpop.xlane.xlu0 %3364
        %v3366 = vsel %vm1242, %v3328, 0.0
        %3367 = vadd.xlane.f32.xlu0 %v3366
        %v3368 = vpop.xlane.xlu0 %3367
        %v3369 = vsel %vm1242, %v3329, 0.0
        %3370 = vadd.xlane.f32.xlu0 %v3369
        %v3371 = vpop.xlane.xlu0 %3370
        %v3372 = vsel %vm1242, %v3330, 0.0
        %3373 = vadd.xlane.f32.xlu0 %v3372
        %v3374 = vpop.xlane.xlu0 %3373
        %v3375 = vsel %vm1242, %v3331, 0.0
        %3376 = vadd.xlane.f32.xlu0 %v3375
        %v3377 = vpop.xlane.xlu0 %3376
        %v3378 = vsel %vm1242, %v3332, 0.0
        %3379 = vadd.xlane.f32.xlu0 %v3378
        %v3380 = vpop.xlane.xlu0 %3379
        %v3381 = vmul.f32 %v3335, %v2773
        %v3382 = vmul.f32 %v3338, %v2773
        %v3383 = vmul.f32 %v3341, %v2773
        %v3384 = vmul.f32 %v3344, %v2773
        %v3385 = vmul.f32 %v3347, %v2773
        %v3386 = vmul.f32 %v3350, %v2773
        %v3387 = vmul.f32 %v3353, %v2773
        %v3388 = vmul.f32 %v3356, %v2773
        %v3389 = vmul.f32 %v3359, %v2773
        %v3390 = vmul.f32 %v3362, %v2773
        %v3391 = vmul.f32 %v3365, %v2773
        %v3392 = vmul.f32 %v3368, %v2773
        %v3393 = vmul.f32 %v3371, %v2773
        %v3394 = vmul.f32 %v3374, %v2773
        %v3395 = vmul.f32 %v3377, %v2773
        %v3396 = vmul.f32 %v3380, %v2773
        %v3397 = vsub.f32 %v3317, %v3381
        %v3398 = vsub.f32 %v3318, %v3382
        %v3399 = vsub.f32 %v3319, %v3383
        %v3400 = vsub.f32 %v3320, %v3384
        %v3401 = vsub.f32 %v3321, %v3385
        %v3402 = vsub.f32 %v3322, %v3386
        %v3403 = vsub.f32 %v3323, %v3387
        %v3404 = vsub.f32 %v3324, %v3388
        %v3405 = vsub.f32 %v3325, %v3389
        %v3406 = vsub.f32 %v3326, %v3390
        %v3407 = vsub.f32 %v3327, %v3391
        %v3408 = vsub.f32 %v3328, %v3392
        %v3409 = vsub.f32 %v3329, %v3393
        %v3410 = vsub.f32 %v3330, %v3394
        %v3411 = vsub.f32 %v3331, %v3395
        %v3412 = vsub.f32 %v3332, %v3396
        %v3413 = vmul.f32 %v3397, %v3397
        %v3414 = vmul.f32 %v3398, %v3398
        %v3415 = vmul.f32 %v3399, %v3399
        %v3416 = vmul.f32 %v3400, %v3400
        %v3417 = vmul.f32 %v3401, %v3401
        %v3418 = vmul.f32 %v3402, %v3402
        %v3419 = vmul.f32 %v3403, %v3403
        %v3420 = vmul.f32 %v3404, %v3404
        %v3421 = vmul.f32 %v3405, %v3405
        %v3422 = vmul.f32 %v3406, %v3406
        %v3423 = vmul.f32 %v3407, %v3407
        %v3424 = vmul.f32 %v3408, %v3408
        %v3425 = vmul.f32 %v3409, %v3409
        %v3426 = vmul.f32 %v3410, %v3410
        %v3427 = vmul.f32 %v3411, %v3411
        %v3428 = vmul.f32 %v3412, %v3412
        %v3429 = vsel %vm1242, %v3413, 0.0
        %3430 = vadd.xlane.f32.xlu0 %v3429
        %v3431 = vpop.xlane.xlu0 %3430
        %v3432 = vsel %vm1242, %v3414, 0.0
        %3433 = vadd.xlane.f32.xlu0 %v3432
        %v3434 = vpop.xlane.xlu0 %3433
        %v3435 = vsel %vm1242, %v3415, 0.0
        %3436 = vadd.xlane.f32.xlu0 %v3435
        %v3437 = vpop.xlane.xlu0 %3436
        %v3438 = vsel %vm1242, %v3416, 0.0
        %3439 = vadd.xlane.f32.xlu0 %v3438
        %v3440 = vpop.xlane.xlu0 %3439
        %v3441 = vsel %vm1242, %v3417, 0.0
        %3442 = vadd.xlane.f32.xlu0 %v3441
        %v3443 = vpop.xlane.xlu0 %3442
        %v3444 = vsel %vm1242, %v3418, 0.0
        %3445 = vadd.xlane.f32.xlu0 %v3444
        %v3446 = vpop.xlane.xlu0 %3445
        %v3447 = vsel %vm1242, %v3419, 0.0
        %3448 = vadd.xlane.f32.xlu0 %v3447
        %v3449 = vpop.xlane.xlu0 %3448
        %v3450 = vsel %vm1242, %v3420, 0.0
        %3451 = vadd.xlane.f32.xlu0 %v3450
        %v3452 = vpop.xlane.xlu0 %3451
        %v3453 = vsel %vm1242, %v3421, 0.0
        %3454 = vadd.xlane.f32.xlu0 %v3453
        %v3455 = vpop.xlane.xlu0 %3454
        %v3456 = vsel %vm1242, %v3422, 0.0
        %3457 = vadd.xlane.f32.xlu0 %v3456
        %v3458 = vpop.xlane.xlu0 %3457
        %v3459 = vsel %vm1242, %v3423, 0.0
        %3460 = vadd.xlane.f32.xlu0 %v3459
        %v3461 = vpop.xlane.xlu0 %3460
        %v3462 = vsel %vm1242, %v3424, 0.0
        %3463 = vadd.xlane.f32.xlu0 %v3462
        %v3464 = vpop.xlane.xlu0 %3463
        %v3465 = vsel %vm1242, %v3425, 0.0
        %3466 = vadd.xlane.f32.xlu0 %v3465
        %v3467 = vpop.xlane.xlu0 %3466
        %v3468 = vsel %vm1242, %v3426, 0.0
        %3469 = vadd.xlane.f32.xlu0 %v3468
        %v3470 = vpop.xlane.xlu0 %3469
        %v3471 = vsel %vm1242, %v3427, 0.0
        %3472 = vadd.xlane.f32.xlu0 %v3471
        %v3473 = vpop.xlane.xlu0 %3472
        %v3474 = vsel %vm1242, %v3428, 0.0
        %3475 = vadd.xlane.f32.xlu0 %v3474
        %v3476 = vpop.xlane.xlu0 %3475
        %v3477 = vmul.f32 %v3431, %v2773
        %v3478 = vmul.f32 %v3434, %v2773
        %v3479 = vmul.f32 %v3437, %v2773
        %v3480 = vmul.f32 %v3440, %v2773
        %v3481 = vmul.f32 %v3443, %v2773
        %v3482 = vmul.f32 %v3446, %v2773
        %v3483 = vmul.f32 %v3449, %v2773
        %v3484 = vmul.f32 %v3452, %v2773
        %v3485 = vmul.f32 %v3455, %v2773
        %v3486 = vmul.f32 %v3458, %v2773
        %v3487 = vmul.f32 %v3461, %v2773
        %v3488 = vmul.f32 %v3464, %v2773
        %v3489 = vmul.f32 %v3467, %v2773
        %v3490 = vmul.f32 %v3470, %v2773
        %v3491 = vmul.f32 %v3473, %v2773
        %v3492 = vmul.f32 %v3476, %v2773
        %v3493 = vadd.f32 %v3477, 1e-05
        %v3494 = vadd.f32 %v3478, 1e-05
        %v3495 = vadd.f32 %v3479, 1e-05
        %v3496 = vadd.f32 %v3480, 1e-05
        %v3497 = vadd.f32 %v3481, 1e-05
        %v3498 = vadd.f32 %v3482, 1e-05
        %v3499 = vadd.f32 %v3483, 1e-05
        %v3500 = vadd.f32 %v3484, 1e-05
        %v3501 = vadd.f32 %v3485, 1e-05
        %v3502 = vadd.f32 %v3486, 1e-05
        %v3503 = vadd.f32 %v3487, 1e-05
        %v3504 = vadd.f32 %v3488, 1e-05
        %v3505 = vadd.f32 %v3489, 1e-05
        %v3506 = vadd.f32 %v3490, 1e-05
        %v3507 = vadd.f32 %v3491, 1e-05
        %v3508 = vadd.f32 %v3492, 1e-05
        %v3509 = vrsqrt.pop %v3493
        %v3510 = vrsqrt.pop %v3494
        %v3511 = vrsqrt.pop %v3495
        %v3512 = vrsqrt.pop %v3496
        %v3513 = vrsqrt.pop %v3497
        %v3514 = vrsqrt.pop %v3498
        %v3515 = vrsqrt.pop %v3499
        %v3516 = vrsqrt.pop %v3500
        %v3517 = vrsqrt.pop %v3501
        %v3518 = vrsqrt.pop %v3502
        %v3519 = vrsqrt.pop %v3503
        %v3520 = vrsqrt.pop %v3504
        %v3521 = vrsqrt.pop %v3505
        %v3522 = vrsqrt.pop %v3506
        %v3523 = vrsqrt.pop %v3507
        %v3524 = vrsqrt.pop %v3508
        %v3525 = vmul.f32 %v3397, %v3509
        %v3526 = vmul.f32 %v3398, %v3510
        %v3527 = vmul.f32 %v3399, %v3511
        %v3528 = vmul.f32 %v3400, %v3512
        %v3529 = vmul.f32 %v3401, %v3513
        %v3530 = vmul.f32 %v3402, %v3514
        %v3531 = vmul.f32 %v3403, %v3515
        %v3532 = vmul.f32 %v3404, %v3516
        %v3533 = vmul.f32 %v3405, %v3517
        %v3534 = vmul.f32 %v3406, %v3518
        %v3535 = vmul.f32 %v3407, %v3519
        %v3536 = vmul.f32 %v3408, %v3520
        %v3537 = vmul.f32 %v3409, %v3521
        %v3538 = vmul.f32 %v3410, %v3522
        %v3539 = vmul.f32 %v3411, %v3523
        %v3540 = vmul.f32 %v3412, %v3524
        %v3541 = vld [vmem:[%s1137] sm:$0x1]
        %v3543 = vlaneseq
        %v3544 = vshrl.u32 %v3543, 7
        %v3545 = vsub.s32 0, %v3544
        %v3546 = vrot.slane %v3541, %v3545
        %v3548 = vmul.f32 %v3525, %v3546
        %v3549 = vmul.f32 %v3526, %v3546
        %v3550 = vmul.f32 %v3527, %v3546
        %v3551 = vmul.f32 %v3528, %v3546
        %v3552 = vmul.f32 %v3529, %v3546
        %v3553 = vmul.f32 %v3530, %v3546
        %v3554 = vmul.f32 %v3531, %v3546
        %v3555 = vmul.f32 %v3532, %v3546
        %v3556 = vmul.f32 %v3533, %v3546
        %v3557 = vmul.f32 %v3534, %v3546
        %v3558 = vmul.f32 %v3535, %v3546
        %v3559 = vmul.f32 %v3536, %v3546
        %v3560 = vmul.f32 %v3537, %v3546
        %v3561 = vmul.f32 %v3538, %v3546
        %v3562 = vmul.f32 %v3539, %v3546
        %v3563 = vmul.f32 %v3540, %v3546
        %v3564 = vld [vmem:[%s1144] sm:$0x1]
        %v3566 = vlaneseq
        %v3567 = vshrl.u32 %v3566, 7
        %v3568 = vsub.s32 0, %v3567
        %v3569 = vrot.slane %v3564, %v3568
        %v3571 = vadd.f32 %v3548, %v3569
        %v3572 = vadd.f32 %v3549, %v3569
        %v3573 = vadd.f32 %v3550, %v3569
        %v3574 = vadd.f32 %v3551, %v3569
        %v3575 = vadd.f32 %v3552, %v3569
        %v3576 = vadd.f32 %v3553, %v3569
        %v3577 = vadd.f32 %v3554, %v3569
        %v3578 = vadd.f32 %v3555, %v3569
        %v3579 = vadd.f32 %v3556, %v3569
        %v3580 = vadd.f32 %v3557, %v3569
        %v3581 = vadd.f32 %v3558, %v3569
        %v3582 = vadd.f32 %v3559, %v3569
        %v3583 = vadd.f32 %v3560, %v3569
        %v3584 = vadd.f32 %v3561, %v3569
        %v3585 = vadd.f32 %v3562, %v3569
        %v3586 = vadd.f32 %v3563, %v3569
        %p3587 = scmp.eq.s32.totalorder %s38, 1
        %p3588 = scmp.ne.s32.totalorder %s38, 1
        // Predicated region
        $region109: #{tpu_custom_call.1} parent=103 // pred_check
          %p3589 = pneg %p3588
        $region110: #{tpu_custom_call.1} parent=103 // pred_check_branch
          %3591 = sbr.rel (%p3589) target = $region112
        $region111: #{tpu_custom_call.1} parent=103 // pred_region
          %3592 = vst.msk [vmem:[#allocation2] sm:$0xff] %vm1242, %v3571
          %3593 = vst.msk [vmem:[#allocation2 + $0x8] sm:$0xff] %vm1242, %v3572
          %3594 = vst.msk [vmem:[#allocation2 + $0x10] sm:$0xff] %vm1242, %v3573
          %3595 = vst.msk [vmem:[#allocation2 + $0x18] sm:$0xff] %vm1242, %v3574
          %3596 = vst.msk [vmem:[#allocation2 + $0x20] sm:$0xff] %vm1242, %v3575
          %3597 = vst.msk [vmem:[#allocation2 + $0x28] sm:$0xff] %vm1242, %v3576
          %3598 = vst.msk [vmem:[#allocation2 + $0x30] sm:$0xff] %vm1242, %v3577
          %3599 = vst.msk [vmem:[#allocation2 + $0x38] sm:$0xff] %vm1242, %v3578
          %3600 = vst.msk [vmem:[#allocation2 + $0x40] sm:$0xff] %vm1242, %v3579
          %3601 = vst.msk [vmem:[#allocation2 + $0x48] sm:$0xff] %vm1242, %v3580
          %3602 = vst.msk [vmem:[#allocation2 + $0x50] sm:$0xff] %vm1242, %v3581
          %3603 = vst.msk [vmem:[#allocation2 + $0x58] sm:$0xff] %vm1242, %v3582
          %3604 = vst.msk [vmem:[#allocation2 + $0x60] sm:$0xff] %vm1242, %v3583
          %3605 = vst.msk [vmem:[#allocation2 + $0x68] sm:$0xff] %vm1242, %v3584
          %3606 = vst.msk [vmem:[#allocation2 + $0x70] sm:$0xff] %vm1242, %v3585
          %3607 = vst.msk [vmem:[#allocation2 + $0x78] sm:$0xff] %vm1242, %v3586
        $region112: #{tpu_custom_call.1} parent=103 // pred_fallthru
          _
        // Predicated region
        $region113: #{tpu_custom_call.1} parent=103 // pred_check
          %p3608 = pneg %p3587
        $region114: #{tpu_custom_call.1} parent=103 // pred_check_branch
          %3610 = sbr.rel (%p3608) target = $region116
        $region115: #{tpu_custom_call.1} parent=103 // pred_region
          %v3611 = vld [vmem:[%s2] sm:$0x3]
          %v3613 = vsel %vm2020, %v3611, 0
          %3615 = vmatprep.subr.mxu0 0.0
          %3616 = vmatpush1.msra.mxu0 %v3571
          %3617 = vmatprep.subr.mxu0 0.0
          %3618 = vmatpush1.msra.mxu0 %v3572
          %3619 = vmatprep.subr.mxu0 0.0
          %3620 = vmatpush1.msra.mxu0 0.0
          %3621 = vmatprep.subr.mxu0 0.0
          %3622 = vmatpush1.msra.mxu0 0.0
          %3623 = vmatprep.subr.mxu0 0.0
          %3624 = vmatpush1.msra.mxu0 0.0
          %3625 = vmatprep.subr.mxu0 0.0
          %3626 = vmatpush1.msra.mxu0 0.0
          %3627 = vmatprep.subr.mxu0 0.0
          %3628 = vmatpush1.msra.mxu0 0.0
          %3629 = vmatprep.subr.mxu0 0.0
          %3630 = vmatpush1.msra.mxu0 0.0
          %3631 = vmatprep.subr.mxu0 0.0
          %3632 = vmatpush1.msra.mxu0 0.0
          %3633 = vmatprep.subr.mxu0 0.0
          %3634 = vmatpush1.msra.mxu0 0.0
          %3635 = vmatprep.subr.mxu0 0.0
          %3636 = vmatpush1.msra.mxu0 0.0
          %3637 = vmatprep.subr.mxu0 0.0
          %3638 = vmatpush1.msra.mxu0 0.0
          %3639 = vmatprep.subr.mxu0 0.0
          %3640 = vmatpush1.msra.mxu0 0.0
          %3641 = vmatprep.subr.mxu0 0.0
          %3642 = vmatpush1.msra.mxu0 0.0
          %3643 = vmatprep.subr.mxu0 0.0
          %3644 = vmatpush1.msra.mxu0 0.0
          %3645 = vmatprep.subr.mxu0 0.0
          %3646 = vmatpush1.msra.mxu0 0.0
          %3647 = vmatprep.subr.mxu0 0.0
          %3648 = vmatpush1.msra.mxu0 0.0
          %3649 = vmatprep.subr.mxu0 0.0
          %3650 = vmatpush1.msra.mxu0 0.0
          %3651 = vmatprep.subr.mxu0 0.0
          %3652 = vmatpush1.msra.mxu0 0.0
          %3653 = vmatprep.subr.mxu0 0.0
          %3654 = vmatpush1.msra.mxu0 0.0
          %3655 = vmatprep.subr.mxu0 0.0
          %3656 = vmatpush1.msra.mxu0 0.0
          %3657 = vmatprep.subr.mxu0 0.0
          %3658 = vmatpush1.msra.mxu0 0.0
          %3659 = vmatprep.subr.mxu0 0.0
          %3660 = vmatpush1.msra.mxu0 0.0
          %3661 = vmatprep.subr.mxu0 0.0
          %3662 = vmatpush1.msra.mxu0 0.0
          %3663 = vmatprep.subr.mxu0 0.0
          %3664 = vmatpush1.msra.mxu0 0.0
          %3665 = vmatprep.subr.mxu0 0.0
          %3666 = vmatpush1.msra.mxu0 0.0
          %3667 = vmatprep.subr.mxu0 0.0
          %3668 = vmatpush1.msra.mxu0 0.0
          %3669 = vmatprep.subr.mxu0 0.0
          %3670 = vmatpush1.msra.mxu0 0.0
          %3671 = vmatprep.subr.mxu0 0.0
          %3672 = vmatpush1.msra.mxu0 0.0
          %3673 = vmatprep.subr.mxu0 0.0
          %3674 = vmatpush1.msra.mxu0 0.0
          %3675 = vmatprep.subr.mxu0 0.0
          %3676 = vmatpush1.msra.mxu0 0.0
          %3677 = vmatprep.subr.mxu0 0.0
          %3678 = vmatpush1.msra.mxu0 0.0
          %3679 = vmatprep.mubr.f32.mxu0 0.0
          %3680 = vmatmul.mubr.f32.gmra.mrb[0].mxu0 %v3613
          %v3681 = vpop.f32.mrb[0].mxu0
          %v3682 = vadd.f32 0.0, %v3681
          %v3683 = vpop.f32.mrb[0].mxu0
          %3684 = vdwg.mxu0
          %v3685 = vld [vmem:[#allocation3] sm:$0x3]
          %v3686 = vld [vmem:[%s1149] sm:$0xff]
          %v3687 = vld [vmem:[%s1149 + $0x8] sm:$0xff]
          %v3688 = vld [vmem:[%s1149 + $0x10] sm:$0xff]
          %v3689 = vld [vmem:[%s1149 + $0x18] sm:$0xff]
          %v3690 = vld [vmem:[%s1152] sm:$0x1]
          %v3692 = vlaneseq
          %v3693 = vshrl.u32 %v3692, 7
          %v3694 = vsub.s32 0, %v3693
          %v3695 = vrot.slane %v3690, %v3694
          %v3698 = vsel %vm1242, %v3682, 0
          %3700 = vmatprep.subr.mxu0 0.0
          %3701 = vmatpush1.msra.mxu0 %v3686
          %3702 = vmatprep.subr.mxu0 0.0
          %3703 = vmatpush1.msra.mxu0 %v3687
          %3704 = vmatprep.subr.mxu0 0.0
          %3705 = vmatpush1.msra.mxu0 %v3688
          %3706 = vmatprep.subr.mxu0 0.0
          %3707 = vmatpush1.msra.mxu0 %v3689
          %3708 = vmatprep.subr.mxu0 0.0
          %3709 = vmatpush1.msra.mxu0 0.0
          %3710 = vmatprep.subr.mxu0 0.0
          %3711 = vmatpush1.msra.mxu0 0.0
          %3712 = vmatprep.subr.mxu0 0.0
          %3713 = vmatpush1.msra.mxu0 0.0
          %3714 = vmatprep.subr.mxu0 0.0
          %3715 = vmatpush1.msra.mxu0 0.0
          %3716 = vmatprep.subr.mxu0 0.0
          %3717 = vmatpush1.msra.mxu0 0.0
          %3718 = vmatprep.subr.mxu0 0.0
          %3719 = vmatpush1.msra.mxu0 0.0
          %3720 = vmatprep.subr.mxu0 0.0
          %3721 = vmatpush1.msra.mxu0 0.0
          %3722 = vmatprep.subr.mxu0 0.0
          %3723 = vmatpush1.msra.mxu0 0.0
          %3724 = vmatprep.subr.mxu0 0.0
          %3725 = vmatpush1.msra.mxu0 0.0
          %3726 = vmatprep.subr.mxu0 0.0
          %3727 = vmatpush1.msra.mxu0 0.0
          %3728 = vmatprep.subr.mxu0 0.0
          %3729 = vmatpush1.msra.mxu0 0.0
          %3730 = vmatprep.subr.mxu0 0.0
          %3731 = vmatpush1.msra.mxu0 0.0
          %3732 = vmatprep.subr.mxu0 0.0
          %3733 = vmatpush1.msra.mxu0 0.0
          %3734 = vmatprep.subr.mxu0 0.0
          %3735 = vmatpush1.msra.mxu0 0.0
          %3736 = vmatprep.subr.mxu0 0.0
          %3737 = vmatpush1.msra.mxu0 0.0
          %3738 = vmatprep.subr.mxu0 0.0
          %3739 = vmatpush1.msra.mxu0 0.0
          %3740 = vmatprep.subr.mxu0 0.0
          %3741 = vmatpush1.msra.mxu0 0.0
          %3742 = vmatprep.subr.mxu0 0.0
          %3743 = vmatpush1.msra.mxu0 0.0
          %3744 = vmatprep.subr.mxu0 0.0
          %3745 = vmatpush1.msra.mxu0 0.0
          %3746 = vmatprep.subr.mxu0 0.0
          %3747 = vmatpush1.msra.mxu0 0.0
          %3748 = vmatprep.subr.mxu0 0.0
          %3749 = vmatpush1.msra.mxu0 0.0
          %3750 = vmatprep.subr.mxu0 0.0
          %3751 = vmatpush1.msra.mxu0 0.0
          %3752 = vmatprep.subr.mxu0 0.0
          %3753 = vmatpush1.msra.mxu0 0.0
          %3754 = vmatprep.subr.mxu0 0.0
          %3755 = vmatpush1.msra.mxu0 0.0
          %3756 = vmatprep.subr.mxu0 0.0
          %3757 = vmatpush1.msra.mxu0 0.0
          %3758 = vmatprep.subr.mxu0 0.0
          %3759 = vmatpush1.msra.mxu0 0.0
          %3760 = vmatprep.subr.mxu0 0.0
          %3761 = vmatpush1.msra.mxu0 0.0
          %3762 = vmatprep.subr.mxu0 0.0
          %3763 = vmatpush1.msra.mxu0 0.0
          %3764 = vmatprep.mubr.f32.mxu0 0.0
          %3765 = vmatmul.mubr.f32.gmra.mrb[0].mxu0 %v3698
          %v3766 = vpop.f32.mrb[0].mxu0
          %v3767 = vadd.f32 %v3695, %v3766
          %v3768 = vpop.f32.mrb[0].mxu0
          %3769 = vdwg.mxu0
          %v3770 = vadd.f32 %v3685, %v3767
          %vm3771 = vcmask 25600
          %3772 = vst.msk [vmem:[#allocation3] sm:$0x3] %vm3771, %v3770
          %v3773 = vld [vmem:[#allocation3] sm:$0x3]
          %3774 = vst.msk [vmem:[#allocation4] sm:$0x3] %vm3771, %v3773
        $region116: #{tpu_custom_call.1} parent=103 // pred_fallthru
          _
        %p3775 = scmp.lt.s32.totalorder %s37, 1
        %p3776 = pnand %p3587, %p3775
        %p3777 = pneg %p3776
        // Predicated region
        $region117: #{tpu_custom_call.1} parent=103 // pred_check
          _
        $region118: #{tpu_custom_call.1} parent=103 // pred_check_branch
          %3779 = sbr.rel (%p3776) target = $region120
        $region119: #{tpu_custom_call.1} parent=103 // pred_region
          %v3780 = vld [vmem:[%s1] sm:$0xff]
          %v3781 = vld [vmem:[%s1 + $0x8] sm:$0xff]
          %v3782 = vld [vmem:[%s1 + $0x10] sm:$0xff]
          %v3783 = vld [vmem:[%s1 + $0x18] sm:$0xff]
          %v3784 = vld [vmem:[%s1 + $0x20] sm:$0xff]
          %v3785 = vld [vmem:[%s1 + $0x28] sm:$0xff]
          %v3786 = vld [vmem:[%s1 + $0x30] sm:$0xff]
          %v3787 = vld [vmem:[%s1 + $0x38] sm:$0xff]
          %v3788 = vld [vmem:[%s1 + $0x40] sm:$0xff]
          %v3789 = vld [vmem:[%s1 + $0x48] sm:$0xff]
          %v3790 = vld [vmem:[%s1 + $0x50] sm:$0xff]
          %v3791 = vld [vmem:[%s1 + $0x58] sm:$0xff]
          %v3792 = vld [vmem:[%s1 + $0x60] sm:$0xff]
          %v3793 = vld [vmem:[%s1 + $0x68] sm:$0xff]
          %v3794 = vld [vmem:[%s1 + $0x70] sm:$0xff]
          %v3795 = vld [vmem:[%s1 + $0x78] sm:$0xff]
          %v3797 = vsel %vm2020, %v3780, 0
          %v3800 = vsel %vm2020, %v3781, 0
          %v3803 = vsel %vm2020, %v3782, 0
          %v3806 = vsel %vm2020, %v3783, 0
          %v3809 = vsel %vm2020, %v3784, 0
          %v3812 = vsel %vm2020, %v3785, 0
          %v3815 = vsel %vm2020, %v3786, 0
          %v3818 = vsel %vm2020, %v3787, 0
          %v3821 = vsel %vm2020, %v3788, 0
          %v3824 = vsel %vm2020, %v3789, 0
          %v3827 = vsel %vm2020, %v3790, 0
          %v3830 = vsel %vm2020, %v3791, 0
          %v3833 = vsel %vm2020, %v3792, 0
          %v3836 = vsel %vm2020, %v3793, 0
          %v3839 = vsel %vm2020, %v3794, 0
          %v3842 = vsel %vm2020, %v3795, 0
          %3844 = vmatprep.subr.mxu0 0.0
          %3845 = vmatpush1.msra.mxu0 %v3571
          %3846 = vmatprep.subr.mxu0 0.0
          %3847 = vmatpush1.msra.mxu0 %v3572
          %3848 = vmatprep.subr.mxu0 0.0
          %3849 = vmatpush1.msra.mxu0 0.0
          %3850 = vmatprep.subr.mxu0 0.0
          %3851 = vmatpush1.msra.mxu0 0.0
          %3852 = vmatprep.subr.mxu0 0.0
          %3853 = vmatpush1.msra.mxu0 0.0
          %3854 = vmatprep.subr.mxu0 0.0
          %3855 = vmatpush1.msra.mxu0 0.0
          %3856 = vmatprep.subr.mxu0 0.0
          %3857 = vmatpush1.msra.mxu0 0.0
          %3858 = vmatprep.subr.mxu0 0.0
          %3859 = vmatpush1.msra.mxu0 0.0
          %3860 = vmatprep.subr.mxu0 0.0
          %3861 = vmatpush1.msra.mxu0 0.0
          %3862 = vmatprep.subr.mxu0 0.0
          %3863 = vmatpush1.msra.mxu0 0.0
          %3864 = vmatprep.subr.mxu0 0.0
          %3865 = vmatpush1.msra.mxu0 0.0
          %3866 = vmatprep.subr.mxu0 0.0
          %3867 = vmatpush1.msra.mxu0 0.0
          %3868 = vmatprep.subr.mxu0 0.0
          %3869 = vmatpush1.msra.mxu0 0.0
          %3870 = vmatprep.subr.mxu0 0.0
          %3871 = vmatpush1.msra.mxu0 0.0
          %3872 = vmatprep.subr.mxu0 0.0
          %3873 = vmatpush1.msra.mxu0 0.0
          %3874 = vmatprep.subr.mxu0 0.0
          %3875 = vmatpush1.msra.mxu0 0.0
          %3876 = vmatprep.subr.mxu0 0.0
          %3877 = vmatpush1.msra.mxu0 0.0
          %3878 = vmatprep.subr.mxu0 0.0
          %3879 = vmatpush1.msra.mxu0 0.0
          %3880 = vmatprep.subr.mxu0 0.0
          %3881 = vmatpush1.msra.mxu0 0.0
          %3882 = vmatprep.subr.mxu0 0.0
          %3883 = vmatpush1.msra.mxu0 0.0
          %3884 = vmatprep.subr.mxu0 0.0
          %3885 = vmatpush1.msra.mxu0 0.0
          %3886 = vmatprep.subr.mxu0 0.0
          %3887 = vmatpush1.msra.mxu0 0.0
          %3888 = vmatprep.subr.mxu0 0.0
          %3889 = vmatpush1.msra.mxu0 0.0
          %3890 = vmatprep.subr.mxu0 0.0
          %3891 = vmatpush1.msra.mxu0 0.0
          %3892 = vmatprep.subr.mxu0 0.0
          %3893 = vmatpush1.msra.mxu0 0.0
          %3894 = vmatprep.subr.mxu0 0.0
          %3895 = vmatpush1.msra.mxu0 0.0
          %3896 = vmatprep.subr.mxu0 0.0
          %3897 = vmatpush1.msra.mxu0 0.0
          %3898 = vmatprep.subr.mxu0 0.0
          %3899 = vmatpush1.msra.mxu0 0.0
          %3900 = vmatprep.subr.mxu0 0.0
          %3901 = vmatpush1.msra.mxu0 0.0
          %3902 = vmatprep.subr.mxu0 0.0
          %3903 = vmatpush1.msra.mxu0 0.0
          %3904 = vmatprep.subr.mxu0 0.0
          %3905 = vmatpush1.msra.mxu0 0.0
          %3906 = vmatprep.subr.mxu0 0.0
          %3907 = vmatpush1.msra.mxu0 0.0
          %3908 = vmatprep.mubr.f32.mxu0 0.0
          %3909 = vmatmul.mubr.f32.gmra.mrb[0].mxu0 %v3797
          %v3910 = vpop.f32.mrb[0].mxu0
          %v3911 = vadd.f32 0.0, %v3910
          %v3912 = vpop.f32.mrb[0].mxu0
          %3913 = vmatprep.mubr.f32.mxu0 0.0
          %3914 = vmatmul.mubr.f32.gmra.mrb[0].mxu0 %v3800
          %v3915 = vpop.f32.mrb[0].mxu0
          %v3916 = vadd.f32 0.0, %v3915
          %v3917 = vpop.f32.mrb[0].mxu0
          %3918 = vmatprep.mubr.f32.mxu0 0.0
          %3919 = vmatmul.mubr.f32.gmra.mrb[0].mxu0 %v3803
          %v3920 = vpop.f32.mrb[0].mxu0
          %v3921 = vadd.f32 0.0, %v3920
          %v3922 = vpop.f32.mrb[0].mxu0
          %3923 = vmatprep.mubr.f32.mxu0 0.0
          %3924 = vmatmul.mubr.f32.gmra.mrb[0].mxu0 %v3806
          %v3925 = vpop.f32.mrb[0].mxu0
          %v3926 = vadd.f32 0.0, %v3925
          %v3927 = vpop.f32.mrb[0].mxu0
          %3928 = vmatprep.mubr.f32.mxu0 0.0
          %3929 = vmatmul.mubr.f32.gmra.mrb[0].mxu0 %v3809
          %v3930 = vpop.f32.mrb[0].mxu0
          %v3931 = vadd.f32 0.0, %v3930
          %v3932 = vpop.f32.mrb[0].mxu0
          %3933 = vmatprep.mubr.f32.mxu0 0.0
          %3934 = vmatmul.mubr.f32.gmra.mrb[0].mxu0 %v3812
          %v3935 = vpop.f32.mrb[0].mxu0
          %v3936 = vadd.f32 0.0, %v3935
          %v3937 = vpop.f32.mrb[0].mxu0
          %3938 = vmatprep.mubr.f32.mxu0 0.0
          %3939 = vmatmul.mubr.f32.gmra.mrb[0].mxu0 %v3815
          %v3940 = vpop.f32.mrb[0].mxu0
          %v3941 = vadd.f32 0.0, %v3940
          %v3942 = vpop.f32.mrb[0].mxu0
          %3943 = vmatprep.mubr.f32.mxu0 0.0
          %3944 = vmatmul.mubr.f32.gmra.mrb[0].mxu0 %v3818
          %v3945 = vpop.f32.mrb[0].mxu0
          %v3946 = vadd.f32 0.0, %v3945
          %v3947 = vpop.f32.mrb[0].mxu0
          %3948 = vmatprep.mubr.f32.mxu0 0.0
          %3949 = vmatmul.mubr.f32.gmra.mrb[0].mxu0 %v3821
          %v3950 = vpop.f32.mrb[0].mxu0
          %v3951 = vadd.f32 0.0, %v3950
          %v3952 = vpop.f32.mrb[0].mxu0
          %3953 = vmatprep.mubr.f32.mxu0 0.0
          %3954 = vmatmul.mubr.f32.gmra.mrb[0].mxu0 %v3824
          %v3955 = vpop.f32.mrb[0].mxu0
          %v3956 = vadd.f32 0.0, %v3955
          %v3957 = vpop.f32.mrb[0].mxu0
          %3958 = vmatprep.mubr.f32.mxu0 0.0
          %3959 = vmatmul.mubr.f32.gmra.mrb[0].mxu0 %v3827
          %v3960 = vpop.f32.mrb[0].mxu0
          %v3961 = vadd.f32 0.0, %v3960
          %v3962 = vpop.f32.mrb[0].mxu0
          %3963 = vmatprep.mubr.f32.mxu0 0.0
          %3964 = vmatmul.mubr.f32.gmra.mrb[0].mxu0 %v3830
          %v3965 = vpop.f32.mrb[0].mxu0
          %v3966 = vadd.f32 0.0, %v3965
          %v3967 = vpop.f32.mrb[0].mxu0
          %3968 = vmatprep.mubr.f32.mxu0 0.0
          %3969 = vmatmul.mubr.f32.gmra.mrb[0].mxu0 %v3833
          %v3970 = vpop.f32.mrb[0].mxu0
          %v3971 = vadd.f32 0.0, %v3970
          %v3972 = vpop.f32.mrb[0].mxu0
          %3973 = vmatprep.mubr.f32.mxu0 0.0
          %3974 = vmatmul.mubr.f32.gmra.mrb[0].mxu0 %v3836
          %v3975 = vpop.f32.mrb[0].mxu0
          %v3976 = vadd.f32 0.0, %v3975
          %v3977 = vpop.f32.mrb[0].mxu0
          %3978 = vmatprep.mubr.f32.mxu0 0.0
          %3979 = vmatmul.mubr.f32.gmra.mrb[0].mxu0 %v3839
          %v3980 = vpop.f32.mrb[0].mxu0
          %v3981 = vadd.f32 0.0, %v3980
          %v3982 = vpop.f32.mrb[0].mxu0
          %3983 = vmatprep.mubr.f32.mxu0 0.0
          %3984 = vmatmul.mubr.f32.gmra.mrb[0].mxu0 %v3842
          %v3985 = vpop.f32.mrb[0].mxu0
          %v3986 = vadd.f32 0.0, %v3985
          %v3987 = vpop.f32.mrb[0].mxu0
          %3988 = vdwg.mxu0
          %3989 = vst.msk [vmem:[#allocation2] sm:$0xff] %vm1242, %v3911
          %3990 = vst.msk [vmem:[#allocation2 + $0x8] sm:$0xff] %vm1242, %v3916
          %3991 = vst.msk [vmem:[#allocation2 + $0x10] sm:$0xff] %vm1242, %v3921
          %3992 = vst.msk [vmem:[#allocation2 + $0x18] sm:$0xff] %vm1242, %v3926
          %3993 = vst.msk [vmem:[#allocation2 + $0x20] sm:$0xff] %vm1242, %v3931
          %3994 = vst.msk [vmem:[#allocation2 + $0x28] sm:$0xff] %vm1242, %v3936
          %3995 = vst.msk [vmem:[#allocation2 + $0x30] sm:$0xff] %vm1242, %v3941
          %3996 = vst.msk [vmem:[#allocation2 + $0x38] sm:$0xff] %vm1242, %v3946
          %3997 = vst.msk [vmem:[#allocation2 + $0x40] sm:$0xff] %vm1242, %v3951
          %3998 = vst.msk [vmem:[#allocation2 + $0x48] sm:$0xff] %vm1242, %v3956
          %3999 = vst.msk [vmem:[#allocation2 + $0x50] sm:$0xff] %vm1242, %v3961
          %4000 = vst.msk [vmem:[#allocation2 + $0x58] sm:$0xff] %vm1242, %v3966
          %4001 = vst.msk [vmem:[#allocation2 + $0x60] sm:$0xff] %vm1242, %v3971
          %4002 = vst.msk [vmem:[#allocation2 + $0x68] sm:$0xff] %vm1242, %v3976
          %4003 = vst.msk [vmem:[#allocation2 + $0x70] sm:$0xff] %vm1242, %v3981
          %4004 = vst.msk [vmem:[#allocation2 + $0x78] sm:$0xff] %vm1242, %v3986
        $region120: #{tpu_custom_call.1} parent=103 // pred_fallthru
          _
        // Predicated region
        $region121: #{tpu_custom_call.1} parent=103 // pred_check
          %p4005 = pneg %p621
        $region122: #{tpu_custom_call.1} parent=103 // pred_check_branch
          %4007 = sbr.rel (%p4005) target = $region124
        $region123: #{tpu_custom_call.1} parent=103 // pred_region
          %s4009 = ssub.s32 32, 32
          %4010 = vsyncadd [#allocation5], %s4009
          %s4012 = sshll.u32 [#allocation4], 4
          %s4013 = int_to_ptr.vmem [resolvable:$true] %s4012
          %4015 = dma.vmem_to_hbm [thread:$0]  %s4013, 32, %s21, [#allocation5]
        $region124: #{tpu_custom_call.1} parent=103 // pred_fallthru
          _
        // Predicated region
        $region125: #{tpu_custom_call.1} parent=103 // pred_check
          %p4016 = pneg %p621
        $region126: #{tpu_custom_call.1} parent=103 // pred_check_branch
          %4018 = sbr.rel (%p4016) target = $region128
        $region127: #{tpu_custom_call.1} parent=103 // pred_region
          %4019 = dma.done [#allocation5], 32
        $region128: #{tpu_custom_call.1} parent=103 // pred_fallthru
          _
      $region104: #{tpu_custom_call.1} parent=5 // pred_fallthru
        _
      %p4020 = scmp.le.s32.totalorder 2, %s28
      // Predicated region
      $region129: #{tpu_custom_call.1} parent=5 // pred_check
        %p4021 = pneg %p4020
      $region130: #{tpu_custom_call.1} parent=5 // pred_check_branch
        %4023 = sbr.rel (%p4021) target = $region132
      $region131: #{tpu_custom_call.1} parent=5 // pred_region
        %s4024 = ssub.s32 %s28, 2
      $region132: #{tpu_custom_call.1} parent=5 // pred_fallthru
        _
    $region6: #{tpu_custom_call.1} parent=1 // loop_footer
      %s32 = sadd.s32 1, %s28
    $region7: #{tpu_custom_call.1} parent=1 // loop_footer_branch
      %27 = sbr.rel target = $region3
    $region8: #{tpu_custom_call.1} parent=1 // loop_exit
      _
    %4025 = vsyncpa [#allocation5], 1
    %s4026 = scalar_lea.sflag [#allocation5], 1
    %4027 = vsyncpa %s4026, 1

</llo_original>
